<compile_context>
chip_gen: v7x
topology: tpu7x:2x2x1
jax: 0.10.0
libtpu: 0.0.40
codegen_flags: <defaults>
</compile_context>

<pallas_src>
import jax
import jax.numpy as jnp
from jax.experimental import pallas as pl
from jax.experimental.pallas import tpu as pltpu

# ----------------------------- tiny BERT config -----------------------------
HIDDEN = 32
NUM_HEADS = 4
HEAD_DIM = HIDDEN // NUM_HEADS
INTERMEDIATE = 128
NUM_LAYERS = 2
VOCAB = 64
MAX_POS = 16
BATCH = 2
SEQ = 8
ROWS = BATCH * SEQ
LN_EPS = 1e-12


# ------------------------------ in-kernel helpers ---------------------------
def _ln(x, g, b):
    """LayerNorm over the last (hidden) axis; g, b are (1, H)."""
    mu = jnp.mean(x, axis=-1, keepdims=True)
    d = x - mu
    var = jnp.mean(d * d, axis=-1, keepdims=True)
    return d * jax.lax.rsqrt(var + LN_EPS) * g + b


def _gelu(y):
    # TODO(synk): HF BERT uses exact (erf-based) GELU; tanh approximation here.
    return 0.5 * y * (1.0 + jnp.tanh(0.7978845608028654 * (y + 0.044715 * y * y * y)))


# ------------------------------ fused kernel --------------------------------
def _bert_encoder_kernel(
    ids_ref, word_emb_ref, pos_type_ref,
    emb_ln_g_ref, emb_ln_b_ref,
    attn_bias_ref,
    wqkv_ref, bqkv_ref, wo3_ref, bo_ref,
    ln1_g_ref, ln1_b_ref,
    w1_ref, b1_ref, w2_ref, b2_ref,
    ln2_g_ref, ln2_b_ref,
    pooler_w_ref, pooler_b_ref,
    final_w_ref, final_b_ref,
    out_ref,
):
    scale = 1.0 / float(HEAD_DIM) ** 0.5

    # ---- embedding: fused one-hot gather (MXU) + constant pos/type add + LN.
    ids = ids_ref[...]                                               # (R, 1) int32
    vocab_iota = jax.lax.broadcasted_iota(jnp.int32, (ROWS, VOCAB), 1)
    onehot = (vocab_iota == ids).astype(jnp.float32)                 # (R, VOCAB)
    emb = jnp.dot(onehot, word_emb_ref[...],
                  preferred_element_type=jnp.float32) + pos_type_ref[...]
    x = _ln(emb, emb_ln_g_ref[...], emb_ln_b_ref[...])               # (R, H)

    # Block-diagonal bias: 0 within a sequence, -1e30 across sequences, so the
    # merged-row attention below never mixes batch elements.
    attn_bias = attn_bias_ref[...]                                   # (R, R)

    # ---- transformer layers (static Python loop over the stacked weights).
    for l in range(NUM_LAYERS):
        # Fused QKV projection: one MXU pass over (H, 3H).
        qkv = jnp.dot(x, wqkv_ref[l],
                      preferred_element_type=jnp.float32) + bqkv_ref[l]   # (R, 3H)
        q = qkv[:, 0:HIDDEN]
        k = qkv[:, HIDDEN:2 * HIDDEN]
        v = qkv[:, 2 * HIDDEN:3 * HIDDEN]

        # Heads -> single batch dim of the einsums: (NH, R, D).
        qh = jnp.stack([q[:, h * HEAD_DIM:(h + 1) * HEAD_DIM]
                        for h in range(NUM_HEADS)], axis=0)
        kh = jnp.stack([k[:, h * HEAD_DIM:(h + 1) * HEAD_DIM]
                        for h in range(NUM_HEADS)], axis=0)
        vh = jnp.stack([v[:, h * HEAD_DIM:(h + 1) * HEAD_DIM]
                        for h in range(NUM_HEADS)], axis=0)

        s = jnp.einsum("hqd,hkd->hqk", qh, kh,
                       preferred_element_type=jnp.float32) * scale       # (NH, R, R)
        s = s + attn_bias                                                # batch mask
        s = s - jnp.max(s, axis=-1, keepdims=True)
        p = jnp.exp(s)
        p = p / jnp.sum(p, axis=-1, keepdims=True)                       # exact divide
        ctx = jnp.einsum("hqk,hkd->hqd", p, vh,
                         preferred_element_type=jnp.float32)             # (NH, R, D)

        # Output projection with the weight pre-reshaped to (NH, D, H): no need
        # to re-concatenate heads back into (R, H).
        attn = jnp.einsum("hrd,hdo->hro", ctx, wo3_ref[l],
                          preferred_element_type=jnp.float32).sum(axis=0) + bo_ref[l]
        x = _ln(attn + x, ln1_g_ref[l], ln1_b_ref[l])

        # Feed-forward.
        hmid = _gelu(jnp.dot(x, w1_ref[l],
                             preferred_element_type=jnp.float32) + b1_ref[l])
        ffn = jnp.dot(hmid, w2_ref[l],
                      preferred_element_type=jnp.float32) + b2_ref[l]
        x = _ln(ffn + x, ln2_g_ref[l], ln2_b_ref[l])

    # ---- pooler on the [CLS] token of each sequence, then the extra Linear.
    cls = x.reshape(BATCH, SEQ, HIDDEN)[:, 0, :]                         # (B, H)
    pooled = jnp.tanh(jnp.dot(cls, pooler_w_ref[...],
                              preferred_element_type=jnp.float32)
                      + pooler_b_ref[...])
    out = jnp.dot(pooled, final_w_ref[...],
                  preferred_element_type=jnp.float32) + final_b_ref[...]
    out_ref[...] = out.astype(out_ref.dtype)


def _fused_encoder_call(ids_flat, params):
    inputs = [
        ids_flat,
        params["word_emb"], params["pos_type"],
        params["emb_ln_g"], params["emb_ln_b"],
        params["attn_bias"],
        params["wqkv"], params["bqkv"], params["wo3"], params["bo"],
        params["ln1_g"], params["ln1_b"],
        params["w1"], params["b1"], params["w2"], params["b2"],
        params["ln2_g"], params["ln2_b"],
        params["pooler_w"], params["pooler_b"],
        params["final_w"], params["final_b"],
    ]
    # No grid: single invocation, whole (tiny) arrays resident in VMEM, nothing
    # to pipeline -> no needless double-buffering.
    vmem = pl.BlockSpec(memory_space=pltpu.MemorySpace.VMEM)
    return pl.pallas_call(
        _bert_encoder_kernel,
        out_shape=jax.ShapeDtypeStruct((BATCH, HIDDEN), jnp.float32),
        in_specs=[vmem] * len(inputs),
        out_specs=vmem,
    )(*inputs)


# ------------------------- parameters (synthetic init) ----------------------
def init_params(key):
    def normal(k, shape):
        return 0.02 * jax.random.normal(k, shape, dtype=jnp.float32)

    n_keys = 3 + NUM_LAYERS * 6 + 2
    keys = iter(jax.random.split(key, n_keys))

    word_emb = normal(next(keys), (VOCAB, HIDDEN))
    pos_emb = normal(next(keys), (MAX_POS, HIDDEN))
    type_emb = normal(next(keys), (2, HIDDEN))

    params = {
        "word_emb": word_emb,
        # Constant per-row position + token-type(=0) embedding, precomputed once
        # at init time (B, S are static) and simply added in-kernel.
        "pos_type": jnp.tile(pos_emb[:SEQ] + type_emb[0:1], (BATCH, 1)),   # (R, H)
        "emb_ln_g": jnp.ones((1, HIDDEN), jnp.float32),
        "emb_ln_b": jnp.zeros((1, HIDDEN), jnp.float32),
    }

    wqkv, wo3, w1, w2 = [], [], [], []
    for _ in range(NUM_LAYERS):
        wq = normal(next(keys), (HIDDEN, HIDDEN))
        wk = normal(next(keys), (HIDDEN, HIDDEN))
        wv = normal(next(keys), (HIDDEN, HIDDEN))
        wqkv.append(jnp.concatenate([wq, wk, wv], axis=1))                 # (H, 3H)
        # Output-projection weight pre-reshaped to per-head form (NH, D, H).
        wo3.append(normal(next(keys), (HIDDEN, HIDDEN))
                   .reshape(NUM_HEADS, HEAD_DIM, HIDDEN))
        w1.append(normal(next(keys), (HIDDEN, INTERMEDIATE)))
        w2.append(normal(next(keys), (INTERMEDIATE, HIDDEN)))

    # Block-diagonal "same sequence" attention bias (all tokens are real, so no
    # padding mask is modelled; token_type_ids are hard-coded to 0).
    batch_id = jnp.arange(ROWS, dtype=jnp.int32) // SEQ
    attn_bias = jnp.where(batch_id[:, None] == batch_id[None, :],
                          0.0, -1e30).astype(jnp.float32)                 # (R, R)

    L = NUM_LAYERS
    params.update({
        "attn_bias": attn_bias,
        "wqkv": jnp.stack(wqkv),                                          # (L, H, 3H)
        "bqkv": jnp.zeros((L, 1, 3 * HIDDEN), jnp.float32),
        "wo3": jnp.stack(wo3),                                            # (L, NH, D, H)
        "bo": jnp.zeros((L, 1, HIDDEN), jnp.float32),
        "ln1_g": jnp.ones((L, 1, HIDDEN), jnp.float32),
        "ln1_b": jnp.zeros((L, 1, HIDDEN), jnp.float32),
        "w1": jnp.stack(w1),                                              # (L, H, I)
        "b1": jnp.zeros((L, 1, INTERMEDIATE), jnp.float32),
        "w2": jnp.stack(w2),                                              # (L, I, H)
        "b2": jnp.zeros((L, 1, HIDDEN), jnp.float32),
        "ln2_g": jnp.ones((L, 1, HIDDEN), jnp.float32),
        "ln2_b": jnp.zeros((L, 1, HIDDEN), jnp.float32),
        "pooler_w": normal(next(keys), (HIDDEN, HIDDEN)),
        "pooler_b": jnp.zeros((1, HIDDEN), jnp.float32),
        # the extra nn.Linear(hidden_size, hidden_size) of BertEncoder
        "final_w": normal(next(keys), (HIDDEN, HIDDEN)),
        "final_b": jnp.zeros((1, HIDDEN), jnp.float32),
    })
    return params


# --------------------------------- forward ----------------------------------
def bert_encoder_forward(params, token_ids):
    # The whole forward (embedding lookup included) is ONE pallas_call; the flat
    # (B*S, 1) view of the ids is a free row-major reshape.
    ids_flat = token_ids.reshape(-1, 1).astype(jnp.int32)
    return _fused_encoder_call(ids_flat, params)                          # (B, H)


# ----------------------------------- main ------------------------------------
if __name__ == "__main__":
    key = jax.random.PRNGKey(0)
    pkey, dkey = jax.random.split(key)

    params = init_params(pkey)
    sentence = jax.random.randint(dkey, (BATCH, SEQ), 0, VOCAB, dtype=jnp.int32)

    fwd = jax.jit(bert_encoder_forward)
    out = jax.block_until_ready(fwd(params, sentence))

    assert out.shape == (BATCH, HIDDEN)
    assert out.dtype == jnp.float32
    assert bool(jnp.all(jnp.isfinite(out)))
    print("KERNEL_OK")
</pallas_src>

<mosaic_0001>
module attributes {stable_mosaic.version = 11 : i64} {
  func.func @_bert_encoder_kernel(%arg0: memref<16x1xi32, #tpu.memory_space<vmem>>, %arg1: memref<64x32xf32, #tpu.memory_space<vmem>>, %arg2: memref<16x32xf32, #tpu.memory_space<vmem>>, %arg3: memref<1x32xf32, #tpu.memory_space<vmem>>, %arg4: memref<1x32xf32, #tpu.memory_space<vmem>>, %arg5: memref<16x16xf32, #tpu.memory_space<vmem>>, %arg6: memref<2x32x96xf32, #tpu.memory_space<vmem>>, %arg7: memref<2x1x96xf32, #tpu.memory_space<vmem>>, %arg8: memref<2x4x8x32xf32, #tpu.memory_space<vmem>>, %arg9: memref<2x1x32xf32, #tpu.memory_space<vmem>>, %arg10: memref<2x1x32xf32, #tpu.memory_space<vmem>>, %arg11: memref<2x1x32xf32, #tpu.memory_space<vmem>>, %arg12: memref<2x32x128xf32, #tpu.memory_space<vmem>>, %arg13: memref<2x1x128xf32, #tpu.memory_space<vmem>>, %arg14: memref<2x128x32xf32, #tpu.memory_space<vmem>>, %arg15: memref<2x1x32xf32, #tpu.memory_space<vmem>>, %arg16: memref<2x1x32xf32, #tpu.memory_space<vmem>>, %arg17: memref<2x1x32xf32, #tpu.memory_space<vmem>>, %arg18: memref<32x32xf32, #tpu.memory_space<vmem>>, %arg19: memref<1x32xf32, #tpu.memory_space<vmem>>, %arg20: memref<32x32xf32, #tpu.memory_space<vmem>>, %arg21: memref<1x32xf32, #tpu.memory_space<vmem>>, %arg22: memref<2x32xf32, #tpu.memory_space<vmem>>) attributes {dimension_semantics = [], scalar_prefetch = 0 : i64, scratch_operands = 0 : i64, tpu.core_type = #tpu.core_type<tc>} {
    %c0 = arith.constant 0 : index
    %c0_0 = arith.constant 0 : index
    %0 = vector.load %arg0[%c0, %c0_0] : memref<16x1xi32, #tpu.memory_space<vmem>>, vector<16x1xi32>
    %1 = tpu.iota {dimensions = array<i32: 1>} : vector<16x64xi32>
    %2 = vector.broadcast %0 : vector<16x1xi32> to vector<16x64xi32>
    %3 = arith.cmpi eq, %1, %2 : vector<16x64xi32>
    %4 = arith.extui %3 : vector<16x64xi1> to vector<16x64xi32>
    %5 = arith.sitofp %4 : vector<16x64xi32> to vector<16x64xf32>
    %c0_1 = arith.constant 0 : index
    %c0_2 = arith.constant 0 : index
    %6 = vector.load %arg1[%c0_1, %c0_2] : memref<64x32xf32, #tpu.memory_space<vmem>>, vector<64x32xf32>
    %cst = arith.constant dense<0.000000e+00> : vector<16x32xf32>
    %7 = tpu.matmul %5, %6, %cst {dimension_numbers = #tpu.dot_dimension_numbers<[1], [0], [0], [1], [0, 0, 1, 1], [], []>} : vector<16x64xf32>, vector<64x32xf32>, vector<16x32xf32> -> vector<16x32xf32>
    %c0_3 = arith.constant 0 : index
    %c0_4 = arith.constant 0 : index
    %8 = vector.load %arg2[%c0_3, %c0_4] : memref<16x32xf32, #tpu.memory_space<vmem>>, vector<16x32xf32>
    %9 = arith.addf %7, %8 : vector<16x32xf32>
    %c0_5 = arith.constant 0 : index
    %c0_6 = arith.constant 0 : index
    %10 = vector.load %arg3[%c0_5, %c0_6] : memref<1x32xf32, #tpu.memory_space<vmem>>, vector<1x32xf32>
    %c0_7 = arith.constant 0 : index
    %c0_8 = arith.constant 0 : index
    %11 = vector.load %arg4[%c0_7, %c0_8] : memref<1x32xf32, #tpu.memory_space<vmem>>, vector<1x32xf32>
    %cst_9 = arith.constant dense<0.000000e+00> : vector<16xf32>
    %12 = vector.multi_reduction <add>, %9, %cst_9 [1] : vector<16x32xf32> to vector<16xf32>
    %13 = vector.shape_cast %12 : vector<16xf32> to vector<16x1xf32>
    %cst_10 = arith.constant 3.200000e+01 : f32
    %14 = vector.broadcast %cst_10 : f32 to vector<16x1xf32>
    %15 = arith.divf %13, %14 : vector<16x1xf32>
    %16 = vector.broadcast %15 : vector<16x1xf32> to vector<16x32xf32>
    %17 = arith.subf %9, %16 : vector<16x32xf32>
    %18 = arith.mulf %17, %17 : vector<16x32xf32>
    %cst_11 = arith.constant dense<0.000000e+00> : vector<16xf32>
    %19 = vector.multi_reduction <add>, %18, %cst_11 [1] : vector<16x32xf32> to vector<16xf32>
    %20 = vector.shape_cast %19 : vector<16xf32> to vector<16x1xf32>
    %cst_12 = arith.constant 3.200000e+01 : f32
    %21 = vector.broadcast %cst_12 : f32 to vector<16x1xf32>
    %22 = arith.divf %20, %21 : vector<16x1xf32>
    %cst_13 = arith.constant 9.99999996E-13 : f32
    %23 = vector.broadcast %cst_13 : f32 to vector<16x1xf32>
    %24 = arith.addf %22, %23 : vector<16x1xf32>
    %25 = math.rsqrt %24 : vector<16x1xf32>
    %26 = vector.broadcast %25 : vector<16x1xf32> to vector<16x32xf32>
    %27 = arith.mulf %17, %26 : vector<16x32xf32>
    %28 = vector.broadcast %10 : vector<1x32xf32> to vector<16x32xf32>
    %29 = arith.mulf %27, %28 : vector<16x32xf32>
    %30 = vector.broadcast %11 : vector<1x32xf32> to vector<16x32xf32>
    %31 = arith.addf %29, %30 : vector<16x32xf32>
    %c0_14 = arith.constant 0 : index
    %c0_15 = arith.constant 0 : index
    %32 = vector.load %arg5[%c0_14, %c0_15] : memref<16x16xf32, #tpu.memory_space<vmem>>, vector<16x16xf32>
    %c0_16 = arith.constant 0 : index
    %c0_17 = arith.constant 0 : index
    %c0_18 = arith.constant 0 : index
    %33 = vector.load %arg6[%c0_16, %c0_17, %c0_18] : memref<2x32x96xf32, #tpu.memory_space<vmem>>, vector<1x32x96xf32>
    %34 = vector.shape_cast %33 : vector<1x32x96xf32> to vector<32x96xf32>
    %cst_19 = arith.constant dense<0.000000e+00> : vector<16x96xf32>
    %35 = tpu.matmul %31, %34, %cst_19 {dimension_numbers = #tpu.dot_dimension_numbers<[1], [0], [0], [1], [0, 0, 1, 1], [], []>} : vector<16x32xf32>, vector<32x96xf32>, vector<16x96xf32> -> vector<16x96xf32>
    %c0_20 = arith.constant 0 : index
    %c0_21 = arith.constant 0 : index
    %c0_22 = arith.constant 0 : index
    %36 = vector.load %arg7[%c0_20, %c0_21, %c0_22] : memref<2x1x96xf32, #tpu.memory_space<vmem>>, vector<1x1x96xf32>
    %37 = vector.shape_cast %36 : vector<1x1x96xf32> to vector<1x96xf32>
    %38 = vector.broadcast %37 : vector<1x96xf32> to vector<16x96xf32>
    %39 = arith.addf %35, %38 : vector<16x96xf32>
    %40 = vector.extract_strided_slice %39 {offsets = [0, 0], sizes = [16, 32], strides = [1, 1]} : vector<16x96xf32> to vector<16x32xf32>
    %41 = vector.extract_strided_slice %39 {offsets = [0, 32], sizes = [16, 32], strides = [1, 1]} : vector<16x96xf32> to vector<16x32xf32>
    %42 = vector.extract_strided_slice %39 {offsets = [0, 64], sizes = [16, 32], strides = [1, 1]} : vector<16x96xf32> to vector<16x32xf32>
    %43 = vector.extract_strided_slice %40 {offsets = [0, 0], sizes = [16, 8], strides = [1, 1]} : vector<16x32xf32> to vector<16x8xf32>
    %44 = vector.extract_strided_slice %40 {offsets = [0, 8], sizes = [16, 8], strides = [1, 1]} : vector<16x32xf32> to vector<16x8xf32>
    %45 = vector.extract_strided_slice %40 {offsets = [0, 16], sizes = [16, 8], strides = [1, 1]} : vector<16x32xf32> to vector<16x8xf32>
    %46 = vector.extract_strided_slice %40 {offsets = [0, 24], sizes = [16, 8], strides = [1, 1]} : vector<16x32xf32> to vector<16x8xf32>
    %47 = vector.shape_cast %43 : vector<16x8xf32> to vector<1x16x8xf32>
    %48 = vector.shape_cast %44 : vector<16x8xf32> to vector<1x16x8xf32>
    %49 = vector.shape_cast %45 : vector<16x8xf32> to vector<1x16x8xf32>
    %50 = vector.shape_cast %46 : vector<16x8xf32> to vector<1x16x8xf32>
    %51 = tpu.concatenate %47, %48, %49, %50 in 0 : vector<1x16x8xf32>, vector<1x16x8xf32>, vector<1x16x8xf32>, vector<1x16x8xf32> -> vector<4x16x8xf32>
    %52 = vector.extract_strided_slice %41 {offsets = [0, 0], sizes = [16, 8], strides = [1, 1]} : vector<16x32xf32> to vector<16x8xf32>
    %53 = vector.extract_strided_slice %41 {offsets = [0, 8], sizes = [16, 8], strides = [1, 1]} : vector<16x32xf32> to vector<16x8xf32>
    %54 = vector.extract_strided_slice %41 {offsets = [0, 16], sizes = [16, 8], strides = [1, 1]} : vector<16x32xf32> to vector<16x8xf32>
    %55 = vector.extract_strided_slice %41 {offsets = [0, 24], sizes = [16, 8], strides = [1, 1]} : vector<16x32xf32> to vector<16x8xf32>
    %56 = vector.shape_cast %52 : vector<16x8xf32> to vector<1x16x8xf32>
    %57 = vector.shape_cast %53 : vector<16x8xf32> to vector<1x16x8xf32>
    %58 = vector.shape_cast %54 : vector<16x8xf32> to vector<1x16x8xf32>
    %59 = vector.shape_cast %55 : vector<16x8xf32> to vector<1x16x8xf32>
    %60 = tpu.concatenate %56, %57, %58, %59 in 0 : vector<1x16x8xf32>, vector<1x16x8xf32>, vector<1x16x8xf32>, vector<1x16x8xf32> -> vector<4x16x8xf32>
    %61 = vector.extract_strided_slice %42 {offsets = [0, 0], sizes = [16, 8], strides = [1, 1]} : vector<16x32xf32> to vector<16x8xf32>
    %62 = vector.extract_strided_slice %42 {offsets = [0, 8], sizes = [16, 8], strides = [1, 1]} : vector<16x32xf32> to vector<16x8xf32>
    %63 = vector.extract_strided_slice %42 {offsets = [0, 16], sizes = [16, 8], strides = [1, 1]} : vector<16x32xf32> to vector<16x8xf32>
    %64 = vector.extract_strided_slice %42 {offsets = [0, 24], sizes = [16, 8], strides = [1, 1]} : vector<16x32xf32> to vector<16x8xf32>
    %65 = vector.shape_cast %61 : vector<16x8xf32> to vector<1x16x8xf32>
    %66 = vector.shape_cast %62 : vector<16x8xf32> to vector<1x16x8xf32>
    %67 = vector.shape_cast %63 : vector<16x8xf32> to vector<1x16x8xf32>
    %68 = vector.shape_cast %64 : vector<16x8xf32> to vector<1x16x8xf32>
    %69 = tpu.concatenate %65, %66, %67, %68 in 0 : vector<1x16x8xf32>, vector<1x16x8xf32>, vector<1x16x8xf32>, vector<1x16x8xf32> -> vector<4x16x8xf32>
    "tpu.trace_start"() <{level = 10 : i32, message = "hqd,hkd->hqk"}> : () -> ()
    %cst_23 = arith.constant dense<0.000000e+00> : vector<4x16x16xf32>
    %70 = tpu.matmul %51, %60, %cst_23 {dimension_numbers = #tpu.dot_dimension_numbers<[2], [2], [1], [1], [0, 0, 0, 1, 1, 1], [0], [0]>} : vector<4x16x8xf32>, vector<4x16x8xf32>, vector<4x16x16xf32> -> vector<4x16x16xf32>
    "tpu.trace_stop"() : () -> ()
    %cst_24 = arith.constant 0.353553385 : f32
    %71 = vector.broadcast %cst_24 : f32 to vector<4x16x16xf32>
    %72 = arith.mulf %70, %71 : vector<4x16x16xf32>
    %73 = vector.shape_cast %32 : vector<16x16xf32> to vector<1x16x16xf32>
    %74 = vector.broadcast %73 : vector<1x16x16xf32> to vector<4x16x16xf32>
    %75 = arith.addf %72, %74 : vector<4x16x16xf32>
    %cst_25 = arith.constant dense<0xFF800000> : vector<4x16xf32>
    %76 = vector.multi_reduction <maximumf>, %75, %cst_25 [2] : vector<4x16x16xf32> to vector<4x16xf32>
    %77 = vector.shape_cast %76 : vector<4x16xf32> to vector<4x16x1xf32>
    %78 = vector.broadcast %77 : vector<4x16x1xf32> to vector<4x16x16xf32>
    %79 = arith.subf %75, %78 : vector<4x16x16xf32>
    %80 = math.exp %79 : vector<4x16x16xf32>
    %cst_26 = arith.constant dense<0.000000e+00> : vector<4x16xf32>
    %81 = vector.multi_reduction <add>, %80, %cst_26 [2] : vector<4x16x16xf32> to vector<4x16xf32>
    %82 = vector.shape_cast %81 : vector<4x16xf32> to vector<4x16x1xf32>
    %83 = vector.broadcast %82 : vector<4x16x1xf32> to vector<4x16x16xf32>
    %84 = arith.divf %80, %83 : vector<4x16x16xf32>
    "tpu.trace_start"() <{level = 10 : i32, message = "hqk,hkd->hqd"}> : () -> ()
    %cst_27 = arith.constant dense<0.000000e+00> : vector<4x16x8xf32>
    %85 = tpu.matmul %84, %69, %cst_27 {dimension_numbers = #tpu.dot_dimension_numbers<[2], [1], [1], [2], [0, 0, 0, 1, 1, 2], [0], [0]>} : vector<4x16x16xf32>, vector<4x16x8xf32>, vector<4x16x8xf32> -> vector<4x16x8xf32>
    "tpu.trace_stop"() : () -> ()
    %c0_28 = arith.constant 0 : index
    %c0_29 = arith.constant 0 : index
    %c0_30 = arith.constant 0 : index
    %c0_31 = arith.constant 0 : index
    %86 = vector.load %arg8[%c0_28, %c0_29, %c0_30, %c0_31] : memref<2x4x8x32xf32, #tpu.memory_space<vmem>>, vector<1x4x8x32xf32>
    %87 = vector.shape_cast %86 : vector<1x4x8x32xf32> to vector<4x8x32xf32>
    "tpu.trace_start"() <{level = 10 : i32, message = "hrd,hdo->hro"}> : () -> ()
    %cst_32 = arith.constant dense<0.000000e+00> : vector<4x16x32xf32>
    %88 = tpu.matmul %85, %87, %cst_32 {dimension_numbers = #tpu.dot_dimension_numbers<[2], [1], [1], [2], [0, 0, 0, 1, 1, 2], [0], [0]>} : vector<4x16x8xf32>, vector<4x8x32xf32>, vector<4x16x32xf32> -> vector<4x16x32xf32>
    "tpu.trace_stop"() : () -> ()
    %cst_33 = arith.constant dense<0.000000e+00> : vector<16x32xf32>
    %89 = vector.multi_reduction <add>, %88, %cst_33 [0] : vector<4x16x32xf32> to vector<16x32xf32>
    %c0_34 = arith.constant 0 : index
    %c0_35 = arith.constant 0 : index
    %c0_36 = arith.constant 0 : index
    %90 = vector.load %arg9[%c0_34, %c0_35, %c0_36] : memref<2x1x32xf32, #tpu.memory_space<vmem>>, vector<1x1x32xf32>
    %91 = vector.shape_cast %90 : vector<1x1x32xf32> to vector<1x32xf32>
    %92 = vector.broadcast %91 : vector<1x32xf32> to vector<16x32xf32>
    %93 = arith.addf %89, %92 : vector<16x32xf32>
    %94 = arith.addf %93, %31 : vector<16x32xf32>
    %c0_37 = arith.constant 0 : index
    %c0_38 = arith.constant 0 : index
    %c0_39 = arith.constant 0 : index
    %95 = vector.load %arg10[%c0_37, %c0_38, %c0_39] : memref<2x1x32xf32, #tpu.memory_space<vmem>>, vector<1x1x32xf32>
    %96 = vector.shape_cast %95 : vector<1x1x32xf32> to vector<1x32xf32>
    %c0_40 = arith.constant 0 : index
    %c0_41 = arith.constant 0 : index
    %c0_42 = arith.constant 0 : index
    %97 = vector.load %arg11[%c0_40, %c0_41, %c0_42] : memref<2x1x32xf32, #tpu.memory_space<vmem>>, vector<1x1x32xf32>
    %98 = vector.shape_cast %97 : vector<1x1x32xf32> to vector<1x32xf32>
    %cst_43 = arith.constant dense<0.000000e+00> : vector<16xf32>
    %99 = vector.multi_reduction <add>, %94, %cst_43 [1] : vector<16x32xf32> to vector<16xf32>
    %100 = vector.shape_cast %99 : vector<16xf32> to vector<16x1xf32>
    %cst_44 = arith.constant 3.200000e+01 : f32
    %101 = vector.broadcast %cst_44 : f32 to vector<16x1xf32>
    %102 = arith.divf %100, %101 : vector<16x1xf32>
    %103 = vector.broadcast %102 : vector<16x1xf32> to vector<16x32xf32>
    %104 = arith.subf %94, %103 : vector<16x32xf32>
    %105 = arith.mulf %104, %104 : vector<16x32xf32>
    %cst_45 = arith.constant dense<0.000000e+00> : vector<16xf32>
    %106 = vector.multi_reduction <add>, %105, %cst_45 [1] : vector<16x32xf32> to vector<16xf32>
    %107 = vector.shape_cast %106 : vector<16xf32> to vector<16x1xf32>
    %cst_46 = arith.constant 3.200000e+01 : f32
    %108 = vector.broadcast %cst_46 : f32 to vector<16x1xf32>
    %109 = arith.divf %107, %108 : vector<16x1xf32>
    %cst_47 = arith.constant 9.99999996E-13 : f32
    %110 = vector.broadcast %cst_47 : f32 to vector<16x1xf32>
    %111 = arith.addf %109, %110 : vector<16x1xf32>
    %112 = math.rsqrt %111 : vector<16x1xf32>
    %113 = vector.broadcast %112 : vector<16x1xf32> to vector<16x32xf32>
    %114 = arith.mulf %104, %113 : vector<16x32xf32>
    %115 = vector.broadcast %96 : vector<1x32xf32> to vector<16x32xf32>
    %116 = arith.mulf %114, %115 : vector<16x32xf32>
    %117 = vector.broadcast %98 : vector<1x32xf32> to vector<16x32xf32>
    %118 = arith.addf %116, %117 : vector<16x32xf32>
    %c0_48 = arith.constant 0 : index
    %c0_49 = arith.constant 0 : index
    %c0_50 = arith.constant 0 : index
    %119 = vector.load %arg12[%c0_48, %c0_49, %c0_50] : memref<2x32x128xf32, #tpu.memory_space<vmem>>, vector<1x32x128xf32>
    %120 = vector.shape_cast %119 : vector<1x32x128xf32> to vector<32x128xf32>
    %cst_51 = arith.constant dense<0.000000e+00> : vector<16x128xf32>
    %121 = tpu.matmul %118, %120, %cst_51 {dimension_numbers = #tpu.dot_dimension_numbers<[1], [0], [0], [1], [0, 0, 1, 1], [], []>} : vector<16x32xf32>, vector<32x128xf32>, vector<16x128xf32> -> vector<16x128xf32>
    %c0_52 = arith.constant 0 : index
    %c0_53 = arith.constant 0 : index
    %c0_54 = arith.constant 0 : index
    %122 = vector.load %arg13[%c0_52, %c0_53, %c0_54] : memref<2x1x128xf32, #tpu.memory_space<vmem>>, vector<1x1x128xf32>
    %123 = vector.shape_cast %122 : vector<1x1x128xf32> to vector<1x128xf32>
    %124 = vector.broadcast %123 : vector<1x128xf32> to vector<16x128xf32>
    %125 = arith.addf %121, %124 : vector<16x128xf32>
    %cst_55 = arith.constant 5.000000e-01 : f32
    %126 = vector.broadcast %cst_55 : f32 to vector<16x128xf32>
    %127 = arith.mulf %126, %125 : vector<16x128xf32>
    %cst_56 = arith.constant 4.471500e-02 : f32
    %128 = vector.broadcast %cst_56 : f32 to vector<16x128xf32>
    %129 = arith.mulf %128, %125 : vector<16x128xf32>
    %130 = arith.mulf %129, %125 : vector<16x128xf32>
    %131 = arith.mulf %130, %125 : vector<16x128xf32>
    %132 = arith.addf %125, %131 : vector<16x128xf32>
    %cst_57 = arith.constant 0.797884583 : f32
    %133 = vector.broadcast %cst_57 : f32 to vector<16x128xf32>
    %134 = arith.mulf %133, %132 : vector<16x128xf32>
    %135 = math.tanh %134 : vector<16x128xf32>
    %cst_58 = arith.constant 1.000000e+00 : f32
    %136 = vector.broadcast %cst_58 : f32 to vector<16x128xf32>
    %137 = arith.addf %136, %135 : vector<16x128xf32>
    %138 = arith.mulf %127, %137 : vector<16x128xf32>
    %c0_59 = arith.constant 0 : index
    %c0_60 = arith.constant 0 : index
    %c0_61 = arith.constant 0 : index
    %139 = vector.load %arg14[%c0_59, %c0_60, %c0_61] : memref<2x128x32xf32, #tpu.memory_space<vmem>>, vector<1x128x32xf32>
    %140 = vector.shape_cast %139 : vector<1x128x32xf32> to vector<128x32xf32>
    %cst_62 = arith.constant dense<0.000000e+00> : vector<16x32xf32>
    %141 = tpu.matmul %138, %140, %cst_62 {dimension_numbers = #tpu.dot_dimension_numbers<[1], [0], [0], [1], [0, 0, 1, 1], [], []>} : vector<16x128xf32>, vector<128x32xf32>, vector<16x32xf32> -> vector<16x32xf32>
    %c0_63 = arith.constant 0 : index
    %c0_64 = arith.constant 0 : index
    %c0_65 = arith.constant 0 : index
    %142 = vector.load %arg15[%c0_63, %c0_64, %c0_65] : memref<2x1x32xf32, #tpu.memory_space<vmem>>, vector<1x1x32xf32>
    %143 = vector.shape_cast %142 : vector<1x1x32xf32> to vector<1x32xf32>
    %144 = vector.broadcast %143 : vector<1x32xf32> to vector<16x32xf32>
    %145 = arith.addf %141, %144 : vector<16x32xf32>
    %146 = arith.addf %145, %118 : vector<16x32xf32>
    %c0_66 = arith.constant 0 : index
    %c0_67 = arith.constant 0 : index
    %c0_68 = arith.constant 0 : index
    %147 = vector.load %arg16[%c0_66, %c0_67, %c0_68] : memref<2x1x32xf32, #tpu.memory_space<vmem>>, vector<1x1x32xf32>
    %148 = vector.shape_cast %147 : vector<1x1x32xf32> to vector<1x32xf32>
    %c0_69 = arith.constant 0 : index
    %c0_70 = arith.constant 0 : index
    %c0_71 = arith.constant 0 : index
    %149 = vector.load %arg17[%c0_69, %c0_70, %c0_71] : memref<2x1x32xf32, #tpu.memory_space<vmem>>, vector<1x1x32xf32>
    %150 = vector.shape_cast %149 : vector<1x1x32xf32> to vector<1x32xf32>
    %cst_72 = arith.constant dense<0.000000e+00> : vector<16xf32>
    %151 = vector.multi_reduction <add>, %146, %cst_72 [1] : vector<16x32xf32> to vector<16xf32>
    %152 = vector.shape_cast %151 : vector<16xf32> to vector<16x1xf32>
    %cst_73 = arith.constant 3.200000e+01 : f32
    %153 = vector.broadcast %cst_73 : f32 to vector<16x1xf32>
    %154 = arith.divf %152, %153 : vector<16x1xf32>
    %155 = vector.broadcast %154 : vector<16x1xf32> to vector<16x32xf32>
    %156 = arith.subf %146, %155 : vector<16x32xf32>
    %157 = arith.mulf %156, %156 : vector<16x32xf32>
    %cst_74 = arith.constant dense<0.000000e+00> : vector<16xf32>
    %158 = vector.multi_reduction <add>, %157, %cst_74 [1] : vector<16x32xf32> to vector<16xf32>
    %159 = vector.shape_cast %158 : vector<16xf32> to vector<16x1xf32>
    %cst_75 = arith.constant 3.200000e+01 : f32
    %160 = vector.broadcast %cst_75 : f32 to vector<16x1xf32>
    %161 = arith.divf %159, %160 : vector<16x1xf32>
    %cst_76 = arith.constant 9.99999996E-13 : f32
    %162 = vector.broadcast %cst_76 : f32 to vector<16x1xf32>
    %163 = arith.addf %161, %162 : vector<16x1xf32>
    %164 = math.rsqrt %163 : vector<16x1xf32>
    %165 = vector.broadcast %164 : vector<16x1xf32> to vector<16x32xf32>
    %166 = arith.mulf %156, %165 : vector<16x32xf32>
    %167 = vector.broadcast %148 : vector<1x32xf32> to vector<16x32xf32>
    %168 = arith.mulf %166, %167 : vector<16x32xf32>
    %169 = vector.broadcast %150 : vector<1x32xf32> to vector<16x32xf32>
    %170 = arith.addf %168, %169 : vector<16x32xf32>
    %c1 = arith.constant 1 : index
    %c0_77 = arith.constant 0 : index
    %c0_78 = arith.constant 0 : index
    %171 = vector.load %arg6[%c1, %c0_77, %c0_78] : memref<2x32x96xf32, #tpu.memory_space<vmem>>, vector<1x32x96xf32>
    %172 = vector.shape_cast %171 : vector<1x32x96xf32> to vector<32x96xf32>
    %cst_79 = arith.constant dense<0.000000e+00> : vector<16x96xf32>
    %173 = tpu.matmul %170, %172, %cst_79 {dimension_numbers = #tpu.dot_dimension_numbers<[1], [0], [0], [1], [0, 0, 1, 1], [], []>} : vector<16x32xf32>, vector<32x96xf32>, vector<16x96xf32> -> vector<16x96xf32>
    %c1_80 = arith.constant 1 : index
    %c0_81 = arith.constant 0 : index
    %c0_82 = arith.constant 0 : index
    %174 = vector.load %arg7[%c1_80, %c0_81, %c0_82] : memref<2x1x96xf32, #tpu.memory_space<vmem>>, vector<1x1x96xf32>
    %175 = vector.shape_cast %174 : vector<1x1x96xf32> to vector<1x96xf32>
    %176 = vector.broadcast %175 : vector<1x96xf32> to vector<16x96xf32>
    %177 = arith.addf %173, %176 : vector<16x96xf32>
    %178 = vector.extract_strided_slice %177 {offsets = [0, 0], sizes = [16, 32], strides = [1, 1]} : vector<16x96xf32> to vector<16x32xf32>
    %179 = vector.extract_strided_slice %177 {offsets = [0, 32], sizes = [16, 32], strides = [1, 1]} : vector<16x96xf32> to vector<16x32xf32>
    %180 = vector.extract_strided_slice %177 {offsets = [0, 64], sizes = [16, 32], strides = [1, 1]} : vector<16x96xf32> to vector<16x32xf32>
    %181 = vector.extract_strided_slice %178 {offsets = [0, 0], sizes = [16, 8], strides = [1, 1]} : vector<16x32xf32> to vector<16x8xf32>
    %182 = vector.extract_strided_slice %178 {offsets = [0, 8], sizes = [16, 8], strides = [1, 1]} : vector<16x32xf32> to vector<16x8xf32>
    %183 = vector.extract_strided_slice %178 {offsets = [0, 16], sizes = [16, 8], strides = [1, 1]} : vector<16x32xf32> to vector<16x8xf32>
    %184 = vector.extract_strided_slice %178 {offsets = [0, 24], sizes = [16, 8], strides = [1, 1]} : vector<16x32xf32> to vector<16x8xf32>
    %185 = vector.shape_cast %181 : vector<16x8xf32> to vector<1x16x8xf32>
    %186 = vector.shape_cast %182 : vector<16x8xf32> to vector<1x16x8xf32>
    %187 = vector.shape_cast %183 : vector<16x8xf32> to vector<1x16x8xf32>
    %188 = vector.shape_cast %184 : vector<16x8xf32> to vector<1x16x8xf32>
    %189 = tpu.concatenate %185, %186, %187, %188 in 0 : vector<1x16x8xf32>, vector<1x16x8xf32>, vector<1x16x8xf32>, vector<1x16x8xf32> -> vector<4x16x8xf32>
    %190 = vector.extract_strided_slice %179 {offsets = [0, 0], sizes = [16, 8], strides = [1, 1]} : vector<16x32xf32> to vector<16x8xf32>
    %191 = vector.extract_strided_slice %179 {offsets = [0, 8], sizes = [16, 8], strides = [1, 1]} : vector<16x32xf32> to vector<16x8xf32>
    %192 = vector.extract_strided_slice %179 {offsets = [0, 16], sizes = [16, 8], strides = [1, 1]} : vector<16x32xf32> to vector<16x8xf32>
    %193 = vector.extract_strided_slice %179 {offsets = [0, 24], sizes = [16, 8], strides = [1, 1]} : vector<16x32xf32> to vector<16x8xf32>
    %194 = vector.shape_cast %190 : vector<16x8xf32> to vector<1x16x8xf32>
    %195 = vector.shape_cast %191 : vector<16x8xf32> to vector<1x16x8xf32>
    %196 = vector.shape_cast %192 : vector<16x8xf32> to vector<1x16x8xf32>
    %197 = vector.shape_cast %193 : vector<16x8xf32> to vector<1x16x8xf32>
    %198 = tpu.concatenate %194, %195, %196, %197 in 0 : vector<1x16x8xf32>, vector<1x16x8xf32>, vector<1x16x8xf32>, vector<1x16x8xf32> -> vector<4x16x8xf32>
    %199 = vector.extract_strided_slice %180 {offsets = [0, 0], sizes = [16, 8], strides = [1, 1]} : vector<16x32xf32> to vector<16x8xf32>
    %200 = vector.extract_strided_slice %180 {offsets = [0, 8], sizes = [16, 8], strides = [1, 1]} : vector<16x32xf32> to vector<16x8xf32>
    %201 = vector.extract_strided_slice %180 {offsets = [0, 16], sizes = [16, 8], strides = [1, 1]} : vector<16x32xf32> to vector<16x8xf32>
    %202 = vector.extract_strided_slice %180 {offsets = [0, 24], sizes = [16, 8], strides = [1, 1]} : vector<16x32xf32> to vector<16x8xf32>
    %203 = vector.shape_cast %199 : vector<16x8xf32> to vector<1x16x8xf32>
    %204 = vector.shape_cast %200 : vector<16x8xf32> to vector<1x16x8xf32>
    %205 = vector.shape_cast %201 : vector<16x8xf32> to vector<1x16x8xf32>
    %206 = vector.shape_cast %202 : vector<16x8xf32> to vector<1x16x8xf32>
    %207 = tpu.concatenate %203, %204, %205, %206 in 0 : vector<1x16x8xf32>, vector<1x16x8xf32>, vector<1x16x8xf32>, vector<1x16x8xf32> -> vector<4x16x8xf32>
    "tpu.trace_start"() <{level = 10 : i32, message = "hqd,hkd->hqk"}> : () -> ()
    %cst_83 = arith.constant dense<0.000000e+00> : vector<4x16x16xf32>
    %208 = tpu.matmul %189, %198, %cst_83 {dimension_numbers = #tpu.dot_dimension_numbers<[2], [2], [1], [1], [0, 0, 0, 1, 1, 1], [0], [0]>} : vector<4x16x8xf32>, vector<4x16x8xf32>, vector<4x16x16xf32> -> vector<4x16x16xf32>
    "tpu.trace_stop"() : () -> ()
    %cst_84 = arith.constant 0.353553385 : f32
    %209 = vector.broadcast %cst_84 : f32 to vector<4x16x16xf32>
    %210 = arith.mulf %208, %209 : vector<4x16x16xf32>
    %211 = vector.shape_cast %32 : vector<16x16xf32> to vector<1x16x16xf32>
    %212 = vector.broadcast %211 : vector<1x16x16xf32> to vector<4x16x16xf32>
    %213 = arith.addf %210, %212 : vector<4x16x16xf32>
    %cst_85 = arith.constant dense<0xFF800000> : vector<4x16xf32>
    %214 = vector.multi_reduction <maximumf>, %213, %cst_85 [2] : vector<4x16x16xf32> to vector<4x16xf32>
    %215 = vector.shape_cast %214 : vector<4x16xf32> to vector<4x16x1xf32>
    %216 = vector.broadcast %215 : vector<4x16x1xf32> to vector<4x16x16xf32>
    %217 = arith.subf %213, %216 : vector<4x16x16xf32>
    %218 = math.exp %217 : vector<4x16x16xf32>
    %cst_86 = arith.constant dense<0.000000e+00> : vector<4x16xf32>
    %219 = vector.multi_reduction <add>, %218, %cst_86 [2] : vector<4x16x16xf32> to vector<4x16xf32>
    %220 = vector.shape_cast %219 : vector<4x16xf32> to vector<4x16x1xf32>
    %221 = vector.broadcast %220 : vector<4x16x1xf32> to vector<4x16x16xf32>
    %222 = arith.divf %218, %221 : vector<4x16x16xf32>
    "tpu.trace_start"() <{level = 10 : i32, message = "hqk,hkd->hqd"}> : () -> ()
    %cst_87 = arith.constant dense<0.000000e+00> : vector<4x16x8xf32>
    %223 = tpu.matmul %222, %207, %cst_87 {dimension_numbers = #tpu.dot_dimension_numbers<[2], [1], [1], [2], [0, 0, 0, 1, 1, 2], [0], [0]>} : vector<4x16x16xf32>, vector<4x16x8xf32>, vector<4x16x8xf32> -> vector<4x16x8xf32>
    "tpu.trace_stop"() : () -> ()
    %c1_88 = arith.constant 1 : index
    %c0_89 = arith.constant 0 : index
    %c0_90 = arith.constant 0 : index
    %c0_91 = arith.constant 0 : index
    %224 = vector.load %arg8[%c1_88, %c0_89, %c0_90, %c0_91] : memref<2x4x8x32xf32, #tpu.memory_space<vmem>>, vector<1x4x8x32xf32>
    %225 = vector.shape_cast %224 : vector<1x4x8x32xf32> to vector<4x8x32xf32>
    "tpu.trace_start"() <{level = 10 : i32, message = "hrd,hdo->hro"}> : () -> ()
    %cst_92 = arith.constant dense<0.000000e+00> : vector<4x16x32xf32>
    %226 = tpu.matmul %223, %225, %cst_92 {dimension_numbers = #tpu.dot_dimension_numbers<[2], [1], [1], [2], [0, 0, 0, 1, 1, 2], [0], [0]>} : vector<4x16x8xf32>, vector<4x8x32xf32>, vector<4x16x32xf32> -> vector<4x16x32xf32>
    "tpu.trace_stop"() : () -> ()
    %cst_93 = arith.constant dense<0.000000e+00> : vector<16x32xf32>
    %227 = vector.multi_reduction <add>, %226, %cst_93 [0] : vector<4x16x32xf32> to vector<16x32xf32>
    %c1_94 = arith.constant 1 : index
    %c0_95 = arith.constant 0 : index
    %c0_96 = arith.constant 0 : index
    %228 = vector.load %arg9[%c1_94, %c0_95, %c0_96] : memref<2x1x32xf32, #tpu.memory_space<vmem>>, vector<1x1x32xf32>
    %229 = vector.shape_cast %228 : vector<1x1x32xf32> to vector<1x32xf32>
    %230 = vector.broadcast %229 : vector<1x32xf32> to vector<16x32xf32>
    %231 = arith.addf %227, %230 : vector<16x32xf32>
    %232 = arith.addf %231, %170 : vector<16x32xf32>
    %c1_97 = arith.constant 1 : index
    %c0_98 = arith.constant 0 : index
    %c0_99 = arith.constant 0 : index
    %233 = vector.load %arg10[%c1_97, %c0_98, %c0_99] : memref<2x1x32xf32, #tpu.memory_space<vmem>>, vector<1x1x32xf32>
    %234 = vector.shape_cast %233 : vector<1x1x32xf32> to vector<1x32xf32>
    %c1_100 = arith.constant 1 : index
    %c0_101 = arith.constant 0 : index
    %c0_102 = arith.constant 0 : index
    %235 = vector.load %arg11[%c1_100, %c0_101, %c0_102] : memref<2x1x32xf32, #tpu.memory_space<vmem>>, vector<1x1x32xf32>
    %236 = vector.shape_cast %235 : vector<1x1x32xf32> to vector<1x32xf32>
    %cst_103 = arith.constant dense<0.000000e+00> : vector<16xf32>
    %237 = vector.multi_reduction <add>, %232, %cst_103 [1] : vector<16x32xf32> to vector<16xf32>
    %238 = vector.shape_cast %237 : vector<16xf32> to vector<16x1xf32>
    %cst_104 = arith.constant 3.200000e+01 : f32
    %239 = vector.broadcast %cst_104 : f32 to vector<16x1xf32>
    %240 = arith.divf %238, %239 : vector<16x1xf32>
    %241 = vector.broadcast %240 : vector<16x1xf32> to vector<16x32xf32>
    %242 = arith.subf %232, %241 : vector<16x32xf32>
    %243 = arith.mulf %242, %242 : vector<16x32xf32>
    %cst_105 = arith.constant dense<0.000000e+00> : vector<16xf32>
    %244 = vector.multi_reduction <add>, %243, %cst_105 [1] : vector<16x32xf32> to vector<16xf32>
    %245 = vector.shape_cast %244 : vector<16xf32> to vector<16x1xf32>
    %cst_106 = arith.constant 3.200000e+01 : f32
    %246 = vector.broadcast %cst_106 : f32 to vector<16x1xf32>
    %247 = arith.divf %245, %246 : vector<16x1xf32>
    %cst_107 = arith.constant 9.99999996E-13 : f32
    %248 = vector.broadcast %cst_107 : f32 to vector<16x1xf32>
    %249 = arith.addf %247, %248 : vector<16x1xf32>
    %250 = math.rsqrt %249 : vector<16x1xf32>
    %251 = vector.broadcast %250 : vector<16x1xf32> to vector<16x32xf32>
    %252 = arith.mulf %242, %251 : vector<16x32xf32>
    %253 = vector.broadcast %234 : vector<1x32xf32> to vector<16x32xf32>
    %254 = arith.mulf %252, %253 : vector<16x32xf32>
    %255 = vector.broadcast %236 : vector<1x32xf32> to vector<16x32xf32>
    %256 = arith.addf %254, %255 : vector<16x32xf32>
    %c1_108 = arith.constant 1 : index
    %c0_109 = arith.constant 0 : index
    %c0_110 = arith.constant 0 : index
    %257 = vector.load %arg12[%c1_108, %c0_109, %c0_110] : memref<2x32x128xf32, #tpu.memory_space<vmem>>, vector<1x32x128xf32>
    %258 = vector.shape_cast %257 : vector<1x32x128xf32> to vector<32x128xf32>
    %cst_111 = arith.constant dense<0.000000e+00> : vector<16x128xf32>
    %259 = tpu.matmul %256, %258, %cst_111 {dimension_numbers = #tpu.dot_dimension_numbers<[1], [0], [0], [1], [0, 0, 1, 1], [], []>} : vector<16x32xf32>, vector<32x128xf32>, vector<16x128xf32> -> vector<16x128xf32>
    %c1_112 = arith.constant 1 : index
    %c0_113 = arith.constant 0 : index
    %c0_114 = arith.constant 0 : index
    %260 = vector.load %arg13[%c1_112, %c0_113, %c0_114] : memref<2x1x128xf32, #tpu.memory_space<vmem>>, vector<1x1x128xf32>
    %261 = vector.shape_cast %260 : vector<1x1x128xf32> to vector<1x128xf32>
    %262 = vector.broadcast %261 : vector<1x128xf32> to vector<16x128xf32>
    %263 = arith.addf %259, %262 : vector<16x128xf32>
    %cst_115 = arith.constant 5.000000e-01 : f32
    %264 = vector.broadcast %cst_115 : f32 to vector<16x128xf32>
    %265 = arith.mulf %264, %263 : vector<16x128xf32>
    %cst_116 = arith.constant 4.471500e-02 : f32
    %266 = vector.broadcast %cst_116 : f32 to vector<16x128xf32>
    %267 = arith.mulf %266, %263 : vector<16x128xf32>
    %268 = arith.mulf %267, %263 : vector<16x128xf32>
    %269 = arith.mulf %268, %263 : vector<16x128xf32>
    %270 = arith.addf %263, %269 : vector<16x128xf32>
    %cst_117 = arith.constant 0.797884583 : f32
    %271 = vector.broadcast %cst_117 : f32 to vector<16x128xf32>
    %272 = arith.mulf %271, %270 : vector<16x128xf32>
    %273 = math.tanh %272 : vector<16x128xf32>
    %cst_118 = arith.constant 1.000000e+00 : f32
    %274 = vector.broadcast %cst_118 : f32 to vector<16x128xf32>
    %275 = arith.addf %274, %273 : vector<16x128xf32>
    %276 = arith.mulf %265, %275 : vector<16x128xf32>
    %c1_119 = arith.constant 1 : index
    %c0_120 = arith.constant 0 : index
    %c0_121 = arith.constant 0 : index
    %277 = vector.load %arg14[%c1_119, %c0_120, %c0_121] : memref<2x128x32xf32, #tpu.memory_space<vmem>>, vector<1x128x32xf32>
    %278 = vector.shape_cast %277 : vector<1x128x32xf32> to vector<128x32xf32>
    %cst_122 = arith.constant dense<0.000000e+00> : vector<16x32xf32>
    %279 = tpu.matmul %276, %278, %cst_122 {dimension_numbers = #tpu.dot_dimension_numbers<[1], [0], [0], [1], [0, 0, 1, 1], [], []>} : vector<16x128xf32>, vector<128x32xf32>, vector<16x32xf32> -> vector<16x32xf32>
    %c1_123 = arith.constant 1 : index
    %c0_124 = arith.constant 0 : index
    %c0_125 = arith.constant 0 : index
    %280 = vector.load %arg15[%c1_123, %c0_124, %c0_125] : memref<2x1x32xf32, #tpu.memory_space<vmem>>, vector<1x1x32xf32>
    %281 = vector.shape_cast %280 : vector<1x1x32xf32> to vector<1x32xf32>
    %282 = vector.broadcast %281 : vector<1x32xf32> to vector<16x32xf32>
    %283 = arith.addf %279, %282 : vector<16x32xf32>
    %284 = arith.addf %283, %256 : vector<16x32xf32>
    %c1_126 = arith.constant 1 : index
    %c0_127 = arith.constant 0 : index
    %c0_128 = arith.constant 0 : index
    %285 = vector.load %arg16[%c1_126, %c0_127, %c0_128] : memref<2x1x32xf32, #tpu.memory_space<vmem>>, vector<1x1x32xf32>
    %286 = vector.shape_cast %285 : vector<1x1x32xf32> to vector<1x32xf32>
    %c1_129 = arith.constant 1 : index
    %c0_130 = arith.constant 0 : index
    %c0_131 = arith.constant 0 : index
    %287 = vector.load %arg17[%c1_129, %c0_130, %c0_131] : memref<2x1x32xf32, #tpu.memory_space<vmem>>, vector<1x1x32xf32>
    %288 = vector.shape_cast %287 : vector<1x1x32xf32> to vector<1x32xf32>
    %cst_132 = arith.constant dense<0.000000e+00> : vector<16xf32>
    %289 = vector.multi_reduction <add>, %284, %cst_132 [1] : vector<16x32xf32> to vector<16xf32>
    %290 = vector.shape_cast %289 : vector<16xf32> to vector<16x1xf32>
    %cst_133 = arith.constant 3.200000e+01 : f32
    %291 = vector.broadcast %cst_133 : f32 to vector<16x1xf32>
    %292 = arith.divf %290, %291 : vector<16x1xf32>
    %293 = vector.broadcast %292 : vector<16x1xf32> to vector<16x32xf32>
    %294 = arith.subf %284, %293 : vector<16x32xf32>
    %295 = arith.mulf %294, %294 : vector<16x32xf32>
    %cst_134 = arith.constant dense<0.000000e+00> : vector<16xf32>
    %296 = vector.multi_reduction <add>, %295, %cst_134 [1] : vector<16x32xf32> to vector<16xf32>
    %297 = vector.shape_cast %296 : vector<16xf32> to vector<16x1xf32>
    %cst_135 = arith.constant 3.200000e+01 : f32
    %298 = vector.broadcast %cst_135 : f32 to vector<16x1xf32>
    %299 = arith.divf %297, %298 : vector<16x1xf32>
    %cst_136 = arith.constant 9.99999996E-13 : f32
    %300 = vector.broadcast %cst_136 : f32 to vector<16x1xf32>
    %301 = arith.addf %299, %300 : vector<16x1xf32>
    %302 = math.rsqrt %301 : vector<16x1xf32>
    %303 = vector.broadcast %302 : vector<16x1xf32> to vector<16x32xf32>
    %304 = arith.mulf %294, %303 : vector<16x32xf32>
    %305 = vector.broadcast %286 : vector<1x32xf32> to vector<16x32xf32>
    %306 = arith.mulf %304, %305 : vector<16x32xf32>
    %307 = vector.broadcast %288 : vector<1x32xf32> to vector<16x32xf32>
    %308 = arith.addf %306, %307 : vector<16x32xf32>
    %309 = vector.shape_cast %308 : vector<16x32xf32> to vector<2x8x32xf32>
    %310 = vector.extract_strided_slice %309 {offsets = [0, 0, 0], sizes = [2, 1, 32], strides = [1, 1, 1]} : vector<2x8x32xf32> to vector<2x1x32xf32>
    %311 = vector.shape_cast %310 : vector<2x1x32xf32> to vector<2x32xf32>
    %c0_137 = arith.constant 0 : index
    %c0_138 = arith.constant 0 : index
    %312 = vector.load %arg18[%c0_137, %c0_138] : memref<32x32xf32, #tpu.memory_space<vmem>>, vector<32x32xf32>
    %cst_139 = arith.constant dense<0.000000e+00> : vector<2x32xf32>
    %313 = tpu.matmul %311, %312, %cst_139 {dimension_numbers = #tpu.dot_dimension_numbers<[1], [0], [0], [1], [0, 0, 1, 1], [], []>} : vector<2x32xf32>, vector<32x32xf32>, vector<2x32xf32> -> vector<2x32xf32>
    %c0_140 = arith.constant 0 : index
    %c0_141 = arith.constant 0 : index
    %314 = vector.load %arg19[%c0_140, %c0_141] : memref<1x32xf32, #tpu.memory_space<vmem>>, vector<1x32xf32>
    %315 = vector.broadcast %314 : vector<1x32xf32> to vector<2x32xf32>
    %316 = arith.addf %313, %315 : vector<2x32xf32>
    %317 = math.tanh %316 : vector<2x32xf32>
    %c0_142 = arith.constant 0 : index
    %c0_143 = arith.constant 0 : index
    %318 = vector.load %arg20[%c0_142, %c0_143] : memref<32x32xf32, #tpu.memory_space<vmem>>, vector<32x32xf32>
    %cst_144 = arith.constant dense<0.000000e+00> : vector<2x32xf32>
    %319 = tpu.matmul %317, %318, %cst_144 {dimension_numbers = #tpu.dot_dimension_numbers<[1], [0], [0], [1], [0, 0, 1, 1], [], []>} : vector<2x32xf32>, vector<32x32xf32>, vector<2x32xf32> -> vector<2x32xf32>
    %c0_145 = arith.constant 0 : index
    %c0_146 = arith.constant 0 : index
    %320 = vector.load %arg21[%c0_145, %c0_146] : memref<1x32xf32, #tpu.memory_space<vmem>>, vector<1x32xf32>
    %321 = vector.broadcast %320 : vector<1x32xf32> to vector<2x32xf32>
    %322 = arith.addf %319, %321 : vector<2x32xf32>
    %c0_147 = arith.constant 0 : index
    %c0_148 = arith.constant 0 : index
    %323 = vector.load %arg22[%c0_147, %c0_148] : memref<2x32xf32, #tpu.memory_space<vmem>>, vector<2x32xf32>
    tpu.vector_store %arg22[%c0_147, %c0_148], %322 {strides = array<i32>} : memref<2x32xf32, #tpu.memory_space<vmem>>, vector<2x32xf32>,
    return
  }
}

</mosaic_0001>

<llo_original>
// kernel: bert_encoder_forward.1
$region0: #{bert_encoder_forward.1}
  #allocation0 [shape = 'u32[]', space=smem, size = 0x4, offset = 0x4, fixed_abs, tag = 'smem constant byte address 0x4 - core index']
  #allocation1 [shape = 'u32[144,128]{1,0:T(1,128)}', space=vmem, size = 0x12000, scoped, tag = 'internal scratch']
  %s0 = inlined_call_operand.vmem [shape: s32[16,1], index: 0, kind: input, shape index: {}]
  %s1 = inlined_call_operand.vmem [shape: f32[64,32], index: 1, kind: input, shape index: {}]
  %s2 = inlined_call_operand.vmem [shape: f32[16,32], index: 2, kind: input, shape index: {}]
  %s3 = inlined_call_operand.vmem [shape: f32[1,32], index: 3, kind: input, shape index: {}]
  %s4 = inlined_call_operand.vmem [shape: f32[1,32], index: 4, kind: input, shape index: {}]
  %s5 = inlined_call_operand.vmem [shape: f32[16,16], index: 5, kind: input, shape index: {}]
  %s6 = inlined_call_operand.vmem [shape: f32[2,32,96], index: 6, kind: input, shape index: {}]
  %s7 = inlined_call_operand.vmem [shape: f32[2,1,96], index: 7, kind: input, shape index: {}]
  %s8 = inlined_call_operand.vmem [shape: f32[2,4,8,32], index: 8, kind: input, shape index: {}]
  %s9 = inlined_call_operand.vmem [shape: f32[2,1,32], index: 9, kind: input, shape index: {}]
  %s10 = inlined_call_operand.vmem [shape: f32[2,1,32], index: 10, kind: input, shape index: {}]
  %s11 = inlined_call_operand.vmem [shape: f32[2,1,32], index: 11, kind: input, shape index: {}]
  %s12 = inlined_call_operand.vmem [shape: f32[2,32,128], index: 12, kind: input, shape index: {}]
  %s13 = inlined_call_operand.vmem [shape: f32[2,1,128], index: 13, kind: input, shape index: {}]
  %s14 = inlined_call_operand.vmem [shape: f32[2,128,32], index: 14, kind: input, shape index: {}]
  %s15 = inlined_call_operand.vmem [shape: f32[2,1,32], index: 15, kind: input, shape index: {}]
  %s16 = inlined_call_operand.vmem [shape: f32[2,1,32], index: 16, kind: input, shape index: {}]
  %s17 = inlined_call_operand.vmem [shape: f32[2,1,32], index: 17, kind: input, shape index: {}]
  %s18 = inlined_call_operand.vmem [shape: f32[32,32], index: 18, kind: input, shape index: {}]
  %s19 = inlined_call_operand.vmem [shape: f32[1,32], index: 19, kind: input, shape index: {}]
  %s20 = inlined_call_operand.vmem [shape: f32[32,32], index: 20, kind: input, shape index: {}]
  %s21 = inlined_call_operand.vmem [shape: f32[1,32], index: 21, kind: input, shape index: {}]
  %s22 = inlined_call_operand.hbm [shape: f32[2,32], index: 22, kind: output, shape index: {}]
  %s23 = sld [smem:[#allocation0]]
  $region98: #{bert_encoder_forward.1} parent=0
    _
  %s25 = ssub.s32 1, %s23
  %s26 = scalar_select 0, %s25, %s23
  $region1: #{bert_encoder_forward.1} parent=0
    #allocation2 [shape = 'u8[1024]{0}', space=vmem, size = 0x400, scoped, tag = 'output window, operand 0, single buffered']
    #allocation3 [shape = 's32[1]{0}', space=sflag, size = 0x4, scoped, tag = 'scoped memory for bert_encoder_forward.1']
    %27 = vsyncpa [#allocation3], 0
    // Predicated region
    $region2: #{bert_encoder_forward.1} parent=1 // pred_check
      _
    $region3: #{bert_encoder_forward.1} parent=1 // pred_check_branch
      %29 = sbr.rel (0) target = $region5
    $region4: #{bert_encoder_forward.1} parent=1 // pred_region
      _
    $region5: #{bert_encoder_forward.1} parent=1 // pred_fallthru
      _
    // Predicated region
    $region6: #{bert_encoder_forward.1} parent=1 // pred_check
      _
    $region7: #{bert_encoder_forward.1} parent=1 // pred_check_branch
      %31 = sbr.rel (0) target = $region9
    $region8: #{bert_encoder_forward.1} parent=1 // pred_region
      _
    $region9: #{bert_encoder_forward.1} parent=1 // pred_fallthru
      _
    // Predicated region
    $region10: #{bert_encoder_forward.1} parent=1 // pred_check
      _
    $region11: #{bert_encoder_forward.1} parent=1 // pred_check_branch
      %33 = sbr.rel (0) target = $region13
    $region12: #{bert_encoder_forward.1} parent=1 // pred_region
      _
    $region13: #{bert_encoder_forward.1} parent=1 // pred_fallthru
      _
    // Predicated region
    $region14: #{bert_encoder_forward.1} parent=1 // pred_check
      _
    $region15: #{bert_encoder_forward.1} parent=1 // pred_check_branch
      %35 = sbr.rel (0) target = $region17
    $region16: #{bert_encoder_forward.1} parent=1 // pred_region
      _
    $region17: #{bert_encoder_forward.1} parent=1 // pred_fallthru
      _
    // Predicated region
    $region18: #{bert_encoder_forward.1} parent=1 // pred_check
      _
    $region19: #{bert_encoder_forward.1} parent=1 // pred_check_branch
      %37 = sbr.rel (0) target = $region21
    $region20: #{bert_encoder_forward.1} parent=1 // pred_region
      _
    $region21: #{bert_encoder_forward.1} parent=1 // pred_fallthru
      _
    // Predicated region
    $region22: #{bert_encoder_forward.1} parent=1 // pred_check
      _
    $region23: #{bert_encoder_forward.1} parent=1 // pred_check_branch
      %39 = sbr.rel (0) target = $region25
    $region24: #{bert_encoder_forward.1} parent=1 // pred_region
      _
    $region25: #{bert_encoder_forward.1} parent=1 // pred_fallthru
      _
    // Predicated region
    $region26: #{bert_encoder_forward.1} parent=1 // pred_check
      _
    $region27: #{bert_encoder_forward.1} parent=1 // pred_check_branch
      %41 = sbr.rel (0) target = $region29
    $region28: #{bert_encoder_forward.1} parent=1 // pred_region
      _
    $region29: #{bert_encoder_forward.1} parent=1 // pred_fallthru
      _
    // Predicated region
    $region30: #{bert_encoder_forward.1} parent=1 // pred_check
      _
    $region31: #{bert_encoder_forward.1} parent=1 // pred_check_branch
      %43 = sbr.rel (0) target = $region33
    $region32: #{bert_encoder_forward.1} parent=1 // pred_region
      _
    $region33: #{bert_encoder_forward.1} parent=1 // pred_fallthru
      _
    // Predicated region
    $region34: #{bert_encoder_forward.1} parent=1 // pred_check
      _
    $region35: #{bert_encoder_forward.1} parent=1 // pred_check_branch
      %45 = sbr.rel (0) target = $region37
    $region36: #{bert_encoder_forward.1} parent=1 // pred_region
      _
    $region37: #{bert_encoder_forward.1} parent=1 // pred_fallthru
      _
    // Predicated region
    $region38: #{bert_encoder_forward.1} parent=1 // pred_check
      _
    $region39: #{bert_encoder_forward.1} parent=1 // pred_check_branch
      %47 = sbr.rel (0) target = $region41
    $region40: #{bert_encoder_forward.1} parent=1 // pred_region
      _
    $region41: #{bert_encoder_forward.1} parent=1 // pred_fallthru
      _
    // Predicated region
    $region42: #{bert_encoder_forward.1} parent=1 // pred_check
      _
    $region43: #{bert_encoder_forward.1} parent=1 // pred_check_branch
      %49 = sbr.rel (0) target = $region45
    $region44: #{bert_encoder_forward.1} parent=1 // pred_region
      _
    $region45: #{bert_encoder_forward.1} parent=1 // pred_fallthru
      _
    // Predicated region
    $region46: #{bert_encoder_forward.1} parent=1 // pred_check
      _
    $region47: #{bert_encoder_forward.1} parent=1 // pred_check_branch
      %51 = sbr.rel (0) target = $region49
    $region48: #{bert_encoder_forward.1} parent=1 // pred_region
      _
    $region49: #{bert_encoder_forward.1} parent=1 // pred_fallthru
      _
    // Predicated region
    $region50: #{bert_encoder_forward.1} parent=1 // pred_check
      _
    $region51: #{bert_encoder_forward.1} parent=1 // pred_check_branch
      %53 = sbr.rel (0) target = $region53
    $region52: #{bert_encoder_forward.1} parent=1 // pred_region
      _
    $region53: #{bert_encoder_forward.1} parent=1 // pred_fallthru
      _
    // Predicated region
    $region54: #{bert_encoder_forward.1} parent=1 // pred_check
      _
    $region55: #{bert_encoder_forward.1} parent=1 // pred_check_branch
      %55 = sbr.rel (0) target = $region57
    $region56: #{bert_encoder_forward.1} parent=1 // pred_region
      _
    $region57: #{bert_encoder_forward.1} parent=1 // pred_fallthru
      _
    // Predicated region
    $region58: #{bert_encoder_forward.1} parent=1 // pred_check
      _
    $region59: #{bert_encoder_forward.1} parent=1 // pred_check_branch
      %57 = sbr.rel (0) target = $region61
    $region60: #{bert_encoder_forward.1} parent=1 // pred_region
      _
    $region61: #{bert_encoder_forward.1} parent=1 // pred_fallthru
      _
    // Predicated region
    $region62: #{bert_encoder_forward.1} parent=1 // pred_check
      _
    $region63: #{bert_encoder_forward.1} parent=1 // pred_check_branch
      %59 = sbr.rel (0) target = $region65
    $region64: #{bert_encoder_forward.1} parent=1 // pred_region
      _
    $region65: #{bert_encoder_forward.1} parent=1 // pred_fallthru
      _
    // Predicated region
    $region66: #{bert_encoder_forward.1} parent=1 // pred_check
      _
    $region67: #{bert_encoder_forward.1} parent=1 // pred_check_branch
      %61 = sbr.rel (0) target = $region69
    $region68: #{bert_encoder_forward.1} parent=1 // pred_region
      _
    $region69: #{bert_encoder_forward.1} parent=1 // pred_fallthru
      _
    // Predicated region
    $region70: #{bert_encoder_forward.1} parent=1 // pred_check
      _
    $region71: #{bert_encoder_forward.1} parent=1 // pred_check_branch
      %63 = sbr.rel (0) target = $region73
    $region72: #{bert_encoder_forward.1} parent=1 // pred_region
      _
    $region73: #{bert_encoder_forward.1} parent=1 // pred_fallthru
      _
    // Predicated region
    $region74: #{bert_encoder_forward.1} parent=1 // pred_check
      _
    $region75: #{bert_encoder_forward.1} parent=1 // pred_check_branch
      %65 = sbr.rel (0) target = $region77
    $region76: #{bert_encoder_forward.1} parent=1 // pred_region
      _
    $region77: #{bert_encoder_forward.1} parent=1 // pred_fallthru
      _
    // Predicated region
    $region78: #{bert_encoder_forward.1} parent=1 // pred_check
      _
    $region79: #{bert_encoder_forward.1} parent=1 // pred_check_branch
      %67 = sbr.rel (0) target = $region81
    $region80: #{bert_encoder_forward.1} parent=1 // pred_region
      _
    $region81: #{bert_encoder_forward.1} parent=1 // pred_fallthru
      _
    // Predicated region
    $region82: #{bert_encoder_forward.1} parent=1 // pred_check
      _
    $region83: #{bert_encoder_forward.1} parent=1 // pred_check_branch
      %69 = sbr.rel (0) target = $region85
    $region84: #{bert_encoder_forward.1} parent=1 // pred_region
      _
    $region85: #{bert_encoder_forward.1} parent=1 // pred_fallthru
      _
    // Predicated region
    $region86: #{bert_encoder_forward.1} parent=1 // pred_check
      _
    $region87: #{bert_encoder_forward.1} parent=1 // pred_check_branch
      %71 = sbr.rel (0) target = $region89
    $region88: #{bert_encoder_forward.1} parent=1 // pred_region
      _
    $region89: #{bert_encoder_forward.1} parent=1 // pred_fallthru
      _
    %v72 = vld [vmem:[%s0] sm:$0xff]
    %v73 = vld [vmem:[%s0 + $0x8] sm:$0xff]
    %v74 = vlaneseq
    %v75 = vand.u32 %v74, 127
    %76 = vset.pattern.permute.xlu0 0
    %77 = vperm.xlu0 %76, %v72
    %v78 = vpop.permute.xlu0 %77
    %79 = vset.pattern.permute.xlu0 0
    %80 = vperm.xlu0 %79, %v73
    %v81 = vpop.permute.xlu0 %80
    %vm82 = vcmp.eq.s32.totalorder %v75, %v78
    %vm83 = vcmp.eq.s32.totalorder %v75, %v81
    %v84 = vsel %vm82, 1, 0
    %v85 = vsel %vm83, 1, 0
    %v86 = vcvt.s32.f32 %v84
    %v87 = vcvt.s32.f32 %v85
    %v88 = vld [vmem:[%s1] sm:$0xff]
    %v89 = vld [vmem:[%s1 + $0x8] sm:$0xff]
    %v90 = vld [vmem:[%s1 + $0x10] sm:$0xff]
    %v91 = vld [vmem:[%s1 + $0x18] sm:$0xff]
    %v92 = vld [vmem:[%s1 + $0x20] sm:$0xff]
    %v93 = vld [vmem:[%s1 + $0x28] sm:$0xff]
    %v94 = vld [vmem:[%s1 + $0x30] sm:$0xff]
    %v95 = vld [vmem:[%s1 + $0x38] sm:$0xff]
    %v96 = vld [vmem:[%s2] sm:$0xff]
    %v97 = vld [vmem:[%s2 + $0x8] sm:$0xff]
    %vm98 = vcmask 523264
    %v100 = vsel %vm98, %v86, 0
    %v103 = vsel %vm98, %v87, 0
    %105 = vmatprep.subr.mxu0 0.0
    %106 = vmatpush1.msra.mxu0 %v88
    %107 = vmatprep.subr.mxu0 0.0
    %108 = vmatpush1.msra.mxu0 %v89
    %109 = vmatprep.subr.mxu0 0.0
    %110 = vmatpush1.msra.mxu0 %v90
    %111 = vmatprep.subr.mxu0 0.0
    %112 = vmatpush1.msra.mxu0 %v91
    %113 = vmatprep.subr.mxu0 0.0
    %114 = vmatpush1.msra.mxu0 %v92
    %115 = vmatprep.subr.mxu0 0.0
    %116 = vmatpush1.msra.mxu0 %v93
    %117 = vmatprep.subr.mxu0 0.0
    %118 = vmatpush1.msra.mxu0 %v94
    %119 = vmatprep.subr.mxu0 0.0
    %120 = vmatpush1.msra.mxu0 %v95
    %121 = vmatprep.subr.mxu0 0.0
    %122 = vmatpush1.msra.mxu0 0.0
    %123 = vmatprep.subr.mxu0 0.0
    %124 = vmatpush1.msra.mxu0 0.0
    %125 = vmatprep.subr.mxu0 0.0
    %126 = vmatpush1.msra.mxu0 0.0
    %127 = vmatprep.subr.mxu0 0.0
    %128 = vmatpush1.msra.mxu0 0.0
    %129 = vmatprep.subr.mxu0 0.0
    %130 = vmatpush1.msra.mxu0 0.0
    %131 = vmatprep.subr.mxu0 0.0
    %132 = vmatpush1.msra.mxu0 0.0
    %133 = vmatprep.subr.mxu0 0.0
    %134 = vmatpush1.msra.mxu0 0.0
    %135 = vmatprep.subr.mxu0 0.0
    %136 = vmatpush1.msra.mxu0 0.0
    %137 = vmatprep.subr.mxu0 0.0
    %138 = vmatpush1.msra.mxu0 0.0
    %139 = vmatprep.subr.mxu0 0.0
    %140 = vmatpush1.msra.mxu0 0.0
    %141 = vmatprep.subr.mxu0 0.0
    %142 = vmatpush1.msra.mxu0 0.0
    %143 = vmatprep.subr.mxu0 0.0
    %144 = vmatpush1.msra.mxu0 0.0
    %145 = vmatprep.subr.mxu0 0.0
    %146 = vmatpush1.msra.mxu0 0.0
    %147 = vmatprep.subr.mxu0 0.0
    %148 = vmatpush1.msra.mxu0 0.0
    %149 = vmatprep.subr.mxu0 0.0
    %150 = vmatpush1.msra.mxu0 0.0
    %151 = vmatprep.subr.mxu0 0.0
    %152 = vmatpush1.msra.mxu0 0.0
    %153 = vmatprep.subr.mxu0 0.0
    %154 = vmatpush1.msra.mxu0 0.0
    %155 = vmatprep.subr.mxu0 0.0
    %156 = vmatpush1.msra.mxu0 0.0
    %157 = vmatprep.subr.mxu0 0.0
    %158 = vmatpush1.msra.mxu0 0.0
    %159 = vmatprep.subr.mxu0 0.0
    %160 = vmatpush1.msra.mxu0 0.0
    %161 = vmatprep.subr.mxu0 0.0
    %162 = vmatpush1.msra.mxu0 0.0
    %163 = vmatprep.subr.mxu0 0.0
    %164 = vmatpush1.msra.mxu0 0.0
    %165 = vmatprep.subr.mxu0 0.0
    %166 = vmatpush1.msra.mxu0 0.0
    %167 = vmatprep.subr.mxu0 0.0
    %168 = vmatpush1.msra.mxu0 0.0
    %169 = vmatprep.mubr.f32.mxu0 0.0
    %170 = vmatmul.mubr.f32.gmra.mrb[0].mxu0 %v100
    %v171 = vpop.f32.mrb[0].mxu0
    %v172 = vadd.f32 %v96, %v171
    %v173 = vpop.f32.mrb[0].mxu0
    %174 = vmatprep.mubr.f32.mxu0 0.0
    %175 = vmatmul.mubr.f32.gmra.mrb[0].mxu0 %v103
    %v176 = vpop.f32.mrb[0].mxu0
    %v177 = vadd.f32 %v97, %v176
    %v178 = vpop.f32.mrb[0].mxu0
    %179 = vdwg.mxu0
    %v180 = vld [vmem:[%s3] sm:$0x1]
    %v181 = vld [vmem:[%s4] sm:$0x1]
    %vm182 = vcmask 261120
    %v183 = vsel %vm182, %v172, 0.0
    %184 = vadd.xlane.f32.xlu0 %v183
    %v185 = vpop.xlane.xlu0 %184
    %v186 = vsel %vm182, %v177, 0.0
    %187 = vadd.xlane.f32.xlu0 %v186
    %v188 = vpop.xlane.xlu0 %187
    %v189 = vrcp.pop 32.0
    %v190 = vmul.f32 %v185, %v189
    %v191 = vmul.f32 %v188, %v189
    %v192 = vsub.f32 %v172, %v190
    %v193 = vsub.f32 %v177, %v191
    %v194 = vmul.f32 %v192, %v192
    %v195 = vmul.f32 %v193, %v193
    %v196 = vsel %vm182, %v194, 0.0
    %197 = vadd.xlane.f32.xlu0 %v196
    %v198 = vpop.xlane.xlu0 %197
    %v199 = vsel %vm182, %v195, 0.0
    %200 = vadd.xlane.f32.xlu0 %v199
    %v201 = vpop.xlane.xlu0 %200
    %v202 = vmul.f32 %v198, %v189
    %v203 = vmul.f32 %v201, %v189
    %v204 = vadd.f32 %v202, 1e-12
    %v205 = vadd.f32 %v203, 1e-12
    %v206 = vrsqrt.pop %v204
    %v207 = vrsqrt.pop %v205
    %v208 = vmul.f32 %v192, %v206
    %v209 = vmul.f32 %v193, %v207
    %v211 = vlaneseq
    %v212 = vshrl.u32 %v211, 7
    %v213 = vsub.s32 0, %v212
    %v214 = vrot.slane %v180, %v213
    %v216 = vmul.f32 %v208, %v214
    %v217 = vmul.f32 %v209, %v214
    %v219 = vlaneseq
    %v220 = vshrl.u32 %v219, 7
    %v221 = vsub.s32 0, %v220
    %v222 = vrot.slane %v181, %v221
    %v224 = vadd.f32 %v216, %v222
    %v225 = vadd.f32 %v217, %v222
    %v226 = vld [vmem:[%s5] sm:$0xff]
    %v227 = vld [vmem:[%s5 + $0x8] sm:$0xff]
    %v228 = vld [vmem:[%s6] sm:$0xff]
    %v229 = vld [vmem:[%s6 + $0x8] sm:$0xff]
    %v230 = vld [vmem:[%s6 + $0x10] sm:$0xff]
    %v231 = vld [vmem:[%s6 + $0x18] sm:$0xff]
    %v232 = vld [vmem:[%s7] sm:$0x1]
    %v234 = vlaneseq
    %v235 = vshrl.u32 %v234, 7
    %v236 = vsub.s32 0, %v235
    %v237 = vrot.slane %v232, %v236
    %v240 = vsel %vm182, %v224, 0
    %v243 = vsel %vm182, %v225, 0
    %245 = vmatprep.subr.mxu0 0.0
    %246 = vmatpush1.msra.mxu0 %v228
    %247 = vmatprep.subr.mxu0 0.0
    %248 = vmatpush1.msra.mxu0 %v229
    %249 = vmatprep.subr.mxu0 0.0
    %250 = vmatpush1.msra.mxu0 %v230
    %251 = vmatprep.subr.mxu0 0.0
    %252 = vmatpush1.msra.mxu0 %v231
    %253 = vmatprep.subr.mxu0 0.0
    %254 = vmatpush1.msra.mxu0 0.0
    %255 = vmatprep.subr.mxu0 0.0
    %256 = vmatpush1.msra.mxu0 0.0
    %257 = vmatprep.subr.mxu0 0.0
    %258 = vmatpush1.msra.mxu0 0.0
    %259 = vmatprep.subr.mxu0 0.0
    %260 = vmatpush1.msra.mxu0 0.0
    %261 = vmatprep.subr.mxu0 0.0
    %262 = vmatpush1.msra.mxu0 0.0
    %263 = vmatprep.subr.mxu0 0.0
    %264 = vmatpush1.msra.mxu0 0.0
    %265 = vmatprep.subr.mxu0 0.0
    %266 = vmatpush1.msra.mxu0 0.0
    %267 = vmatprep.subr.mxu0 0.0
    %268 = vmatpush1.msra.mxu0 0.0
    %269 = vmatprep.subr.mxu0 0.0
    %270 = vmatpush1.msra.mxu0 0.0
    %271 = vmatprep.subr.mxu0 0.0
    %272 = vmatpush1.msra.mxu0 0.0
    %273 = vmatprep.subr.mxu0 0.0
    %274 = vmatpush1.msra.mxu0 0.0
    %275 = vmatprep.subr.mxu0 0.0
    %276 = vmatpush1.msra.mxu0 0.0
    %277 = vmatprep.subr.mxu0 0.0
    %278 = vmatpush1.msra.mxu0 0.0
    %279 = vmatprep.subr.mxu0 0.0
    %280 = vmatpush1.msra.mxu0 0.0
    %281 = vmatprep.subr.mxu0 0.0
    %282 = vmatpush1.msra.mxu0 0.0
    %283 = vmatprep.subr.mxu0 0.0
    %284 = vmatpush1.msra.mxu0 0.0
    %285 = vmatprep.subr.mxu0 0.0
    %286 = vmatpush1.msra.mxu0 0.0
    %287 = vmatprep.subr.mxu0 0.0
    %288 = vmatpush1.msra.mxu0 0.0
    %289 = vmatprep.subr.mxu0 0.0
    %290 = vmatpush1.msra.mxu0 0.0
    %291 = vmatprep.subr.mxu0 0.0
    %292 = vmatpush1.msra.mxu0 0.0
    %293 = vmatprep.subr.mxu0 0.0
    %294 = vmatpush1.msra.mxu0 0.0
    %295 = vmatprep.subr.mxu0 0.0
    %296 = vmatpush1.msra.mxu0 0.0
    %297 = vmatprep.subr.mxu0 0.0
    %298 = vmatpush1.msra.mxu0 0.0
    %299 = vmatprep.subr.mxu0 0.0
    %300 = vmatpush1.msra.mxu0 0.0
    %301 = vmatprep.subr.mxu0 0.0
    %302 = vmatpush1.msra.mxu0 0.0
    %303 = vmatprep.subr.mxu0 0.0
    %304 = vmatpush1.msra.mxu0 0.0
    %305 = vmatprep.subr.mxu0 0.0
    %306 = vmatpush1.msra.mxu0 0.0
    %307 = vmatprep.subr.mxu0 0.0
    %308 = vmatpush1.msra.mxu0 0.0
    %309 = vmatprep.mubr.f32.mxu0 0.0
    %310 = vmatmul.mubr.f32.gmra.mrb[0].mxu0 %v240
    %v311 = vpop.f32.mrb[0].mxu0
    %v312 = vadd.f32 %v237, %v311
    %v313 = vpop.f32.mrb[0].mxu0
    %314 = vmatprep.mubr.f32.mxu0 0.0
    %315 = vmatmul.mubr.f32.gmra.mrb[0].mxu0 %v243
    %v316 = vpop.f32.mrb[0].mxu0
    %v317 = vadd.f32 %v237, %v316
    %v318 = vpop.f32.mrb[0].mxu0
    %319 = vdwg.mxu0
    %322 = vrot.lane.b32.xlu0 %v312, 120
    %v323 = vpop.permute.xlu0 %322
    %324 = vrot.lane.b32.xlu0 %v317, 120
    %v325 = vpop.permute.xlu0 %324
    %326 = vrot.lane.b32.xlu0 %v312, 112
    %v327 = vpop.permute.xlu0 %326
    %328 = vrot.lane.b32.xlu0 %v317, 112
    %v329 = vpop.permute.xlu0 %328
    %330 = vrot.lane.b32.xlu0 %v312, 104
    %v331 = vpop.permute.xlu0 %330
    %332 = vrot.lane.b32.xlu0 %v317, 104
    %v333 = vpop.permute.xlu0 %332
    %334 = vrot.lane.b32.xlu0 %v312, 96
    %v335 = vpop.permute.xlu0 %334
    %336 = vrot.lane.b32.xlu0 %v317, 96
    %v337 = vpop.permute.xlu0 %336
    %vm338 = vcmask 64512
    %v339 = vsel %vm338, %v312, 0
    %v341 = vsel %vm338, %v317, 0
    %v343 = vsel %vm338, %v335, 0
    %v345 = vsel %vm338, %v337, 0
    %347 = vmatprep.subr.mxu0 0.0
    %348 = vmatpush1.xpose.msra.mxu0 %v343
    %349 = vmatprep.subr.mxu0 0.0
    %350 = vmatpush1.xpose.msra.mxu0 %v345
    %351 = vmatprep.subr.mxu0 0.0
    %352 = vmatpush1.xpose.msra.mxu0 0.0
    %353 = vmatprep.subr.mxu0 0.0
    %354 = vmatpush1.xpose.msra.mxu0 0.0
    %355 = vmatprep.subr.mxu0 0.0
    %356 = vmatpush1.xpose.msra.mxu0 0.0
    %357 = vmatprep.subr.mxu0 0.0
    %358 = vmatpush1.xpose.msra.mxu0 0.0
    %359 = vmatprep.subr.mxu0 0.0
    %360 = vmatpush1.xpose.msra.mxu0 0.0
    %361 = vmatprep.subr.mxu0 0.0
    %362 = vmatpush1.xpose.msra.mxu0 0.0
    %363 = vmatprep.subr.mxu0 0.0
    %364 = vmatpush1.xpose.msra.mxu0 0.0
    %365 = vmatprep.subr.mxu0 0.0
    %366 = vmatpush1.xpose.msra.mxu0 0.0
    %367 = vmatprep.subr.mxu0 0.0
    %368 = vmatpush1.xpose.msra.mxu0 0.0
    %369 = vmatprep.subr.mxu0 0.0
    %370 = vmatpush1.xpose.msra.mxu0 0.0
    %371 = vmatprep.subr.mxu0 0.0
    %372 = vmatpush1.xpose.msra.mxu0 0.0
    %373 = vmatprep.subr.mxu0 0.0
    %374 = vmatpush1.xpose.msra.mxu0 0.0
    %375 = vmatprep.subr.mxu0 0.0
    %376 = vmatpush1.xpose.msra.mxu0 0.0
    %377 = vmatprep.subr.mxu0 0.0
    %378 = vmatpush1.xpose.msra.mxu0 0.0
    %379 = vmatprep.subr.mxu0 0.0
    %380 = vmatpush1.xpose.msra.mxu0 0.0
    %381 = vmatprep.subr.mxu0 0.0
    %382 = vmatpush1.xpose.msra.mxu0 0.0
    %383 = vmatprep.subr.mxu0 0.0
    %384 = vmatpush1.xpose.msra.mxu0 0.0
    %385 = vmatprep.subr.mxu0 0.0
    %386 = vmatpush1.xpose.msra.mxu0 0.0
    %387 = vmatprep.subr.mxu0 0.0
    %388 = vmatpush1.xpose.msra.mxu0 0.0
    %389 = vmatprep.subr.mxu0 0.0
    %390 = vmatpush1.xpose.msra.mxu0 0.0
    %391 = vmatprep.subr.mxu0 0.0
    %392 = vmatpush1.xpose.msra.mxu0 0.0
    %393 = vmatprep.subr.mxu0 0.0
    %394 = vmatpush1.xpose.msra.mxu0 0.0
    %395 = vmatprep.subr.mxu0 0.0
    %396 = vmatpush1.xpose.msra.mxu0 0.0
    %397 = vmatprep.subr.mxu0 0.0
    %398 = vmatpush1.xpose.msra.mxu0 0.0
    %399 = vmatprep.subr.mxu0 0.0
    %400 = vmatpush1.xpose.msra.mxu0 0.0
    %401 = vmatprep.subr.mxu0 0.0
    %402 = vmatpush1.xpose.msra.mxu0 0.0
    %403 = vmatprep.subr.mxu0 0.0
    %404 = vmatpush1.xpose.msra.mxu0 0.0
    %405 = vmatprep.subr.mxu0 0.0
    %406 = vmatpush1.xpose.msra.mxu0 0.0
    %407 = vmatprep.subr.mxu0 0.0
    %408 = vmatpush1.xpose.msra.mxu0 0.0
    %409 = vmatprep.subr.mxu0 0.0
    %410 = vmatpush1.xpose.msra.mxu0 0.0
    %411 = vmatprep.mubr.f32.mxu0 0.0
    %412 = vmatmul.mubr.f32.gmra.mrb[0].mxu0 %v339
    %v413 = vpop.f32.mrb[0].mxu0
    %v414 = vadd.f32 0.0, %v413
    %v415 = vpop.f32.mrb[0].mxu0
    %416 = vmatprep.mubr.f32.mxu0 0.0
    %417 = vmatmul.mubr.f32.gmra.mrb[0].mxu0 %v341
    %v418 = vpop.f32.mrb[0].mxu0
    %v419 = vadd.f32 0.0, %v418
    %v420 = vpop.f32.mrb[0].mxu0
    %421 = vdwg.mxu0
    %422 = vrot.lane.b32.xlu0 %v323, 96
    %v423 = vpop.permute.xlu0 %422
    %424 = vrot.lane.b32.xlu0 %v325, 96
    %v425 = vpop.permute.xlu0 %424
    %v426 = vsel %vm338, %v323, 0
    %v428 = vsel %vm338, %v325, 0
    %v430 = vsel %vm338, %v423, 0
    %v432 = vsel %vm338, %v425, 0
    %434 = vmatprep.subr.mxu0 0.0
    %435 = vmatpush1.xpose.msra.mxu0 %v430
    %436 = vmatprep.subr.mxu0 0.0
    %437 = vmatpush1.xpose.msra.mxu0 %v432
    %438 = vmatprep.subr.mxu0 0.0
    %439 = vmatpush1.xpose.msra.mxu0 0.0
    %440 = vmatprep.subr.mxu0 0.0
    %441 = vmatpush1.xpose.msra.mxu0 0.0
    %442 = vmatprep.subr.mxu0 0.0
    %443 = vmatpush1.xpose.msra.mxu0 0.0
    %444 = vmatprep.subr.mxu0 0.0
    %445 = vmatpush1.xpose.msra.mxu0 0.0
    %446 = vmatprep.subr.mxu0 0.0
    %447 = vmatpush1.xpose.msra.mxu0 0.0
    %448 = vmatprep.subr.mxu0 0.0
    %449 = vmatpush1.xpose.msra.mxu0 0.0
    %450 = vmatprep.subr.mxu0 0.0
    %451 = vmatpush1.xpose.msra.mxu0 0.0
    %452 = vmatprep.subr.mxu0 0.0
    %453 = vmatpush1.xpose.msra.mxu0 0.0
    %454 = vmatprep.subr.mxu0 0.0
    %455 = vmatpush1.xpose.msra.mxu0 0.0
    %456 = vmatprep.subr.mxu0 0.0
    %457 = vmatpush1.xpose.msra.mxu0 0.0
    %458 = vmatprep.subr.mxu0 0.0
    %459 = vmatpush1.xpose.msra.mxu0 0.0
    %460 = vmatprep.subr.mxu0 0.0
    %461 = vmatpush1.xpose.msra.mxu0 0.0
    %462 = vmatprep.subr.mxu0 0.0
    %463 = vmatpush1.xpose.msra.mxu0 0.0
    %464 = vmatprep.subr.mxu0 0.0
    %465 = vmatpush1.xpose.msra.mxu0 0.0
    %466 = vmatprep.subr.mxu0 0.0
    %467 = vmatpush1.xpose.msra.mxu0 0.0
    %468 = vmatprep.subr.mxu0 0.0
    %469 = vmatpush1.xpose.msra.mxu0 0.0
    %470 = vmatprep.subr.mxu0 0.0
    %471 = vmatpush1.xpose.msra.mxu0 0.0
    %472 = vmatprep.subr.mxu0 0.0
    %473 = vmatpush1.xpose.msra.mxu0 0.0
    %474 = vmatprep.subr.mxu0 0.0
    %475 = vmatpush1.xpose.msra.mxu0 0.0
    %476 = vmatprep.subr.mxu0 0.0
    %477 = vmatpush1.xpose.msra.mxu0 0.0
    %478 = vmatprep.subr.mxu0 0.0
    %479 = vmatpush1.xpose.msra.mxu0 0.0
    %480 = vmatprep.subr.mxu0 0.0
    %481 = vmatpush1.xpose.msra.mxu0 0.0
    %482 = vmatprep.subr.mxu0 0.0
    %483 = vmatpush1.xpose.msra.mxu0 0.0
    %484 = vmatprep.subr.mxu0 0.0
    %485 = vmatpush1.xpose.msra.mxu0 0.0
    %486 = vmatprep.subr.mxu0 0.0
    %487 = vmatpush1.xpose.msra.mxu0 0.0
    %488 = vmatprep.subr.mxu0 0.0
    %489 = vmatpush1.xpose.msra.mxu0 0.0
    %490 = vmatprep.subr.mxu0 0.0
    %491 = vmatpush1.xpose.msra.mxu0 0.0
    %492 = vmatprep.subr.mxu0 0.0
    %493 = vmatpush1.xpose.msra.mxu0 0.0
    %494 = vmatprep.subr.mxu0 0.0
    %495 = vmatpush1.xpose.msra.mxu0 0.0
    %496 = vmatprep.subr.mxu0 0.0
    %497 = vmatpush1.xpose.msra.mxu0 0.0
    %498 = vmatprep.mubr.f32.mxu0 0.0
    %499 = vmatmul.mubr.f32.gmra.mrb[0].mxu0 %v426
    %v500 = vpop.f32.mrb[0].mxu0
    %v501 = vadd.f32 0.0, %v500
    %v502 = vpop.f32.mrb[0].mxu0
    %503 = vmatprep.mubr.f32.mxu0 0.0
    %504 = vmatmul.mubr.f32.gmra.mrb[0].mxu0 %v428
    %v505 = vpop.f32.mrb[0].mxu0
    %v506 = vadd.f32 0.0, %v505
    %v507 = vpop.f32.mrb[0].mxu0
    %508 = vdwg.mxu0
    %509 = vrot.lane.b32.xlu0 %v327, 96
    %v510 = vpop.permute.xlu0 %509
    %511 = vrot.lane.b32.xlu0 %v329, 96
    %v512 = vpop.permute.xlu0 %511
    %v513 = vsel %vm338, %v327, 0
    %v515 = vsel %vm338, %v329, 0
    %v517 = vsel %vm338, %v510, 0
    %v519 = vsel %vm338, %v512, 0
    %521 = vmatprep.subr.mxu0 0.0
    %522 = vmatpush1.xpose.msra.mxu0 %v517
    %523 = vmatprep.subr.mxu0 0.0
    %524 = vmatpush1.xpose.msra.mxu0 %v519
    %525 = vmatprep.subr.mxu0 0.0
    %526 = vmatpush1.xpose.msra.mxu0 0.0
    %527 = vmatprep.subr.mxu0 0.0
    %528 = vmatpush1.xpose.msra.mxu0 0.0
    %529 = vmatprep.subr.mxu0 0.0
    %530 = vmatpush1.xpose.msra.mxu0 0.0
    %531 = vmatprep.subr.mxu0 0.0
    %532 = vmatpush1.xpose.msra.mxu0 0.0
    %533 = vmatprep.subr.mxu0 0.0
    %534 = vmatpush1.xpose.msra.mxu0 0.0
    %535 = vmatprep.subr.mxu0 0.0
    %536 = vmatpush1.xpose.msra.mxu0 0.0
    %537 = vmatprep.subr.mxu0 0.0
    %538 = vmatpush1.xpose.msra.mxu0 0.0
    %539 = vmatprep.subr.mxu0 0.0
    %540 = vmatpush1.xpose.msra.mxu0 0.0
    %541 = vmatprep.subr.mxu0 0.0
    %542 = vmatpush1.xpose.msra.mxu0 0.0
    %543 = vmatprep.subr.mxu0 0.0
    %544 = vmatpush1.xpose.msra.mxu0 0.0
    %545 = vmatprep.subr.mxu0 0.0
    %546 = vmatpush1.xpose.msra.mxu0 0.0
    %547 = vmatprep.subr.mxu0 0.0
    %548 = vmatpush1.xpose.msra.mxu0 0.0
    %549 = vmatprep.subr.mxu0 0.0
    %550 = vmatpush1.xpose.msra.mxu0 0.0
    %551 = vmatprep.subr.mxu0 0.0
    %552 = vmatpush1.xpose.msra.mxu0 0.0
    %553 = vmatprep.subr.mxu0 0.0
    %554 = vmatpush1.xpose.msra.mxu0 0.0
    %555 = vmatprep.subr.mxu0 0.0
    %556 = vmatpush1.xpose.msra.mxu0 0.0
    %557 = vmatprep.subr.mxu0 0.0
    %558 = vmatpush1.xpose.msra.mxu0 0.0
    %559 = vmatprep.subr.mxu0 0.0
    %560 = vmatpush1.xpose.msra.mxu0 0.0
    %561 = vmatprep.subr.mxu0 0.0
    %562 = vmatpush1.xpose.msra.mxu0 0.0
    %563 = vmatprep.subr.mxu0 0.0
    %564 = vmatpush1.xpose.msra.mxu0 0.0
    %565 = vmatprep.subr.mxu0 0.0
    %566 = vmatpush1.xpose.msra.mxu0 0.0
    %567 = vmatprep.subr.mxu0 0.0
    %568 = vmatpush1.xpose.msra.mxu0 0.0
    %569 = vmatprep.subr.mxu0 0.0
    %570 = vmatpush1.xpose.msra.mxu0 0.0
    %571 = vmatprep.subr.mxu0 0.0
    %572 = vmatpush1.xpose.msra.mxu0 0.0
    %573 = vmatprep.subr.mxu0 0.0
    %574 = vmatpush1.xpose.msra.mxu0 0.0
    %575 = vmatprep.subr.mxu0 0.0
    %576 = vmatpush1.xpose.msra.mxu0 0.0
    %577 = vmatprep.subr.mxu0 0.0
    %578 = vmatpush1.xpose.msra.mxu0 0.0
    %579 = vmatprep.subr.mxu0 0.0
    %580 = vmatpush1.xpose.msra.mxu0 0.0
    %581 = vmatprep.subr.mxu0 0.0
    %582 = vmatpush1.xpose.msra.mxu0 0.0
    %583 = vmatprep.subr.mxu0 0.0
    %584 = vmatpush1.xpose.msra.mxu0 0.0
    %585 = vmatprep.mubr.f32.mxu0 0.0
    %586 = vmatmul.mubr.f32.gmra.mrb[0].mxu0 %v513
    %v587 = vpop.f32.mrb[0].mxu0
    %v588 = vadd.f32 0.0, %v587
    %v589 = vpop.f32.mrb[0].mxu0
    %590 = vmatprep.mubr.f32.mxu0 0.0
    %591 = vmatmul.mubr.f32.gmra.mrb[0].mxu0 %v515
    %v592 = vpop.f32.mrb[0].mxu0
    %v593 = vadd.f32 0.0, %v592
    %v594 = vpop.f32.mrb[0].mxu0
    %595 = vdwg.mxu0
    %596 = vrot.lane.b32.xlu0 %v331, 96
    %v597 = vpop.permute.xlu0 %596
    %598 = vrot.lane.b32.xlu0 %v333, 96
    %v599 = vpop.permute.xlu0 %598
    %v600 = vsel %vm338, %v331, 0
    %v602 = vsel %vm338, %v333, 0
    %v604 = vsel %vm338, %v597, 0
    %v606 = vsel %vm338, %v599, 0
    %608 = vmatprep.subr.mxu0 0.0
    %609 = vmatpush1.xpose.msra.mxu0 %v604
    %610 = vmatprep.subr.mxu0 0.0
    %611 = vmatpush1.xpose.msra.mxu0 %v606
    %612 = vmatprep.subr.mxu0 0.0
    %613 = vmatpush1.xpose.msra.mxu0 0.0
    %614 = vmatprep.subr.mxu0 0.0
    %615 = vmatpush1.xpose.msra.mxu0 0.0
    %616 = vmatprep.subr.mxu0 0.0
    %617 = vmatpush1.xpose.msra.mxu0 0.0
    %618 = vmatprep.subr.mxu0 0.0
    %619 = vmatpush1.xpose.msra.mxu0 0.0
    %620 = vmatprep.subr.mxu0 0.0
    %621 = vmatpush1.xpose.msra.mxu0 0.0
    %622 = vmatprep.subr.mxu0 0.0
    %623 = vmatpush1.xpose.msra.mxu0 0.0
    %624 = vmatprep.subr.mxu0 0.0
    %625 = vmatpush1.xpose.msra.mxu0 0.0
    %626 = vmatprep.subr.mxu0 0.0
    %627 = vmatpush1.xpose.msra.mxu0 0.0
    %628 = vmatprep.subr.mxu0 0.0
    %629 = vmatpush1.xpose.msra.mxu0 0.0
    %630 = vmatprep.subr.mxu0 0.0
    %631 = vmatpush1.xpose.msra.mxu0 0.0
    %632 = vmatprep.subr.mxu0 0.0
    %633 = vmatpush1.xpose.msra.mxu0 0.0
    %634 = vmatprep.subr.mxu0 0.0
    %635 = vmatpush1.xpose.msra.mxu0 0.0
    %636 = vmatprep.subr.mxu0 0.0
    %637 = vmatpush1.xpose.msra.mxu0 0.0
    %638 = vmatprep.subr.mxu0 0.0
    %639 = vmatpush1.xpose.msra.mxu0 0.0
    %640 = vmatprep.subr.mxu0 0.0
    %641 = vmatpush1.xpose.msra.mxu0 0.0
    %642 = vmatprep.subr.mxu0 0.0
    %643 = vmatpush1.xpose.msra.mxu0 0.0
    %644 = vmatprep.subr.mxu0 0.0
    %645 = vmatpush1.xpose.msra.mxu0 0.0
    %646 = vmatprep.subr.mxu0 0.0
    %647 = vmatpush1.xpose.msra.mxu0 0.0
    %648 = vmatprep.subr.mxu0 0.0
    %649 = vmatpush1.xpose.msra.mxu0 0.0
    %650 = vmatprep.subr.mxu0 0.0
    %651 = vmatpush1.xpose.msra.mxu0 0.0
    %652 = vmatprep.subr.mxu0 0.0
    %653 = vmatpush1.xpose.msra.mxu0 0.0
    %654 = vmatprep.subr.mxu0 0.0
    %655 = vmatpush1.xpose.msra.mxu0 0.0
    %656 = vmatprep.subr.mxu0 0.0
    %657 = vmatpush1.xpose.msra.mxu0 0.0
    %658 = vmatprep.subr.mxu0 0.0
    %659 = vmatpush1.xpose.msra.mxu0 0.0
    %660 = vmatprep.subr.mxu0 0.0
    %661 = vmatpush1.xpose.msra.mxu0 0.0
    %662 = vmatprep.subr.mxu0 0.0
    %663 = vmatpush1.xpose.msra.mxu0 0.0
    %664 = vmatprep.subr.mxu0 0.0
    %665 = vmatpush1.xpose.msra.mxu0 0.0
    %666 = vmatprep.subr.mxu0 0.0
    %667 = vmatpush1.xpose.msra.mxu0 0.0
    %668 = vmatprep.subr.mxu0 0.0
    %669 = vmatpush1.xpose.msra.mxu0 0.0
    %670 = vmatprep.subr.mxu0 0.0
    %671 = vmatpush1.xpose.msra.mxu0 0.0
    %672 = vmatprep.mubr.f32.mxu0 0.0
    %673 = vmatmul.mubr.f32.gmra.mrb[0].mxu0 %v600
    %v674 = vpop.f32.mrb[0].mxu0
    %v675 = vadd.f32 0.0, %v674
    %v676 = vpop.f32.mrb[0].mxu0
    %677 = vmatprep.mubr.f32.mxu0 0.0
    %678 = vmatmul.mubr.f32.gmra.mrb[0].mxu0 %v602
    %v679 = vpop.f32.mrb[0].mxu0
    %v680 = vadd.f32 0.0, %v679
    %v681 = vpop.f32.mrb[0].mxu0
    %682 = vdwg.mxu0
    %v683 = vmul.f32 %v414, 0.35355338
    %v684 = vmul.f32 %v419, 0.35355338
    %v685 = vmul.f32 %v501, 0.35355338
    %v686 = vmul.f32 %v506, 0.35355338
    %v687 = vmul.f32 %v588, 0.35355338
    %v688 = vmul.f32 %v593, 0.35355338
    %v689 = vmul.f32 %v675, 0.35355338
    %v690 = vmul.f32 %v680, 0.35355338
    %v691 = vadd.f32 %v683, %v226
    %v692 = vadd.f32 %v684, %v227
    %v693 = vadd.f32 %v685, %v226
    %v694 = vadd.f32 %v686, %v227
    %v695 = vadd.f32 %v687, %v226
    %v696 = vadd.f32 %v688, %v227
    %v697 = vadd.f32 %v689, %v226
    %v698 = vadd.f32 %v690, %v227
    %vm699 = vcmask 130048
    %v700 = vsel %vm699, %v691, -inf
    %701 = vmax.xlane.f32.xlu0 %v700
    %v702 = vpop.xlane.xlu0 %701
    %v703 = vsel %vm699, %v692, -inf
    %704 = vmax.xlane.f32.xlu0 %v703
    %v705 = vpop.xlane.xlu0 %704
    %v706 = vsel %vm699, %v693, -inf
    %707 = vmax.xlane.f32.xlu0 %v706
    %v708 = vpop.xlane.xlu0 %707
    %v709 = vsel %vm699, %v694, -inf
    %710 = vmax.xlane.f32.xlu0 %v709
    %v711 = vpop.xlane.xlu0 %710
    %v712 = vsel %vm699, %v695, -inf
    %713 = vmax.xlane.f32.xlu0 %v712
    %v714 = vpop.xlane.xlu0 %713
    %v715 = vsel %vm699, %v696, -inf
    %716 = vmax.xlane.f32.xlu0 %v715
    %v717 = vpop.xlane.xlu0 %716
    %v718 = vsel %vm699, %v697, -inf
    %719 = vmax.xlane.f32.xlu0 %v718
    %v720 = vpop.xlane.xlu0 %719
    %v721 = vsel %vm699, %v698, -inf
    %722 = vmax.xlane.f32.xlu0 %v721
    %v723 = vpop.xlane.xlu0 %722
    %v724 = vsub.f32 %v691, %v702
    %v725 = vsub.f32 %v692, %v705
    %v726 = vsub.f32 %v693, %v708
    %v727 = vsub.f32 %v694, %v711
    %v728 = vsub.f32 %v695, %v714
    %v729 = vsub.f32 %v696, %v717
    %v730 = vsub.f32 %v697, %v720
    %v731 = vsub.f32 %v698, %v723
    %v732 = vmul.f32 %v724, 1.442695
    %v733 = vpow.pop %v732
    %v734 = vmul.f32 %v725, 1.442695
    %v735 = vpow.pop %v734
    %v736 = vmul.f32 %v726, 1.442695
    %v737 = vpow.pop %v736
    %v738 = vmul.f32 %v727, 1.442695
    %v739 = vpow.pop %v738
    %v740 = vmul.f32 %v728, 1.442695
    %v741 = vpow.pop %v740
    %v742 = vmul.f32 %v729, 1.442695
    %v743 = vpow.pop %v742
    %v744 = vmul.f32 %v730, 1.442695
    %v745 = vpow.pop %v744
    %v746 = vmul.f32 %v731, 1.442695
    %v747 = vpow.pop %v746
    %v748 = vsel %vm699, %v733, 0.0
    %749 = vadd.xlane.f32.xlu0 %v748
    %v750 = vpop.xlane.xlu0 %749
    %v751 = vsel %vm699, %v735, 0.0
    %752 = vadd.xlane.f32.xlu0 %v751
    %v753 = vpop.xlane.xlu0 %752
    %v754 = vsel %vm699, %v737, 0.0
    %755 = vadd.xlane.f32.xlu0 %v754
    %v756 = vpop.xlane.xlu0 %755
    %v757 = vsel %vm699, %v739, 0.0
    %758 = vadd.xlane.f32.xlu0 %v757
    %v759 = vpop.xlane.xlu0 %758
    %v760 = vsel %vm699, %v741, 0.0
    %761 = vadd.xlane.f32.xlu0 %v760
    %v762 = vpop.xlane.xlu0 %761
    %v763 = vsel %vm699, %v743, 0.0
    %764 = vadd.xlane.f32.xlu0 %v763
    %v765 = vpop.xlane.xlu0 %764
    %v766 = vsel %vm699, %v745, 0.0
    %767 = vadd.xlane.f32.xlu0 %v766
    %v768 = vpop.xlane.xlu0 %767
    %v769 = vsel %vm699, %v747, 0.0
    %770 = vadd.xlane.f32.xlu0 %v769
    %v771 = vpop.xlane.xlu0 %770
    %v772 = vrcp.pop %v750
    %v773 = vmul.f32 %v733, %v772
    %v774 = vrcp.pop %v753
    %v775 = vmul.f32 %v735, %v774
    %v776 = vrcp.pop %v756
    %v777 = vmul.f32 %v737, %v776
    %v778 = vrcp.pop %v759
    %v779 = vmul.f32 %v739, %v778
    %v780 = vrcp.pop %v762
    %v781 = vmul.f32 %v741, %v780
    %v782 = vrcp.pop %v765
    %v783 = vmul.f32 %v743, %v782
    %v784 = vrcp.pop %v768
    %v785 = vmul.f32 %v745, %v784
    %v786 = vrcp.pop %v771
    %v787 = vmul.f32 %v747, %v786
    %788 = vrot.lane.b32.xlu0 %v312, 64
    %v789 = vpop.permute.xlu0 %788
    %790 = vrot.lane.b32.xlu0 %v317, 64
    %v791 = vpop.permute.xlu0 %790
    %v795 = vsel %vm699, %v773, 0
    %v798 = vsel %vm699, %v775, 0
    %800 = vmatprep.subr.mxu0 0.0
    %801 = vmatpush1.msra.mxu0 %v789
    %802 = vmatprep.subr.mxu0 0.0
    %803 = vmatpush1.msra.mxu0 %v791
    %804 = vmatprep.subr.mxu0 0.0
    %805 = vmatpush1.msra.mxu0 0.0
    %806 = vmatprep.subr.mxu0 0.0
    %807 = vmatpush1.msra.mxu0 0.0
    %808 = vmatprep.subr.mxu0 0.0
    %809 = vmatpush1.msra.mxu0 0.0
    %810 = vmatprep.subr.mxu0 0.0
    %811 = vmatpush1.msra.mxu0 0.0
    %812 = vmatprep.subr.mxu0 0.0
    %813 = vmatpush1.msra.mxu0 0.0
    %814 = vmatprep.subr.mxu0 0.0
    %815 = vmatpush1.msra.mxu0 0.0
    %816 = vmatprep.subr.mxu0 0.0
    %817 = vmatpush1.msra.mxu0 0.0
    %818 = vmatprep.subr.mxu0 0.0
    %819 = vmatpush1.msra.mxu0 0.0
    %820 = vmatprep.subr.mxu0 0.0
    %821 = vmatpush1.msra.mxu0 0.0
    %822 = vmatprep.subr.mxu0 0.0
    %823 = vmatpush1.msra.mxu0 0.0
    %824 = vmatprep.subr.mxu0 0.0
    %825 = vmatpush1.msra.mxu0 0.0
    %826 = vmatprep.subr.mxu0 0.0
    %827 = vmatpush1.msra.mxu0 0.0
    %828 = vmatprep.subr.mxu0 0.0
    %829 = vmatpush1.msra.mxu0 0.0
    %830 = vmatprep.subr.mxu0 0.0
    %831 = vmatpush1.msra.mxu0 0.0
    %832 = vmatprep.subr.mxu0 0.0
    %833 = vmatpush1.msra.mxu0 0.0
    %834 = vmatprep.subr.mxu0 0.0
    %835 = vmatpush1.msra.mxu0 0.0
    %836 = vmatprep.subr.mxu0 0.0
    %837 = vmatpush1.msra.mxu0 0.0
    %838 = vmatprep.subr.mxu0 0.0
    %839 = vmatpush1.msra.mxu0 0.0
    %840 = vmatprep.subr.mxu0 0.0
    %841 = vmatpush1.msra.mxu0 0.0
    %842 = vmatprep.subr.mxu0 0.0
    %843 = vmatpush1.msra.mxu0 0.0
    %844 = vmatprep.subr.mxu0 0.0
    %845 = vmatpush1.msra.mxu0 0.0
    %846 = vmatprep.subr.mxu0 0.0
    %847 = vmatpush1.msra.mxu0 0.0
    %848 = vmatprep.subr.mxu0 0.0
    %849 = vmatpush1.msra.mxu0 0.0
    %850 = vmatprep.subr.mxu0 0.0
    %851 = vmatpush1.msra.mxu0 0.0
    %852 = vmatprep.subr.mxu0 0.0
    %853 = vmatpush1.msra.mxu0 0.0
    %854 = vmatprep.subr.mxu0 0.0
    %855 = vmatpush1.msra.mxu0 0.0
    %856 = vmatprep.subr.mxu0 0.0
    %857 = vmatpush1.msra.mxu0 0.0
    %858 = vmatprep.subr.mxu0 0.0
    %859 = vmatpush1.msra.mxu0 0.0
    %860 = vmatprep.subr.mxu0 0.0
    %861 = vmatpush1.msra.mxu0 0.0
    %862 = vmatprep.subr.mxu0 0.0
    %863 = vmatpush1.msra.mxu0 0.0
    %864 = vmatprep.mubr.f32.mxu0 0.0
    %865 = vmatmul.mubr.f32.gmra.mrb[0].mxu0 %v795
    %v866 = vpop.f32.mrb[0].mxu0
    %v867 = vadd.f32 0.0, %v866
    %v868 = vpop.f32.mrb[0].mxu0
    %869 = vmatprep.mubr.f32.mxu0 0.0
    %870 = vmatmul.mubr.f32.gmra.mrb[0].mxu0 %v798
    %v871 = vpop.f32.mrb[0].mxu0
    %v872 = vadd.f32 0.0, %v871
    %v873 = vpop.f32.mrb[0].mxu0
    %874 = vdwg.mxu0
    %875 = vrot.lane.b32.xlu0 %v323, 64
    %v876 = vpop.permute.xlu0 %875
    %877 = vrot.lane.b32.xlu0 %v325, 64
    %v878 = vpop.permute.xlu0 %877
    %v882 = vsel %vm699, %v777, 0
    %v885 = vsel %vm699, %v779, 0
    %887 = vmatprep.subr.mxu0 0.0
    %888 = vmatpush1.msra.mxu0 %v876
    %889 = vmatprep.subr.mxu0 0.0
    %890 = vmatpush1.msra.mxu0 %v878
    %891 = vmatprep.subr.mxu0 0.0
    %892 = vmatpush1.msra.mxu0 0.0
    %893 = vmatprep.subr.mxu0 0.0
    %894 = vmatpush1.msra.mxu0 0.0
    %895 = vmatprep.subr.mxu0 0.0
    %896 = vmatpush1.msra.mxu0 0.0
    %897 = vmatprep.subr.mxu0 0.0
    %898 = vmatpush1.msra.mxu0 0.0
    %899 = vmatprep.subr.mxu0 0.0
    %900 = vmatpush1.msra.mxu0 0.0
    %901 = vmatprep.subr.mxu0 0.0
    %902 = vmatpush1.msra.mxu0 0.0
    %903 = vmatprep.subr.mxu0 0.0
    %904 = vmatpush1.msra.mxu0 0.0
    %905 = vmatprep.subr.mxu0 0.0
    %906 = vmatpush1.msra.mxu0 0.0
    %907 = vmatprep.subr.mxu0 0.0
    %908 = vmatpush1.msra.mxu0 0.0
    %909 = vmatprep.subr.mxu0 0.0
    %910 = vmatpush1.msra.mxu0 0.0
    %911 = vmatprep.subr.mxu0 0.0
    %912 = vmatpush1.msra.mxu0 0.0
    %913 = vmatprep.subr.mxu0 0.0
    %914 = vmatpush1.msra.mxu0 0.0
    %915 = vmatprep.subr.mxu0 0.0
    %916 = vmatpush1.msra.mxu0 0.0
    %917 = vmatprep.subr.mxu0 0.0
    %918 = vmatpush1.msra.mxu0 0.0
    %919 = vmatprep.subr.mxu0 0.0
    %920 = vmatpush1.msra.mxu0 0.0
    %921 = vmatprep.subr.mxu0 0.0
    %922 = vmatpush1.msra.mxu0 0.0
    %923 = vmatprep.subr.mxu0 0.0
    %924 = vmatpush1.msra.mxu0 0.0
    %925 = vmatprep.subr.mxu0 0.0
    %926 = vmatpush1.msra.mxu0 0.0
    %927 = vmatprep.subr.mxu0 0.0
    %928 = vmatpush1.msra.mxu0 0.0
    %929 = vmatprep.subr.mxu0 0.0
    %930 = vmatpush1.msra.mxu0 0.0
    %931 = vmatprep.subr.mxu0 0.0
    %932 = vmatpush1.msra.mxu0 0.0
    %933 = vmatprep.subr.mxu0 0.0
    %934 = vmatpush1.msra.mxu0 0.0
    %935 = vmatprep.subr.mxu0 0.0
    %936 = vmatpush1.msra.mxu0 0.0
    %937 = vmatprep.subr.mxu0 0.0
    %938 = vmatpush1.msra.mxu0 0.0
    %939 = vmatprep.subr.mxu0 0.0
    %940 = vmatpush1.msra.mxu0 0.0
    %941 = vmatprep.subr.mxu0 0.0
    %942 = vmatpush1.msra.mxu0 0.0
    %943 = vmatprep.subr.mxu0 0.0
    %944 = vmatpush1.msra.mxu0 0.0
    %945 = vmatprep.subr.mxu0 0.0
    %946 = vmatpush1.msra.mxu0 0.0
    %947 = vmatprep.subr.mxu0 0.0
    %948 = vmatpush1.msra.mxu0 0.0
    %949 = vmatprep.subr.mxu0 0.0
    %950 = vmatpush1.msra.mxu0 0.0
    %951 = vmatprep.mubr.f32.mxu0 0.0
    %952 = vmatmul.mubr.f32.gmra.mrb[0].mxu0 %v882
    %v953 = vpop.f32.mrb[0].mxu0
    %v954 = vadd.f32 0.0, %v953
    %v955 = vpop.f32.mrb[0].mxu0
    %956 = vmatprep.mubr.f32.mxu0 0.0
    %957 = vmatmul.mubr.f32.gmra.mrb[0].mxu0 %v885
    %v958 = vpop.f32.mrb[0].mxu0
    %v959 = vadd.f32 0.0, %v958
    %v960 = vpop.f32.mrb[0].mxu0
    %961 = vdwg.mxu0
    %962 = vrot.lane.b32.xlu0 %v327, 64
    %v963 = vpop.permute.xlu0 %962
    %964 = vrot.lane.b32.xlu0 %v329, 64
    %v965 = vpop.permute.xlu0 %964
    %v969 = vsel %vm699, %v781, 0
    %v972 = vsel %vm699, %v783, 0
    %974 = vmatprep.subr.mxu0 0.0
    %975 = vmatpush1.msra.mxu0 %v963
    %976 = vmatprep.subr.mxu0 0.0
    %977 = vmatpush1.msra.mxu0 %v965
    %978 = vmatprep.subr.mxu0 0.0
    %979 = vmatpush1.msra.mxu0 0.0
    %980 = vmatprep.subr.mxu0 0.0
    %981 = vmatpush1.msra.mxu0 0.0
    %982 = vmatprep.subr.mxu0 0.0
    %983 = vmatpush1.msra.mxu0 0.0
    %984 = vmatprep.subr.mxu0 0.0
    %985 = vmatpush1.msra.mxu0 0.0
    %986 = vmatprep.subr.mxu0 0.0
    %987 = vmatpush1.msra.mxu0 0.0
    %988 = vmatprep.subr.mxu0 0.0
    %989 = vmatpush1.msra.mxu0 0.0
    %990 = vmatprep.subr.mxu0 0.0
    %991 = vmatpush1.msra.mxu0 0.0
    %992 = vmatprep.subr.mxu0 0.0
    %993 = vmatpush1.msra.mxu0 0.0
    %994 = vmatprep.subr.mxu0 0.0
    %995 = vmatpush1.msra.mxu0 0.0
    %996 = vmatprep.subr.mxu0 0.0
    %997 = vmatpush1.msra.mxu0 0.0
    %998 = vmatprep.subr.mxu0 0.0
    %999 = vmatpush1.msra.mxu0 0.0
    %1000 = vmatprep.subr.mxu0 0.0
    %1001 = vmatpush1.msra.mxu0 0.0
    %1002 = vmatprep.subr.mxu0 0.0
    %1003 = vmatpush1.msra.mxu0 0.0
    %1004 = vmatprep.subr.mxu0 0.0
    %1005 = vmatpush1.msra.mxu0 0.0
    %1006 = vmatprep.subr.mxu0 0.0
    %1007 = vmatpush1.msra.mxu0 0.0
    %1008 = vmatprep.subr.mxu0 0.0
    %1009 = vmatpush1.msra.mxu0 0.0
    %1010 = vmatprep.subr.mxu0 0.0
    %1011 = vmatpush1.msra.mxu0 0.0
    %1012 = vmatprep.subr.mxu0 0.0
    %1013 = vmatpush1.msra.mxu0 0.0
    %1014 = vmatprep.subr.mxu0 0.0
    %1015 = vmatpush1.msra.mxu0 0.0
    %1016 = vmatprep.subr.mxu0 0.0
    %1017 = vmatpush1.msra.mxu0 0.0
    %1018 = vmatprep.subr.mxu0 0.0
    %1019 = vmatpush1.msra.mxu0 0.0
    %1020 = vmatprep.subr.mxu0 0.0
    %1021 = vmatpush1.msra.mxu0 0.0
    %1022 = vmatprep.subr.mxu0 0.0
    %1023 = vmatpush1.msra.mxu0 0.0
    %1024 = vmatprep.subr.mxu0 0.0
    %1025 = vmatpush1.msra.mxu0 0.0
    %1026 = vmatprep.subr.mxu0 0.0
    %1027 = vmatpush1.msra.mxu0 0.0
    %1028 = vmatprep.subr.mxu0 0.0
    %1029 = vmatpush1.msra.mxu0 0.0
    %1030 = vmatprep.subr.mxu0 0.0
    %1031 = vmatpush1.msra.mxu0 0.0
    %1032 = vmatprep.subr.mxu0 0.0
    %1033 = vmatpush1.msra.mxu0 0.0
    %1034 = vmatprep.subr.mxu0 0.0
    %1035 = vmatpush1.msra.mxu0 0.0
    %1036 = vmatprep.subr.mxu0 0.0
    %1037 = vmatpush1.msra.mxu0 0.0
    %1038 = vmatprep.mubr.f32.mxu0 0.0
    %1039 = vmatmul.mubr.f32.gmra.mrb[0].mxu0 %v969
    %v1040 = vpop.f32.mrb[0].mxu0
    %v1041 = vadd.f32 0.0, %v1040
    %v1042 = vpop.f32.mrb[0].mxu0
    %1043 = vmatprep.mubr.f32.mxu0 0.0
    %1044 = vmatmul.mubr.f32.gmra.mrb[0].mxu0 %v972
    %v1045 = vpop.f32.mrb[0].mxu0
    %v1046 = vadd.f32 0.0, %v1045
    %v1047 = vpop.f32.mrb[0].mxu0
    %1048 = vdwg.mxu0
    %1049 = vrot.lane.b32.xlu0 %v331, 64
    %v1050 = vpop.permute.xlu0 %1049
    %1051 = vrot.lane.b32.xlu0 %v333, 64
    %v1052 = vpop.permute.xlu0 %1051
    %v1056 = vsel %vm699, %v785, 0
    %v1059 = vsel %vm699, %v787, 0
    %1061 = vmatprep.subr.mxu0 0.0
    %1062 = vmatpush1.msra.mxu0 %v1050
    %1063 = vmatprep.subr.mxu0 0.0
    %1064 = vmatpush1.msra.mxu0 %v1052
    %1065 = vmatprep.subr.mxu0 0.0
    %1066 = vmatpush1.msra.mxu0 0.0
    %1067 = vmatprep.subr.mxu0 0.0
    %1068 = vmatpush1.msra.mxu0 0.0
    %1069 = vmatprep.subr.mxu0 0.0
    %1070 = vmatpush1.msra.mxu0 0.0
    %1071 = vmatprep.subr.mxu0 0.0
    %1072 = vmatpush1.msra.mxu0 0.0
    %1073 = vmatprep.subr.mxu0 0.0
    %1074 = vmatpush1.msra.mxu0 0.0
    %1075 = vmatprep.subr.mxu0 0.0
    %1076 = vmatpush1.msra.mxu0 0.0
    %1077 = vmatprep.subr.mxu0 0.0
    %1078 = vmatpush1.msra.mxu0 0.0
    %1079 = vmatprep.subr.mxu0 0.0
    %1080 = vmatpush1.msra.mxu0 0.0
    %1081 = vmatprep.subr.mxu0 0.0
    %1082 = vmatpush1.msra.mxu0 0.0
    %1083 = vmatprep.subr.mxu0 0.0
    %1084 = vmatpush1.msra.mxu0 0.0
    %1085 = vmatprep.subr.mxu0 0.0
    %1086 = vmatpush1.msra.mxu0 0.0
    %1087 = vmatprep.subr.mxu0 0.0
    %1088 = vmatpush1.msra.mxu0 0.0
    %1089 = vmatprep.subr.mxu0 0.0
    %1090 = vmatpush1.msra.mxu0 0.0
    %1091 = vmatprep.subr.mxu0 0.0
    %1092 = vmatpush1.msra.mxu0 0.0
    %1093 = vmatprep.subr.mxu0 0.0
    %1094 = vmatpush1.msra.mxu0 0.0
    %1095 = vmatprep.subr.mxu0 0.0
    %1096 = vmatpush1.msra.mxu0 0.0
    %1097 = vmatprep.subr.mxu0 0.0
    %1098 = vmatpush1.msra.mxu0 0.0
    %1099 = vmatprep.subr.mxu0 0.0
    %1100 = vmatpush1.msra.mxu0 0.0
    %1101 = vmatprep.subr.mxu0 0.0
    %1102 = vmatpush1.msra.mxu0 0.0
    %1103 = vmatprep.subr.mxu0 0.0
    %1104 = vmatpush1.msra.mxu0 0.0
    %1105 = vmatprep.subr.mxu0 0.0
    %1106 = vmatpush1.msra.mxu0 0.0
    %1107 = vmatprep.subr.mxu0 0.0
    %1108 = vmatpush1.msra.mxu0 0.0
    %1109 = vmatprep.subr.mxu0 0.0
    %1110 = vmatpush1.msra.mxu0 0.0
    %1111 = vmatprep.subr.mxu0 0.0
    %1112 = vmatpush1.msra.mxu0 0.0
    %1113 = vmatprep.subr.mxu0 0.0
    %1114 = vmatpush1.msra.mxu0 0.0
    %1115 = vmatprep.subr.mxu0 0.0
    %1116 = vmatpush1.msra.mxu0 0.0
    %1117 = vmatprep.subr.mxu0 0.0
    %1118 = vmatpush1.msra.mxu0 0.0
    %1119 = vmatprep.subr.mxu0 0.0
    %1120 = vmatpush1.msra.mxu0 0.0
    %1121 = vmatprep.subr.mxu0 0.0
    %1122 = vmatpush1.msra.mxu0 0.0
    %1123 = vmatprep.subr.mxu0 0.0
    %1124 = vmatpush1.msra.mxu0 0.0
    %1125 = vmatprep.mubr.f32.mxu0 0.0
    %1126 = vmatmul.mubr.f32.gmra.mrb[0].mxu0 %v1056
    %v1127 = vpop.f32.mrb[0].mxu0
    %v1128 = vadd.f32 0.0, %v1127
    %v1129 = vpop.f32.mrb[0].mxu0
    %1130 = vmatprep.mubr.f32.mxu0 0.0
    %1131 = vmatmul.mubr.f32.gmra.mrb[0].mxu0 %v1059
    %v1132 = vpop.f32.mrb[0].mxu0
    %v1133 = vadd.f32 0.0, %v1132
    %v1134 = vpop.f32.mrb[0].mxu0
    %1135 = vdwg.mxu0
    %v1136 = vld [vmem:[%s8] sm:$0xff]
    %v1137 = vld [vmem:[%s8 + $0x8] sm:$0xff]
    %v1138 = vld [vmem:[%s8 + $0x10] sm:$0xff]
    %v1139 = vld [vmem:[%s8 + $0x18] sm:$0xff]
    %v1141 = vsel %vm338, %v867, 0
    %v1144 = vsel %vm338, %v872, 0
    %1146 = vmatprep.subr.mxu0 0.0
    %1147 = vmatpush1.msra.mxu0 %v1136
    %1148 = vmatprep.subr.mxu0 0.0
    %1149 = vmatpush1.msra.mxu0 0.0
    %1150 = vmatprep.subr.mxu0 0.0
    %1151 = vmatpush1.msra.mxu0 0.0
    %1152 = vmatprep.subr.mxu0 0.0
    %1153 = vmatpush1.msra.mxu0 0.0
    %1154 = vmatprep.subr.mxu0 0.0
    %1155 = vmatpush1.msra.mxu0 0.0
    %1156 = vmatprep.subr.mxu0 0.0
    %1157 = vmatpush1.msra.mxu0 0.0
    %1158 = vmatprep.subr.mxu0 0.0
    %1159 = vmatpush1.msra.mxu0 0.0
    %1160 = vmatprep.subr.mxu0 0.0
    %1161 = vmatpush1.msra.mxu0 0.0
    %1162 = vmatprep.subr.mxu0 0.0
    %1163 = vmatpush1.msra.mxu0 0.0
    %1164 = vmatprep.subr.mxu0 0.0
    %1165 = vmatpush1.msra.mxu0 0.0
    %1166 = vmatprep.subr.mxu0 0.0
    %1167 = vmatpush1.msra.mxu0 0.0
    %1168 = vmatprep.subr.mxu0 0.0
    %1169 = vmatpush1.msra.mxu0 0.0
    %1170 = vmatprep.subr.mxu0 0.0
    %1171 = vmatpush1.msra.mxu0 0.0
    %1172 = vmatprep.subr.mxu0 0.0
    %1173 = vmatpush1.msra.mxu0 0.0
    %1174 = vmatprep.subr.mxu0 0.0
    %1175 = vmatpush1.msra.mxu0 0.0
    %1176 = vmatprep.subr.mxu0 0.0
    %1177 = vmatpush1.msra.mxu0 0.0
    %1178 = vmatprep.subr.mxu0 0.0
    %1179 = vmatpush1.msra.mxu0 0.0
    %1180 = vmatprep.subr.mxu0 0.0
    %1181 = vmatpush1.msra.mxu0 0.0
    %1182 = vmatprep.subr.mxu0 0.0
    %1183 = vmatpush1.msra.mxu0 0.0
    %1184 = vmatprep.subr.mxu0 0.0
    %1185 = vmatpush1.msra.mxu0 0.0
    %1186 = vmatprep.subr.mxu0 0.0
    %1187 = vmatpush1.msra.mxu0 0.0
    %1188 = vmatprep.subr.mxu0 0.0
    %1189 = vmatpush1.msra.mxu0 0.0
    %1190 = vmatprep.subr.mxu0 0.0
    %1191 = vmatpush1.msra.mxu0 0.0
    %1192 = vmatprep.subr.mxu0 0.0
    %1193 = vmatpush1.msra.mxu0 0.0
    %1194 = vmatprep.subr.mxu0 0.0
    %1195 = vmatpush1.msra.mxu0 0.0
    %1196 = vmatprep.subr.mxu0 0.0
    %1197 = vmatpush1.msra.mxu0 0.0
    %1198 = vmatprep.subr.mxu0 0.0
    %1199 = vmatpush1.msra.mxu0 0.0
    %1200 = vmatprep.subr.mxu0 0.0
    %1201 = vmatpush1.msra.mxu0 0.0
    %1202 = vmatprep.subr.mxu0 0.0
    %1203 = vmatpush1.msra.mxu0 0.0
    %1204 = vmatprep.subr.mxu0 0.0
    %1205 = vmatpush1.msra.mxu0 0.0
    %1206 = vmatprep.subr.mxu0 0.0
    %1207 = vmatpush1.msra.mxu0 0.0
    %1208 = vmatprep.subr.mxu0 0.0
    %1209 = vmatpush1.msra.mxu0 0.0
    %1210 = vmatprep.mubr.f32.mxu0 0.0
    %1211 = vmatmul.mubr.f32.gmra.mrb[0].mxu0 %v1141
    %v1212 = vpop.f32.mrb[0].mxu0
    %v1213 = vadd.f32 0.0, %v1212
    %v1214 = vpop.f32.mrb[0].mxu0
    %1215 = vmatprep.mubr.f32.mxu0 0.0
    %1216 = vmatmul.mubr.f32.gmra.mrb[0].mxu0 %v1144
    %v1217 = vpop.f32.mrb[0].mxu0
    %v1218 = vadd.f32 0.0, %v1217
    %v1219 = vpop.f32.mrb[0].mxu0
    %1220 = vdwg.mxu0
    %v1222 = vsel %vm338, %v954, 0
    %v1225 = vsel %vm338, %v959, 0
    %1227 = vmatprep.subr.mxu0 0.0
    %1228 = vmatpush1.msra.mxu0 %v1137
    %1229 = vmatprep.subr.mxu0 0.0
    %1230 = vmatpush1.msra.mxu0 0.0
    %1231 = vmatprep.subr.mxu0 0.0
    %1232 = vmatpush1.msra.mxu0 0.0
    %1233 = vmatprep.subr.mxu0 0.0
    %1234 = vmatpush1.msra.mxu0 0.0
    %1235 = vmatprep.subr.mxu0 0.0
    %1236 = vmatpush1.msra.mxu0 0.0
    %1237 = vmatprep.subr.mxu0 0.0
    %1238 = vmatpush1.msra.mxu0 0.0
    %1239 = vmatprep.subr.mxu0 0.0
    %1240 = vmatpush1.msra.mxu0 0.0
    %1241 = vmatprep.subr.mxu0 0.0
    %1242 = vmatpush1.msra.mxu0 0.0
    %1243 = vmatprep.subr.mxu0 0.0
    %1244 = vmatpush1.msra.mxu0 0.0
    %1245 = vmatprep.subr.mxu0 0.0
    %1246 = vmatpush1.msra.mxu0 0.0
    %1247 = vmatprep.subr.mxu0 0.0
    %1248 = vmatpush1.msra.mxu0 0.0
    %1249 = vmatprep.subr.mxu0 0.0
    %1250 = vmatpush1.msra.mxu0 0.0
    %1251 = vmatprep.subr.mxu0 0.0
    %1252 = vmatpush1.msra.mxu0 0.0
    %1253 = vmatprep.subr.mxu0 0.0
    %1254 = vmatpush1.msra.mxu0 0.0
    %1255 = vmatprep.subr.mxu0 0.0
    %1256 = vmatpush1.msra.mxu0 0.0
    %1257 = vmatprep.subr.mxu0 0.0
    %1258 = vmatpush1.msra.mxu0 0.0
    %1259 = vmatprep.subr.mxu0 0.0
    %1260 = vmatpush1.msra.mxu0 0.0
    %1261 = vmatprep.subr.mxu0 0.0
    %1262 = vmatpush1.msra.mxu0 0.0
    %1263 = vmatprep.subr.mxu0 0.0
    %1264 = vmatpush1.msra.mxu0 0.0
    %1265 = vmatprep.subr.mxu0 0.0
    %1266 = vmatpush1.msra.mxu0 0.0
    %1267 = vmatprep.subr.mxu0 0.0
    %1268 = vmatpush1.msra.mxu0 0.0
    %1269 = vmatprep.subr.mxu0 0.0
    %1270 = vmatpush1.msra.mxu0 0.0
    %1271 = vmatprep.subr.mxu0 0.0
    %1272 = vmatpush1.msra.mxu0 0.0
    %1273 = vmatprep.subr.mxu0 0.0
    %1274 = vmatpush1.msra.mxu0 0.0
    %1275 = vmatprep.subr.mxu0 0.0
    %1276 = vmatpush1.msra.mxu0 0.0
    %1277 = vmatprep.subr.mxu0 0.0
    %1278 = vmatpush1.msra.mxu0 0.0
    %1279 = vmatprep.subr.mxu0 0.0
    %1280 = vmatpush1.msra.mxu0 0.0
    %1281 = vmatprep.subr.mxu0 0.0
    %1282 = vmatpush1.msra.mxu0 0.0
    %1283 = vmatprep.subr.mxu0 0.0
    %1284 = vmatpush1.msra.mxu0 0.0
    %1285 = vmatprep.subr.mxu0 0.0
    %1286 = vmatpush1.msra.mxu0 0.0
    %1287 = vmatprep.subr.mxu0 0.0
    %1288 = vmatpush1.msra.mxu0 0.0
    %1289 = vmatprep.subr.mxu0 0.0
    %1290 = vmatpush1.msra.mxu0 0.0
    %1291 = vmatprep.mubr.f32.mxu0 0.0
    %1292 = vmatmul.mubr.f32.gmra.mrb[0].mxu0 %v1222
    %v1293 = vpop.f32.mrb[0].mxu0
    %v1294 = vadd.f32 0.0, %v1293
    %v1295 = vpop.f32.mrb[0].mxu0
    %1296 = vmatprep.mubr.f32.mxu0 0.0
    %1297 = vmatmul.mubr.f32.gmra.mrb[0].mxu0 %v1225
    %v1298 = vpop.f32.mrb[0].mxu0
    %v1299 = vadd.f32 0.0, %v1298
    %v1300 = vpop.f32.mrb[0].mxu0
    %1301 = vdwg.mxu0
    %v1303 = vsel %vm338, %v1041, 0
    %v1306 = vsel %vm338, %v1046, 0
    %1308 = vmatprep.subr.mxu0 0.0
    %1309 = vmatpush1.msra.mxu0 %v1138
    %1310 = vmatprep.subr.mxu0 0.0
    %1311 = vmatpush1.msra.mxu0 0.0
    %1312 = vmatprep.subr.mxu0 0.0
    %1313 = vmatpush1.msra.mxu0 0.0
    %1314 = vmatprep.subr.mxu0 0.0
    %1315 = vmatpush1.msra.mxu0 0.0
    %1316 = vmatprep.subr.mxu0 0.0
    %1317 = vmatpush1.msra.mxu0 0.0
    %1318 = vmatprep.subr.mxu0 0.0
    %1319 = vmatpush1.msra.mxu0 0.0
    %1320 = vmatprep.subr.mxu0 0.0
    %1321 = vmatpush1.msra.mxu0 0.0
    %1322 = vmatprep.subr.mxu0 0.0
    %1323 = vmatpush1.msra.mxu0 0.0
    %1324 = vmatprep.subr.mxu0 0.0
    %1325 = vmatpush1.msra.mxu0 0.0
    %1326 = vmatprep.subr.mxu0 0.0
    %1327 = vmatpush1.msra.mxu0 0.0
    %1328 = vmatprep.subr.mxu0 0.0
    %1329 = vmatpush1.msra.mxu0 0.0
    %1330 = vmatprep.subr.mxu0 0.0
    %1331 = vmatpush1.msra.mxu0 0.0
    %1332 = vmatprep.subr.mxu0 0.0
    %1333 = vmatpush1.msra.mxu0 0.0
    %1334 = vmatprep.subr.mxu0 0.0
    %1335 = vmatpush1.msra.mxu0 0.0
    %1336 = vmatprep.subr.mxu0 0.0
    %1337 = vmatpush1.msra.mxu0 0.0
    %1338 = vmatprep.subr.mxu0 0.0
    %1339 = vmatpush1.msra.mxu0 0.0
    %1340 = vmatprep.subr.mxu0 0.0
    %1341 = vmatpush1.msra.mxu0 0.0
    %1342 = vmatprep.subr.mxu0 0.0
    %1343 = vmatpush1.msra.mxu0 0.0
    %1344 = vmatprep.subr.mxu0 0.0
    %1345 = vmatpush1.msra.mxu0 0.0
    %1346 = vmatprep.subr.mxu0 0.0
    %1347 = vmatpush1.msra.mxu0 0.0
    %1348 = vmatprep.subr.mxu0 0.0
    %1349 = vmatpush1.msra.mxu0 0.0
    %1350 = vmatprep.subr.mxu0 0.0
    %1351 = vmatpush1.msra.mxu0 0.0
    %1352 = vmatprep.subr.mxu0 0.0
    %1353 = vmatpush1.msra.mxu0 0.0
    %1354 = vmatprep.subr.mxu0 0.0
    %1355 = vmatpush1.msra.mxu0 0.0
    %1356 = vmatprep.subr.mxu0 0.0
    %1357 = vmatpush1.msra.mxu0 0.0
    %1358 = vmatprep.subr.mxu0 0.0
    %1359 = vmatpush1.msra.mxu0 0.0
    %1360 = vmatprep.subr.mxu0 0.0
    %1361 = vmatpush1.msra.mxu0 0.0
    %1362 = vmatprep.subr.mxu0 0.0
    %1363 = vmatpush1.msra.mxu0 0.0
    %1364 = vmatprep.subr.mxu0 0.0
    %1365 = vmatpush1.msra.mxu0 0.0
    %1366 = vmatprep.subr.mxu0 0.0
    %1367 = vmatpush1.msra.mxu0 0.0
    %1368 = vmatprep.subr.mxu0 0.0
    %1369 = vmatpush1.msra.mxu0 0.0
    %1370 = vmatprep.subr.mxu0 0.0
    %1371 = vmatpush1.msra.mxu0 0.0
    %1372 = vmatprep.mubr.f32.mxu0 0.0
    %1373 = vmatmul.mubr.f32.gmra.mrb[0].mxu0 %v1303
    %v1374 = vpop.f32.mrb[0].mxu0
    %v1375 = vadd.f32 0.0, %v1374
    %v1376 = vpop.f32.mrb[0].mxu0
    %1377 = vmatprep.mubr.f32.mxu0 0.0
    %1378 = vmatmul.mubr.f32.gmra.mrb[0].mxu0 %v1306
    %v1379 = vpop.f32.mrb[0].mxu0
    %v1380 = vadd.f32 0.0, %v1379
    %v1381 = vpop.f32.mrb[0].mxu0
    %1382 = vdwg.mxu0
    %v1384 = vsel %vm338, %v1128, 0
    %v1387 = vsel %vm338, %v1133, 0
    %1389 = vmatprep.subr.mxu0 0.0
    %1390 = vmatpush1.msra.mxu0 %v1139
    %1391 = vmatprep.subr.mxu0 0.0
    %1392 = vmatpush1.msra.mxu0 0.0
    %1393 = vmatprep.subr.mxu0 0.0
    %1394 = vmatpush1.msra.mxu0 0.0
    %1395 = vmatprep.subr.mxu0 0.0
    %1396 = vmatpush1.msra.mxu0 0.0
    %1397 = vmatprep.subr.mxu0 0.0
    %1398 = vmatpush1.msra.mxu0 0.0
    %1399 = vmatprep.subr.mxu0 0.0
    %1400 = vmatpush1.msra.mxu0 0.0
    %1401 = vmatprep.subr.mxu0 0.0
    %1402 = vmatpush1.msra.mxu0 0.0
    %1403 = vmatprep.subr.mxu0 0.0
    %1404 = vmatpush1.msra.mxu0 0.0
    %1405 = vmatprep.subr.mxu0 0.0
    %1406 = vmatpush1.msra.mxu0 0.0
    %1407 = vmatprep.subr.mxu0 0.0
    %1408 = vmatpush1.msra.mxu0 0.0
    %1409 = vmatprep.subr.mxu0 0.0
    %1410 = vmatpush1.msra.mxu0 0.0
    %1411 = vmatprep.subr.mxu0 0.0
    %1412 = vmatpush1.msra.mxu0 0.0
    %1413 = vmatprep.subr.mxu0 0.0
    %1414 = vmatpush1.msra.mxu0 0.0
    %1415 = vmatprep.subr.mxu0 0.0
    %1416 = vmatpush1.msra.mxu0 0.0
    %1417 = vmatprep.subr.mxu0 0.0
    %1418 = vmatpush1.msra.mxu0 0.0
    %1419 = vmatprep.subr.mxu0 0.0
    %1420 = vmatpush1.msra.mxu0 0.0
    %1421 = vmatprep.subr.mxu0 0.0
    %1422 = vmatpush1.msra.mxu0 0.0
    %1423 = vmatprep.subr.mxu0 0.0
    %1424 = vmatpush1.msra.mxu0 0.0
    %1425 = vmatprep.subr.mxu0 0.0
    %1426 = vmatpush1.msra.mxu0 0.0
    %1427 = vmatprep.subr.mxu0 0.0
    %1428 = vmatpush1.msra.mxu0 0.0
    %1429 = vmatprep.subr.mxu0 0.0
    %1430 = vmatpush1.msra.mxu0 0.0
    %1431 = vmatprep.subr.mxu0 0.0
    %1432 = vmatpush1.msra.mxu0 0.0
    %1433 = vmatprep.subr.mxu0 0.0
    %1434 = vmatpush1.msra.mxu0 0.0
    %1435 = vmatprep.subr.mxu0 0.0
    %1436 = vmatpush1.msra.mxu0 0.0
    %1437 = vmatprep.subr.mxu0 0.0
    %1438 = vmatpush1.msra.mxu0 0.0
    %1439 = vmatprep.subr.mxu0 0.0
    %1440 = vmatpush1.msra.mxu0 0.0
    %1441 = vmatprep.subr.mxu0 0.0
    %1442 = vmatpush1.msra.mxu0 0.0
    %1443 = vmatprep.subr.mxu0 0.0
    %1444 = vmatpush1.msra.mxu0 0.0
    %1445 = vmatprep.subr.mxu0 0.0
    %1446 = vmatpush1.msra.mxu0 0.0
    %1447 = vmatprep.subr.mxu0 0.0
    %1448 = vmatpush1.msra.mxu0 0.0
    %1449 = vmatprep.subr.mxu0 0.0
    %1450 = vmatpush1.msra.mxu0 0.0
    %1451 = vmatprep.subr.mxu0 0.0
    %1452 = vmatpush1.msra.mxu0 0.0
    %1453 = vmatprep.mubr.f32.mxu0 0.0
    %1454 = vmatmul.mubr.f32.gmra.mrb[0].mxu0 %v1384
    %v1455 = vpop.f32.mrb[0].mxu0
    %v1456 = vadd.f32 0.0, %v1455
    %v1457 = vpop.f32.mrb[0].mxu0
    %1458 = vmatprep.mubr.f32.mxu0 0.0
    %1459 = vmatmul.mubr.f32.gmra.mrb[0].mxu0 %v1387
    %v1460 = vpop.f32.mrb[0].mxu0
    %v1461 = vadd.f32 0.0, %v1460
    %v1462 = vpop.f32.mrb[0].mxu0
    %1463 = vdwg.mxu0
    %v1464 = vsel %vm182, %v1213, 0.0
    %v1465 = vsel %vm182, %v1294, 0.0
    %v1466 = vadd.f32 %v1464, %v1465
    %v1467 = vsel %vm182, %v1375, 0.0
    %v1468 = vadd.f32 %v1466, %v1467
    %v1469 = vsel %vm182, %v1456, 0.0
    %v1470 = vadd.f32 %v1468, %v1469
    %v1471 = vsel %vm182, %v1218, 0.0
    %v1472 = vsel %vm182, %v1299, 0.0
    %v1473 = vadd.f32 %v1471, %v1472
    %v1474 = vsel %vm182, %v1380, 0.0
    %v1475 = vadd.f32 %v1473, %v1474
    %v1476 = vsel %vm182, %v1461, 0.0
    %v1477 = vadd.f32 %v1475, %v1476
    %v1478 = vld [vmem:[%s9] sm:$0x1]
    %v1480 = vlaneseq
    %v1481 = vshrl.u32 %v1480, 7
    %v1482 = vsub.s32 0, %v1481
    %v1483 = vrot.slane %v1478, %v1482
    %v1485 = vadd.f32 %v1470, %v1483
    %v1486 = vadd.f32 %v1477, %v1483
    %v1487 = vadd.f32 %v1485, %v224
    %v1488 = vadd.f32 %v1486, %v225
    %v1489 = vld [vmem:[%s10] sm:$0x1]
    %v1490 = vld [vmem:[%s11] sm:$0x1]
    %v1491 = vsel %vm182, %v1487, 0.0
    %1492 = vadd.xlane.f32.xlu0 %v1491
    %v1493 = vpop.xlane.xlu0 %1492
    %v1494 = vsel %vm182, %v1488, 0.0
    %1495 = vadd.xlane.f32.xlu0 %v1494
    %v1496 = vpop.xlane.xlu0 %1495
    %v1497 = vmul.f32 %v1493, %v189
    %v1498 = vmul.f32 %v1496, %v189
    %v1499 = vsub.f32 %v1487, %v1497
    %v1500 = vsub.f32 %v1488, %v1498
    %v1501 = vmul.f32 %v1499, %v1499
    %v1502 = vmul.f32 %v1500, %v1500
    %v1503 = vsel %vm182, %v1501, 0.0
    %1504 = vadd.xlane.f32.xlu0 %v1503
    %v1505 = vpop.xlane.xlu0 %1504
    %v1506 = vsel %vm182, %v1502, 0.0
    %1507 = vadd.xlane.f32.xlu0 %v1506
    %v1508 = vpop.xlane.xlu0 %1507
    %v1509 = vmul.f32 %v1505, %v189
    %v1510 = vmul.f32 %v1508, %v189
    %v1511 = vadd.f32 %v1509, 1e-12
    %v1512 = vadd.f32 %v1510, 1e-12
    %v1513 = vrsqrt.pop %v1511
    %v1514 = vrsqrt.pop %v1512
    %v1515 = vmul.f32 %v1499, %v1513
    %v1516 = vmul.f32 %v1500, %v1514
    %v1518 = vlaneseq
    %v1519 = vshrl.u32 %v1518, 7
    %v1520 = vsub.s32 0, %v1519
    %v1521 = vrot.slane %v1489, %v1520
    %v1523 = vmul.f32 %v1515, %v1521
    %v1524 = vmul.f32 %v1516, %v1521
    %v1526 = vlaneseq
    %v1527 = vshrl.u32 %v1526, 7
    %v1528 = vsub.s32 0, %v1527
    %v1529 = vrot.slane %v1490, %v1528
    %v1531 = vadd.f32 %v1523, %v1529
    %v1532 = vadd.f32 %v1524, %v1529
    %v1533 = vld [vmem:[%s12] sm:$0xff]
    %v1534 = vld [vmem:[%s12 + $0x8] sm:$0xff]
    %v1535 = vld [vmem:[%s12 + $0x10] sm:$0xff]
    %v1536 = vld [vmem:[%s12 + $0x18] sm:$0xff]
    %v1537 = vld [vmem:[%s13] sm:$0x1]
    %v1539 = vlaneseq
    %v1540 = vshrl.u32 %v1539, 7
    %v1541 = vsub.s32 0, %v1540
    %v1542 = vrot.slane %v1537, %v1541
    %v1545 = vsel %vm182, %v1531, 0
    %v1548 = vsel %vm182, %v1532, 0
    %1550 = vmatprep.subr.mxu0 0.0
    %1551 = vmatpush1.msra.mxu0 %v1533
    %1552 = vmatprep.subr.mxu0 0.0
    %1553 = vmatpush1.msra.mxu0 %v1534
    %1554 = vmatprep.subr.mxu0 0.0
    %1555 = vmatpush1.msra.mxu0 %v1535
    %1556 = vmatprep.subr.mxu0 0.0
    %1557 = vmatpush1.msra.mxu0 %v1536
    %1558 = vmatprep.subr.mxu0 0.0
    %1559 = vmatpush1.msra.mxu0 0.0
    %1560 = vmatprep.subr.mxu0 0.0
    %1561 = vmatpush1.msra.mxu0 0.0
    %1562 = vmatprep.subr.mxu0 0.0
    %1563 = vmatpush1.msra.mxu0 0.0
    %1564 = vmatprep.subr.mxu0 0.0
    %1565 = vmatpush1.msra.mxu0 0.0
    %1566 = vmatprep.subr.mxu0 0.0
    %1567 = vmatpush1.msra.mxu0 0.0
    %1568 = vmatprep.subr.mxu0 0.0
    %1569 = vmatpush1.msra.mxu0 0.0
    %1570 = vmatprep.subr.mxu0 0.0
    %1571 = vmatpush1.msra.mxu0 0.0
    %1572 = vmatprep.subr.mxu0 0.0
    %1573 = vmatpush1.msra.mxu0 0.0
    %1574 = vmatprep.subr.mxu0 0.0
    %1575 = vmatpush1.msra.mxu0 0.0
    %1576 = vmatprep.subr.mxu0 0.0
    %1577 = vmatpush1.msra.mxu0 0.0
    %1578 = vmatprep.subr.mxu0 0.0
    %1579 = vmatpush1.msra.mxu0 0.0
    %1580 = vmatprep.subr.mxu0 0.0
    %1581 = vmatpush1.msra.mxu0 0.0
    %1582 = vmatprep.subr.mxu0 0.0
    %1583 = vmatpush1.msra.mxu0 0.0
    %1584 = vmatprep.subr.mxu0 0.0
    %1585 = vmatpush1.msra.mxu0 0.0
    %1586 = vmatprep.subr.mxu0 0.0
    %1587 = vmatpush1.msra.mxu0 0.0
    %1588 = vmatprep.subr.mxu0 0.0
    %1589 = vmatpush1.msra.mxu0 0.0
    %1590 = vmatprep.subr.mxu0 0.0
    %1591 = vmatpush1.msra.mxu0 0.0
    %1592 = vmatprep.subr.mxu0 0.0
    %1593 = vmatpush1.msra.mxu0 0.0
    %1594 = vmatprep.subr.mxu0 0.0
    %1595 = vmatpush1.msra.mxu0 0.0
    %1596 = vmatprep.subr.mxu0 0.0
    %1597 = vmatpush1.msra.mxu0 0.0
    %1598 = vmatprep.subr.mxu0 0.0
    %1599 = vmatpush1.msra.mxu0 0.0
    %1600 = vmatprep.subr.mxu0 0.0
    %1601 = vmatpush1.msra.mxu0 0.0
    %1602 = vmatprep.subr.mxu0 0.0
    %1603 = vmatpush1.msra.mxu0 0.0
    %1604 = vmatprep.subr.mxu0 0.0
    %1605 = vmatpush1.msra.mxu0 0.0
    %1606 = vmatprep.subr.mxu0 0.0
    %1607 = vmatpush1.msra.mxu0 0.0
    %1608 = vmatprep.subr.mxu0 0.0
    %1609 = vmatpush1.msra.mxu0 0.0
    %1610 = vmatprep.subr.mxu0 0.0
    %1611 = vmatpush1.msra.mxu0 0.0
    %1612 = vmatprep.subr.mxu0 0.0
    %1613 = vmatpush1.msra.mxu0 0.0
    %1614 = vmatprep.mubr.f32.mxu0 0.0
    %1615 = vmatmul.mubr.f32.gmra.mrb[0].mxu0 %v1545
    %v1616 = vpop.f32.mrb[0].mxu0
    %v1617 = vadd.f32 %v1542, %v1616
    %v1618 = vpop.f32.mrb[0].mxu0
    %1619 = vmatprep.mubr.f32.mxu0 0.0
    %1620 = vmatmul.mubr.f32.gmra.mrb[0].mxu0 %v1548
    %v1621 = vpop.f32.mrb[0].mxu0
    %v1622 = vadd.f32 %v1542, %v1621
    %v1623 = vpop.f32.mrb[0].mxu0
    %1624 = vdwg.mxu0
    %v1625 = vmul.f32 %v1617, 0.5
    %v1626 = vmul.f32 %v1622, 0.5
    %v1627 = vmul.f32 %v1617, 0.044715
    %v1628 = vmul.f32 %v1622, 0.044715
    %v1629 = vmul.f32 %v1627, %v1617
    %v1630 = vmul.f32 %v1628, %v1622
    %v1631 = vmul.f32 %v1629, %v1617
    %v1632 = vmul.f32 %v1630, %v1622
    %v1633 = vadd.f32 %v1617, %v1631
    %v1634 = vadd.f32 %v1622, %v1632
    %v1635 = vmul.f32 %v1633, 0.7978846
    %v1636 = vmul.f32 %v1634, 0.7978846
    %v1637 = vtanh.pop %v1635
    %v1638 = vtanh.pop %v1636
    %v1639 = vadd.f32 %v1637, 1.0
    %v1640 = vadd.f32 %v1638, 1.0
    %v1641 = vmul.f32 %v1625, %v1639
    %v1642 = vmul.f32 %v1626, %v1640
    %v1643 = vld [vmem:[%s14] sm:$0xff]
    %v1644 = vld [vmem:[%s14 + $0x8] sm:$0xff]
    %v1645 = vld [vmem:[%s14 + $0x10] sm:$0xff]
    %v1646 = vld [vmem:[%s14 + $0x18] sm:$0xff]
    %v1647 = vld [vmem:[%s14 + $0x20] sm:$0xff]
    %v1648 = vld [vmem:[%s14 + $0x28] sm:$0xff]
    %v1649 = vld [vmem:[%s14 + $0x30] sm:$0xff]
    %v1650 = vld [vmem:[%s14 + $0x38] sm:$0xff]
    %v1651 = vld [vmem:[%s14 + $0x40] sm:$0xff]
    %v1652 = vld [vmem:[%s14 + $0x48] sm:$0xff]
    %v1653 = vld [vmem:[%s14 + $0x50] sm:$0xff]
    %v1654 = vld [vmem:[%s14 + $0x58] sm:$0xff]
    %v1655 = vld [vmem:[%s14 + $0x60] sm:$0xff]
    %v1656 = vld [vmem:[%s14 + $0x68] sm:$0xff]
    %v1657 = vld [vmem:[%s14 + $0x70] sm:$0xff]
    %v1658 = vld [vmem:[%s14 + $0x78] sm:$0xff]
    %v1659 = vld [vmem:[%s15] sm:$0x1]
    %v1661 = vlaneseq
    %v1662 = vshrl.u32 %v1661, 7
    %v1663 = vsub.s32 0, %v1662
    %v1664 = vrot.slane %v1659, %v1663
    %1666 = vmatprep.subr.mxu0 0.0
    %1667 = vmatpush1.msra.mxu0 %v1643
    %1668 = vmatprep.subr.mxu0 0.0
    %1669 = vmatpush1.msra.mxu0 %v1644
    %1670 = vmatprep.subr.mxu0 0.0
    %1671 = vmatpush1.msra.mxu0 %v1645
    %1672 = vmatprep.subr.mxu0 0.0
    %1673 = vmatpush1.msra.mxu0 %v1646
    %1674 = vmatprep.subr.mxu0 0.0
    %1675 = vmatpush1.msra.mxu0 %v1647
    %1676 = vmatprep.subr.mxu0 0.0
    %1677 = vmatpush1.msra.mxu0 %v1648
    %1678 = vmatprep.subr.mxu0 0.0
    %1679 = vmatpush1.msra.mxu0 %v1649
    %1680 = vmatprep.subr.mxu0 0.0
    %1681 = vmatpush1.msra.mxu0 %v1650
    %1682 = vmatprep.subr.mxu0 0.0
    %1683 = vmatpush1.msra.mxu0 %v1651
    %1684 = vmatprep.subr.mxu0 0.0
    %1685 = vmatpush1.msra.mxu0 %v1652
    %1686 = vmatprep.subr.mxu0 0.0
    %1687 = vmatpush1.msra.mxu0 %v1653
    %1688 = vmatprep.subr.mxu0 0.0
    %1689 = vmatpush1.msra.mxu0 %v1654
    %1690 = vmatprep.subr.mxu0 0.0
    %1691 = vmatpush1.msra.mxu0 %v1655
    %1692 = vmatprep.subr.mxu0 0.0
    %1693 = vmatpush1.msra.mxu0 %v1656
    %1694 = vmatprep.subr.mxu0 0.0
    %1695 = vmatpush1.msra.mxu0 %v1657
    %1696 = vmatprep.subr.mxu0 0.0
    %1697 = vmatpush1.msra.mxu0 %v1658
    %1698 = vmatprep.subr.mxu0 0.0
    %1699 = vmatpush1.msra.mxu0 0.0
    %1700 = vmatprep.subr.mxu0 0.0
    %1701 = vmatpush1.msra.mxu0 0.0
    %1702 = vmatprep.subr.mxu0 0.0
    %1703 = vmatpush1.msra.mxu0 0.0
    %1704 = vmatprep.subr.mxu0 0.0
    %1705 = vmatpush1.msra.mxu0 0.0
    %1706 = vmatprep.subr.mxu0 0.0
    %1707 = vmatpush1.msra.mxu0 0.0
    %1708 = vmatprep.subr.mxu0 0.0
    %1709 = vmatpush1.msra.mxu0 0.0
    %1710 = vmatprep.subr.mxu0 0.0
    %1711 = vmatpush1.msra.mxu0 0.0
    %1712 = vmatprep.subr.mxu0 0.0
    %1713 = vmatpush1.msra.mxu0 0.0
    %1714 = vmatprep.subr.mxu0 0.0
    %1715 = vmatpush1.msra.mxu0 0.0
    %1716 = vmatprep.subr.mxu0 0.0
    %1717 = vmatpush1.msra.mxu0 0.0
    %1718 = vmatprep.subr.mxu0 0.0
    %1719 = vmatpush1.msra.mxu0 0.0
    %1720 = vmatprep.subr.mxu0 0.0
    %1721 = vmatpush1.msra.mxu0 0.0
    %1722 = vmatprep.subr.mxu0 0.0
    %1723 = vmatpush1.msra.mxu0 0.0
    %1724 = vmatprep.subr.mxu0 0.0
    %1725 = vmatpush1.msra.mxu0 0.0
    %1726 = vmatprep.subr.mxu0 0.0
    %1727 = vmatpush1.msra.mxu0 0.0
    %1728 = vmatprep.subr.mxu0 0.0
    %1729 = vmatpush1.msra.mxu0 0.0
    %1730 = vmatprep.mubr.f32.mxu0 0.0
    %1731 = vmatmul.mubr.f32.gmra.mrb[0].mxu0 %v1641
    %v1732 = vpop.f32.mrb[0].mxu0
    %v1733 = vadd.f32 %v1664, %v1732
    %v1734 = vpop.f32.mrb[0].mxu0
    %1735 = vmatprep.mubr.f32.mxu0 0.0
    %1736 = vmatmul.mubr.f32.gmra.mrb[0].mxu0 %v1642
    %v1737 = vpop.f32.mrb[0].mxu0
    %v1738 = vadd.f32 %v1664, %v1737
    %v1739 = vpop.f32.mrb[0].mxu0
    %1740 = vdwg.mxu0
    %v1741 = vadd.f32 %v1733, %v1531
    %v1742 = vadd.f32 %v1738, %v1532
    %v1743 = vld [vmem:[%s16] sm:$0x1]
    %v1744 = vld [vmem:[%s17] sm:$0x1]
    %v1745 = vsel %vm182, %v1741, 0.0
    %1746 = vadd.xlane.f32.xlu0 %v1745
    %v1747 = vpop.xlane.xlu0 %1746
    %v1748 = vsel %vm182, %v1742, 0.0
    %1749 = vadd.xlane.f32.xlu0 %v1748
    %v1750 = vpop.xlane.xlu0 %1749
    %v1751 = vmul.f32 %v1747, %v189
    %v1752 = vmul.f32 %v1750, %v189
    %v1753 = vsub.f32 %v1741, %v1751
    %v1754 = vsub.f32 %v1742, %v1752
    %v1755 = vmul.f32 %v1753, %v1753
    %v1756 = vmul.f32 %v1754, %v1754
    %v1757 = vsel %vm182, %v1755, 0.0
    %1758 = vadd.xlane.f32.xlu0 %v1757
    %v1759 = vpop.xlane.xlu0 %1758
    %v1760 = vsel %vm182, %v1756, 0.0
    %1761 = vadd.xlane.f32.xlu0 %v1760
    %v1762 = vpop.xlane.xlu0 %1761
    %v1763 = vmul.f32 %v1759, %v189
    %v1764 = vmul.f32 %v1762, %v189
    %v1765 = vadd.f32 %v1763, 1e-12
    %v1766 = vadd.f32 %v1764, 1e-12
    %v1767 = vrsqrt.pop %v1765
    %v1768 = vrsqrt.pop %v1766
    %v1769 = vmul.f32 %v1753, %v1767
    %v1770 = vmul.f32 %v1754, %v1768
    %v1772 = vlaneseq
    %v1773 = vshrl.u32 %v1772, 7
    %v1774 = vsub.s32 0, %v1773
    %v1775 = vrot.slane %v1743, %v1774
    %v1777 = vmul.f32 %v1769, %v1775
    %v1778 = vmul.f32 %v1770, %v1775
    %v1780 = vlaneseq
    %v1781 = vshrl.u32 %v1780, 7
    %v1782 = vsub.s32 0, %v1781
    %v1783 = vrot.slane %v1744, %v1782
    %v1785 = vadd.f32 %v1777, %v1783
    %v1786 = vadd.f32 %v1778, %v1783
    %s1787 = scalar_lea.vmem %s6, 32
    %v1788 = vld [vmem:[%s1787] sm:$0xff]
    %v1789 = vld [vmem:[%s1787 + $0x8] sm:$0xff]
    %v1790 = vld [vmem:[%s1787 + $0x10] sm:$0xff]
    %v1791 = vld [vmem:[%s1787 + $0x18] sm:$0xff]
    %s1792 = scalar_lea.vmem %s7, 1
    %v1793 = vld [vmem:[%s1792] sm:$0x1]
    %v1795 = vlaneseq
    %v1796 = vshrl.u32 %v1795, 7
    %v1797 = vsub.s32 0, %v1796
    %v1798 = vrot.slane %v1793, %v1797
    %v1801 = vsel %vm182, %v1785, 0
    %v1804 = vsel %vm182, %v1786, 0
    %1806 = vmatprep.subr.mxu0 0.0
    %1807 = vmatpush1.msra.mxu0 %v1788
    %1808 = vmatprep.subr.mxu0 0.0
    %1809 = vmatpush1.msra.mxu0 %v1789
    %1810 = vmatprep.subr.mxu0 0.0
    %1811 = vmatpush1.msra.mxu0 %v1790
    %1812 = vmatprep.subr.mxu0 0.0
    %1813 = vmatpush1.msra.mxu0 %v1791
    %1814 = vmatprep.subr.mxu0 0.0
    %1815 = vmatpush1.msra.mxu0 0.0
    %1816 = vmatprep.subr.mxu0 0.0
    %1817 = vmatpush1.msra.mxu0 0.0
    %1818 = vmatprep.subr.mxu0 0.0
    %1819 = vmatpush1.msra.mxu0 0.0
    %1820 = vmatprep.subr.mxu0 0.0
    %1821 = vmatpush1.msra.mxu0 0.0
    %1822 = vmatprep.subr.mxu0 0.0
    %1823 = vmatpush1.msra.mxu0 0.0
    %1824 = vmatprep.subr.mxu0 0.0
    %1825 = vmatpush1.msra.mxu0 0.0
    %1826 = vmatprep.subr.mxu0 0.0
    %1827 = vmatpush1.msra.mxu0 0.0
    %1828 = vmatprep.subr.mxu0 0.0
    %1829 = vmatpush1.msra.mxu0 0.0
    %1830 = vmatprep.subr.mxu0 0.0
    %1831 = vmatpush1.msra.mxu0 0.0
    %1832 = vmatprep.subr.mxu0 0.0
    %1833 = vmatpush1.msra.mxu0 0.0
    %1834 = vmatprep.subr.mxu0 0.0
    %1835 = vmatpush1.msra.mxu0 0.0
    %1836 = vmatprep.subr.mxu0 0.0
    %1837 = vmatpush1.msra.mxu0 0.0
    %1838 = vmatprep.subr.mxu0 0.0
    %1839 = vmatpush1.msra.mxu0 0.0
    %1840 = vmatprep.subr.mxu0 0.0
    %1841 = vmatpush1.msra.mxu0 0.0
    %1842 = vmatprep.subr.mxu0 0.0
    %1843 = vmatpush1.msra.mxu0 0.0
    %1844 = vmatprep.subr.mxu0 0.0
    %1845 = vmatpush1.msra.mxu0 0.0
    %1846 = vmatprep.subr.mxu0 0.0
    %1847 = vmatpush1.msra.mxu0 0.0
    %1848 = vmatprep.subr.mxu0 0.0
    %1849 = vmatpush1.msra.mxu0 0.0
    %1850 = vmatprep.subr.mxu0 0.0
    %1851 = vmatpush1.msra.mxu0 0.0
    %1852 = vmatprep.subr.mxu0 0.0
    %1853 = vmatpush1.msra.mxu0 0.0
    %1854 = vmatprep.subr.mxu0 0.0
    %1855 = vmatpush1.msra.mxu0 0.0
    %1856 = vmatprep.subr.mxu0 0.0
    %1857 = vmatpush1.msra.mxu0 0.0
    %1858 = vmatprep.subr.mxu0 0.0
    %1859 = vmatpush1.msra.mxu0 0.0
    %1860 = vmatprep.subr.mxu0 0.0
    %1861 = vmatpush1.msra.mxu0 0.0
    %1862 = vmatprep.subr.mxu0 0.0
    %1863 = vmatpush1.msra.mxu0 0.0
    %1864 = vmatprep.subr.mxu0 0.0
    %1865 = vmatpush1.msra.mxu0 0.0
    %1866 = vmatprep.subr.mxu0 0.0
    %1867 = vmatpush1.msra.mxu0 0.0
    %1868 = vmatprep.subr.mxu0 0.0
    %1869 = vmatpush1.msra.mxu0 0.0
    %1870 = vmatprep.mubr.f32.mxu0 0.0
    %1871 = vmatmul.mubr.f32.gmra.mrb[0].mxu0 %v1801
    %v1872 = vpop.f32.mrb[0].mxu0
    %v1873 = vadd.f32 %v1798, %v1872
    %v1874 = vpop.f32.mrb[0].mxu0
    %1875 = vmatprep.mubr.f32.mxu0 0.0
    %1876 = vmatmul.mubr.f32.gmra.mrb[0].mxu0 %v1804
    %v1877 = vpop.f32.mrb[0].mxu0
    %v1878 = vadd.f32 %v1798, %v1877
    %v1879 = vpop.f32.mrb[0].mxu0
    %1880 = vdwg.mxu0
    %1883 = vrot.lane.b32.xlu0 %v1873, 120
    %v1884 = vpop.permute.xlu0 %1883
    %1885 = vrot.lane.b32.xlu0 %v1878, 120
    %v1886 = vpop.permute.xlu0 %1885
    %1887 = vrot.lane.b32.xlu0 %v1873, 112
    %v1888 = vpop.permute.xlu0 %1887
    %1889 = vrot.lane.b32.xlu0 %v1878, 112
    %v1890 = vpop.permute.xlu0 %1889
    %1891 = vrot.lane.b32.xlu0 %v1873, 104
    %v1892 = vpop.permute.xlu0 %1891
    %1893 = vrot.lane.b32.xlu0 %v1878, 104
    %v1894 = vpop.permute.xlu0 %1893
    %1895 = vrot.lane.b32.xlu0 %v1873, 96
    %v1896 = vpop.permute.xlu0 %1895
    %1897 = vrot.lane.b32.xlu0 %v1878, 96
    %v1898 = vpop.permute.xlu0 %1897
    %v1899 = vsel %vm338, %v1873, 0
    %v1901 = vsel %vm338, %v1878, 0
    %v1903 = vsel %vm338, %v1896, 0
    %v1905 = vsel %vm338, %v1898, 0
    %1907 = vmatprep.subr.mxu0 0.0
    %1908 = vmatpush1.xpose.msra.mxu0 %v1903
    %1909 = vmatprep.subr.mxu0 0.0
    %1910 = vmatpush1.xpose.msra.mxu0 %v1905
    %1911 = vmatprep.subr.mxu0 0.0
    %1912 = vmatpush1.xpose.msra.mxu0 0.0
    %1913 = vmatprep.subr.mxu0 0.0
    %1914 = vmatpush1.xpose.msra.mxu0 0.0
    %1915 = vmatprep.subr.mxu0 0.0
    %1916 = vmatpush1.xpose.msra.mxu0 0.0
    %1917 = vmatprep.subr.mxu0 0.0
    %1918 = vmatpush1.xpose.msra.mxu0 0.0
    %1919 = vmatprep.subr.mxu0 0.0
    %1920 = vmatpush1.xpose.msra.mxu0 0.0
    %1921 = vmatprep.subr.mxu0 0.0
    %1922 = vmatpush1.xpose.msra.mxu0 0.0
    %1923 = vmatprep.subr.mxu0 0.0
    %1924 = vmatpush1.xpose.msra.mxu0 0.0
    %1925 = vmatprep.subr.mxu0 0.0
    %1926 = vmatpush1.xpose.msra.mxu0 0.0
    %1927 = vmatprep.subr.mxu0 0.0
    %1928 = vmatpush1.xpose.msra.mxu0 0.0
    %1929 = vmatprep.subr.mxu0 0.0
    %1930 = vmatpush1.xpose.msra.mxu0 0.0
    %1931 = vmatprep.subr.mxu0 0.0
    %1932 = vmatpush1.xpose.msra.mxu0 0.0
    %1933 = vmatprep.subr.mxu0 0.0
    %1934 = vmatpush1.xpose.msra.mxu0 0.0
    %1935 = vmatprep.subr.mxu0 0.0
    %1936 = vmatpush1.xpose.msra.mxu0 0.0
    %1937 = vmatprep.subr.mxu0 0.0
    %1938 = vmatpush1.xpose.msra.mxu0 0.0
    %1939 = vmatprep.subr.mxu0 0.0
    %1940 = vmatpush1.xpose.msra.mxu0 0.0
    %1941 = vmatprep.subr.mxu0 0.0
    %1942 = vmatpush1.xpose.msra.mxu0 0.0
    %1943 = vmatprep.subr.mxu0 0.0
    %1944 = vmatpush1.xpose.msra.mxu0 0.0
    %1945 = vmatprep.subr.mxu0 0.0
    %1946 = vmatpush1.xpose.msra.mxu0 0.0
    %1947 = vmatprep.subr.mxu0 0.0
    %1948 = vmatpush1.xpose.msra.mxu0 0.0
    %1949 = vmatprep.subr.mxu0 0.0
    %1950 = vmatpush1.xpose.msra.mxu0 0.0
    %1951 = vmatprep.subr.mxu0 0.0
    %1952 = vmatpush1.xpose.msra.mxu0 0.0
    %1953 = vmatprep.subr.mxu0 0.0
    %1954 = vmatpush1.xpose.msra.mxu0 0.0
    %1955 = vmatprep.subr.mxu0 0.0
    %1956 = vmatpush1.xpose.msra.mxu0 0.0
    %1957 = vmatprep.subr.mxu0 0.0
    %1958 = vmatpush1.xpose.msra.mxu0 0.0
    %1959 = vmatprep.subr.mxu0 0.0
    %1960 = vmatpush1.xpose.msra.mxu0 0.0
    %1961 = vmatprep.subr.mxu0 0.0
    %1962 = vmatpush1.xpose.msra.mxu0 0.0
    %1963 = vmatprep.subr.mxu0 0.0
    %1964 = vmatpush1.xpose.msra.mxu0 0.0
    %1965 = vmatprep.subr.mxu0 0.0
    %1966 = vmatpush1.xpose.msra.mxu0 0.0
    %1967 = vmatprep.subr.mxu0 0.0
    %1968 = vmatpush1.xpose.msra.mxu0 0.0
    %1969 = vmatprep.subr.mxu0 0.0
    %1970 = vmatpush1.xpose.msra.mxu0 0.0
    %1971 = vmatprep.mubr.f32.mxu0 0.0
    %1972 = vmatmul.mubr.f32.gmra.mrb[0].mxu0 %v1899
    %v1973 = vpop.f32.mrb[0].mxu0
    %v1974 = vadd.f32 0.0, %v1973
    %v1975 = vpop.f32.mrb[0].mxu0
    %1976 = vmatprep.mubr.f32.mxu0 0.0
    %1977 = vmatmul.mubr.f32.gmra.mrb[0].mxu0 %v1901
    %v1978 = vpop.f32.mrb[0].mxu0
    %v1979 = vadd.f32 0.0, %v1978
    %v1980 = vpop.f32.mrb[0].mxu0
    %1981 = vdwg.mxu0
    %1982 = vrot.lane.b32.xlu0 %v1884, 96
    %v1983 = vpop.permute.xlu0 %1982
    %1984 = vrot.lane.b32.xlu0 %v1886, 96
    %v1985 = vpop.permute.xlu0 %1984
    %v1986 = vsel %vm338, %v1884, 0
    %v1988 = vsel %vm338, %v1886, 0
    %v1990 = vsel %vm338, %v1983, 0
    %v1992 = vsel %vm338, %v1985, 0
    %1994 = vmatprep.subr.mxu0 0.0
    %1995 = vmatpush1.xpose.msra.mxu0 %v1990
    %1996 = vmatprep.subr.mxu0 0.0
    %1997 = vmatpush1.xpose.msra.mxu0 %v1992
    %1998 = vmatprep.subr.mxu0 0.0
    %1999 = vmatpush1.xpose.msra.mxu0 0.0
    %2000 = vmatprep.subr.mxu0 0.0
    %2001 = vmatpush1.xpose.msra.mxu0 0.0
    %2002 = vmatprep.subr.mxu0 0.0
    %2003 = vmatpush1.xpose.msra.mxu0 0.0
    %2004 = vmatprep.subr.mxu0 0.0
    %2005 = vmatpush1.xpose.msra.mxu0 0.0
    %2006 = vmatprep.subr.mxu0 0.0
    %2007 = vmatpush1.xpose.msra.mxu0 0.0
    %2008 = vmatprep.subr.mxu0 0.0
    %2009 = vmatpush1.xpose.msra.mxu0 0.0
    %2010 = vmatprep.subr.mxu0 0.0
    %2011 = vmatpush1.xpose.msra.mxu0 0.0
    %2012 = vmatprep.subr.mxu0 0.0
    %2013 = vmatpush1.xpose.msra.mxu0 0.0
    %2014 = vmatprep.subr.mxu0 0.0
    %2015 = vmatpush1.xpose.msra.mxu0 0.0
    %2016 = vmatprep.subr.mxu0 0.0
    %2017 = vmatpush1.xpose.msra.mxu0 0.0
    %2018 = vmatprep.subr.mxu0 0.0
    %2019 = vmatpush1.xpose.msra.mxu0 0.0
    %2020 = vmatprep.subr.mxu0 0.0
    %2021 = vmatpush1.xpose.msra.mxu0 0.0
    %2022 = vmatprep.subr.mxu0 0.0
    %2023 = vmatpush1.xpose.msra.mxu0 0.0
    %2024 = vmatprep.subr.mxu0 0.0
    %2025 = vmatpush1.xpose.msra.mxu0 0.0
    %2026 = vmatprep.subr.mxu0 0.0
    %2027 = vmatpush1.xpose.msra.mxu0 0.0
    %2028 = vmatprep.subr.mxu0 0.0
    %2029 = vmatpush1.xpose.msra.mxu0 0.0
    %2030 = vmatprep.subr.mxu0 0.0
    %2031 = vmatpush1.xpose.msra.mxu0 0.0
    %2032 = vmatprep.subr.mxu0 0.0
    %2033 = vmatpush1.xpose.msra.mxu0 0.0
    %2034 = vmatprep.subr.mxu0 0.0
    %2035 = vmatpush1.xpose.msra.mxu0 0.0
    %2036 = vmatprep.subr.mxu0 0.0
    %2037 = vmatpush1.xpose.msra.mxu0 0.0
    %2038 = vmatprep.subr.mxu0 0.0
    %2039 = vmatpush1.xpose.msra.mxu0 0.0
    %2040 = vmatprep.subr.mxu0 0.0
    %2041 = vmatpush1.xpose.msra.mxu0 0.0
    %2042 = vmatprep.subr.mxu0 0.0
    %2043 = vmatpush1.xpose.msra.mxu0 0.0
    %2044 = vmatprep.subr.mxu0 0.0
    %2045 = vmatpush1.xpose.msra.mxu0 0.0
    %2046 = vmatprep.subr.mxu0 0.0
    %2047 = vmatpush1.xpose.msra.mxu0 0.0
    %2048 = vmatprep.subr.mxu0 0.0
    %2049 = vmatpush1.xpose.msra.mxu0 0.0
    %2050 = vmatprep.subr.mxu0 0.0
    %2051 = vmatpush1.xpose.msra.mxu0 0.0
    %2052 = vmatprep.subr.mxu0 0.0
    %2053 = vmatpush1.xpose.msra.mxu0 0.0
    %2054 = vmatprep.subr.mxu0 0.0
    %2055 = vmatpush1.xpose.msra.mxu0 0.0
    %2056 = vmatprep.subr.mxu0 0.0
    %2057 = vmatpush1.xpose.msra.mxu0 0.0
    %2058 = vmatprep.mubr.f32.mxu0 0.0
    %2059 = vmatmul.mubr.f32.gmra.mrb[0].mxu0 %v1986
    %v2060 = vpop.f32.mrb[0].mxu0
    %v2061 = vadd.f32 0.0, %v2060
    %v2062 = vpop.f32.mrb[0].mxu0
    %2063 = vmatprep.mubr.f32.mxu0 0.0
    %2064 = vmatmul.mubr.f32.gmra.mrb[0].mxu0 %v1988
    %v2065 = vpop.f32.mrb[0].mxu0
    %v2066 = vadd.f32 0.0, %v2065
    %v2067 = vpop.f32.mrb[0].mxu0
    %2068 = vdwg.mxu0
    %2069 = vrot.lane.b32.xlu0 %v1888, 96
    %v2070 = vpop.permute.xlu0 %2069
    %2071 = vrot.lane.b32.xlu0 %v1890, 96
    %v2072 = vpop.permute.xlu0 %2071
    %v2073 = vsel %vm338, %v1888, 0
    %v2075 = vsel %vm338, %v1890, 0
    %v2077 = vsel %vm338, %v2070, 0
    %v2079 = vsel %vm338, %v2072, 0
    %2081 = vmatprep.subr.mxu0 0.0
    %2082 = vmatpush1.xpose.msra.mxu0 %v2077
    %2083 = vmatprep.subr.mxu0 0.0
    %2084 = vmatpush1.xpose.msra.mxu0 %v2079
    %2085 = vmatprep.subr.mxu0 0.0
    %2086 = vmatpush1.xpose.msra.mxu0 0.0
    %2087 = vmatprep.subr.mxu0 0.0
    %2088 = vmatpush1.xpose.msra.mxu0 0.0
    %2089 = vmatprep.subr.mxu0 0.0
    %2090 = vmatpush1.xpose.msra.mxu0 0.0
    %2091 = vmatprep.subr.mxu0 0.0
    %2092 = vmatpush1.xpose.msra.mxu0 0.0
    %2093 = vmatprep.subr.mxu0 0.0
    %2094 = vmatpush1.xpose.msra.mxu0 0.0
    %2095 = vmatprep.subr.mxu0 0.0
    %2096 = vmatpush1.xpose.msra.mxu0 0.0
    %2097 = vmatprep.subr.mxu0 0.0
    %2098 = vmatpush1.xpose.msra.mxu0 0.0
    %2099 = vmatprep.subr.mxu0 0.0
    %2100 = vmatpush1.xpose.msra.mxu0 0.0
    %2101 = vmatprep.subr.mxu0 0.0
    %2102 = vmatpush1.xpose.msra.mxu0 0.0
    %2103 = vmatprep.subr.mxu0 0.0
    %2104 = vmatpush1.xpose.msra.mxu0 0.0
    %2105 = vmatprep.subr.mxu0 0.0
    %2106 = vmatpush1.xpose.msra.mxu0 0.0
    %2107 = vmatprep.subr.mxu0 0.0
    %2108 = vmatpush1.xpose.msra.mxu0 0.0
    %2109 = vmatprep.subr.mxu0 0.0
    %2110 = vmatpush1.xpose.msra.mxu0 0.0
    %2111 = vmatprep.subr.mxu0 0.0
    %2112 = vmatpush1.xpose.msra.mxu0 0.0
    %2113 = vmatprep.subr.mxu0 0.0
    %2114 = vmatpush1.xpose.msra.mxu0 0.0
    %2115 = vmatprep.subr.mxu0 0.0
    %2116 = vmatpush1.xpose.msra.mxu0 0.0
    %2117 = vmatprep.subr.mxu0 0.0
    %2118 = vmatpush1.xpose.msra.mxu0 0.0
    %2119 = vmatprep.subr.mxu0 0.0
    %2120 = vmatpush1.xpose.msra.mxu0 0.0
    %2121 = vmatprep.subr.mxu0 0.0
    %2122 = vmatpush1.xpose.msra.mxu0 0.0
    %2123 = vmatprep.subr.mxu0 0.0
    %2124 = vmatpush1.xpose.msra.mxu0 0.0
    %2125 = vmatprep.subr.mxu0 0.0
    %2126 = vmatpush1.xpose.msra.mxu0 0.0
    %2127 = vmatprep.subr.mxu0 0.0
    %2128 = vmatpush1.xpose.msra.mxu0 0.0
    %2129 = vmatprep.subr.mxu0 0.0
    %2130 = vmatpush1.xpose.msra.mxu0 0.0
    %2131 = vmatprep.subr.mxu0 0.0
    %2132 = vmatpush1.xpose.msra.mxu0 0.0
    %2133 = vmatprep.subr.mxu0 0.0
    %2134 = vmatpush1.xpose.msra.mxu0 0.0
    %2135 = vmatprep.subr.mxu0 0.0
    %2136 = vmatpush1.xpose.msra.mxu0 0.0
    %2137 = vmatprep.subr.mxu0 0.0
    %2138 = vmatpush1.xpose.msra.mxu0 0.0
    %2139 = vmatprep.subr.mxu0 0.0
    %2140 = vmatpush1.xpose.msra.mxu0 0.0
    %2141 = vmatprep.subr.mxu0 0.0
    %2142 = vmatpush1.xpose.msra.mxu0 0.0
    %2143 = vmatprep.subr.mxu0 0.0
    %2144 = vmatpush1.xpose.msra.mxu0 0.0
    %2145 = vmatprep.mubr.f32.mxu0 0.0
    %2146 = vmatmul.mubr.f32.gmra.mrb[0].mxu0 %v2073
    %v2147 = vpop.f32.mrb[0].mxu0
    %v2148 = vadd.f32 0.0, %v2147
    %v2149 = vpop.f32.mrb[0].mxu0
    %2150 = vmatprep.mubr.f32.mxu0 0.0
    %2151 = vmatmul.mubr.f32.gmra.mrb[0].mxu0 %v2075
    %v2152 = vpop.f32.mrb[0].mxu0
    %v2153 = vadd.f32 0.0, %v2152
    %v2154 = vpop.f32.mrb[0].mxu0
    %2155 = vdwg.mxu0
    %2156 = vrot.lane.b32.xlu0 %v1892, 96
    %v2157 = vpop.permute.xlu0 %2156
    %2158 = vrot.lane.b32.xlu0 %v1894, 96
    %v2159 = vpop.permute.xlu0 %2158
    %v2160 = vsel %vm338, %v1892, 0
    %v2162 = vsel %vm338, %v1894, 0
    %v2164 = vsel %vm338, %v2157, 0
    %v2166 = vsel %vm338, %v2159, 0
    %2168 = vmatprep.subr.mxu0 0.0
    %2169 = vmatpush1.xpose.msra.mxu0 %v2164
    %2170 = vmatprep.subr.mxu0 0.0
    %2171 = vmatpush1.xpose.msra.mxu0 %v2166
    %2172 = vmatprep.subr.mxu0 0.0
    %2173 = vmatpush1.xpose.msra.mxu0 0.0
    %2174 = vmatprep.subr.mxu0 0.0
    %2175 = vmatpush1.xpose.msra.mxu0 0.0
    %2176 = vmatprep.subr.mxu0 0.0
    %2177 = vmatpush1.xpose.msra.mxu0 0.0
    %2178 = vmatprep.subr.mxu0 0.0
    %2179 = vmatpush1.xpose.msra.mxu0 0.0
    %2180 = vmatprep.subr.mxu0 0.0
    %2181 = vmatpush1.xpose.msra.mxu0 0.0
    %2182 = vmatprep.subr.mxu0 0.0
    %2183 = vmatpush1.xpose.msra.mxu0 0.0
    %2184 = vmatprep.subr.mxu0 0.0
    %2185 = vmatpush1.xpose.msra.mxu0 0.0
    %2186 = vmatprep.subr.mxu0 0.0
    %2187 = vmatpush1.xpose.msra.mxu0 0.0
    %2188 = vmatprep.subr.mxu0 0.0
    %2189 = vmatpush1.xpose.msra.mxu0 0.0
    %2190 = vmatprep.subr.mxu0 0.0
    %2191 = vmatpush1.xpose.msra.mxu0 0.0
    %2192 = vmatprep.subr.mxu0 0.0
    %2193 = vmatpush1.xpose.msra.mxu0 0.0
    %2194 = vmatprep.subr.mxu0 0.0
    %2195 = vmatpush1.xpose.msra.mxu0 0.0
    %2196 = vmatprep.subr.mxu0 0.0
    %2197 = vmatpush1.xpose.msra.mxu0 0.0
    %2198 = vmatprep.subr.mxu0 0.0
    %2199 = vmatpush1.xpose.msra.mxu0 0.0
    %2200 = vmatprep.subr.mxu0 0.0
    %2201 = vmatpush1.xpose.msra.mxu0 0.0
    %2202 = vmatprep.subr.mxu0 0.0
    %2203 = vmatpush1.xpose.msra.mxu0 0.0
    %2204 = vmatprep.subr.mxu0 0.0
    %2205 = vmatpush1.xpose.msra.mxu0 0.0
    %2206 = vmatprep.subr.mxu0 0.0
    %2207 = vmatpush1.xpose.msra.mxu0 0.0
    %2208 = vmatprep.subr.mxu0 0.0
    %2209 = vmatpush1.xpose.msra.mxu0 0.0
    %2210 = vmatprep.subr.mxu0 0.0
    %2211 = vmatpush1.xpose.msra.mxu0 0.0
    %2212 = vmatprep.subr.mxu0 0.0
    %2213 = vmatpush1.xpose.msra.mxu0 0.0
    %2214 = vmatprep.subr.mxu0 0.0
    %2215 = vmatpush1.xpose.msra.mxu0 0.0
    %2216 = vmatprep.subr.mxu0 0.0
    %2217 = vmatpush1.xpose.msra.mxu0 0.0
    %2218 = vmatprep.subr.mxu0 0.0
    %2219 = vmatpush1.xpose.msra.mxu0 0.0
    %2220 = vmatprep.subr.mxu0 0.0
    %2221 = vmatpush1.xpose.msra.mxu0 0.0
    %2222 = vmatprep.subr.mxu0 0.0
    %2223 = vmatpush1.xpose.msra.mxu0 0.0
    %2224 = vmatprep.subr.mxu0 0.0
    %2225 = vmatpush1.xpose.msra.mxu0 0.0
    %2226 = vmatprep.subr.mxu0 0.0
    %2227 = vmatpush1.xpose.msra.mxu0 0.0
    %2228 = vmatprep.subr.mxu0 0.0
    %2229 = vmatpush1.xpose.msra.mxu0 0.0
    %2230 = vmatprep.subr.mxu0 0.0
    %2231 = vmatpush1.xpose.msra.mxu0 0.0
    %2232 = vmatprep.mubr.f32.mxu0 0.0
    %2233 = vmatmul.mubr.f32.gmra.mrb[0].mxu0 %v2160
    %v2234 = vpop.f32.mrb[0].mxu0
    %v2235 = vadd.f32 0.0, %v2234
    %v2236 = vpop.f32.mrb[0].mxu0
    %2237 = vmatprep.mubr.f32.mxu0 0.0
    %2238 = vmatmul.mubr.f32.gmra.mrb[0].mxu0 %v2162
    %v2239 = vpop.f32.mrb[0].mxu0
    %v2240 = vadd.f32 0.0, %v2239
    %v2241 = vpop.f32.mrb[0].mxu0
    %2242 = vdwg.mxu0
    %v2243 = vmul.f32 %v1974, 0.35355338
    %v2244 = vmul.f32 %v1979, 0.35355338
    %v2245 = vmul.f32 %v2061, 0.35355338
    %v2246 = vmul.f32 %v2066, 0.35355338
    %v2247 = vmul.f32 %v2148, 0.35355338
    %v2248 = vmul.f32 %v2153, 0.35355338
    %v2249 = vmul.f32 %v2235, 0.35355338
    %v2250 = vmul.f32 %v2240, 0.35355338
    %v2251 = vadd.f32 %v2243, %v226
    %v2252 = vadd.f32 %v2244, %v227
    %v2253 = vadd.f32 %v2245, %v226
    %v2254 = vadd.f32 %v2246, %v227
    %v2255 = vadd.f32 %v2247, %v226
    %v2256 = vadd.f32 %v2248, %v227
    %v2257 = vadd.f32 %v2249, %v226
    %v2258 = vadd.f32 %v2250, %v227
    %v2259 = vsel %vm699, %v2251, -inf
    %2260 = vmax.xlane.f32.xlu0 %v2259
    %v2261 = vpop.xlane.xlu0 %2260
    %v2262 = vsel %vm699, %v2252, -inf
    %2263 = vmax.xlane.f32.xlu0 %v2262
    %v2264 = vpop.xlane.xlu0 %2263
    %v2265 = vsel %vm699, %v2253, -inf
    %2266 = vmax.xlane.f32.xlu0 %v2265
    %v2267 = vpop.xlane.xlu0 %2266
    %v2268 = vsel %vm699, %v2254, -inf
    %2269 = vmax.xlane.f32.xlu0 %v2268
    %v2270 = vpop.xlane.xlu0 %2269
    %v2271 = vsel %vm699, %v2255, -inf
    %2272 = vmax.xlane.f32.xlu0 %v2271
    %v2273 = vpop.xlane.xlu0 %2272
    %v2274 = vsel %vm699, %v2256, -inf
    %2275 = vmax.xlane.f32.xlu0 %v2274
    %v2276 = vpop.xlane.xlu0 %2275
    %v2277 = vsel %vm699, %v2257, -inf
    %2278 = vmax.xlane.f32.xlu0 %v2277
    %v2279 = vpop.xlane.xlu0 %2278
    %v2280 = vsel %vm699, %v2258, -inf
    %2281 = vmax.xlane.f32.xlu0 %v2280
    %v2282 = vpop.xlane.xlu0 %2281
    %v2283 = vsub.f32 %v2251, %v2261
    %v2284 = vsub.f32 %v2252, %v2264
    %v2285 = vsub.f32 %v2253, %v2267
    %v2286 = vsub.f32 %v2254, %v2270
    %v2287 = vsub.f32 %v2255, %v2273
    %v2288 = vsub.f32 %v2256, %v2276
    %v2289 = vsub.f32 %v2257, %v2279
    %v2290 = vsub.f32 %v2258, %v2282
    %v2291 = vmul.f32 %v2283, 1.442695
    %v2292 = vpow.pop %v2291
    %v2293 = vmul.f32 %v2284, 1.442695
    %v2294 = vpow.pop %v2293
    %v2295 = vmul.f32 %v2285, 1.442695
    %v2296 = vpow.pop %v2295
    %v2297 = vmul.f32 %v2286, 1.442695
    %v2298 = vpow.pop %v2297
    %v2299 = vmul.f32 %v2287, 1.442695
    %v2300 = vpow.pop %v2299
    %v2301 = vmul.f32 %v2288, 1.442695
    %v2302 = vpow.pop %v2301
    %v2303 = vmul.f32 %v2289, 1.442695
    %v2304 = vpow.pop %v2303
    %v2305 = vmul.f32 %v2290, 1.442695
    %v2306 = vpow.pop %v2305
    %v2307 = vsel %vm699, %v2292, 0.0
    %2308 = vadd.xlane.f32.xlu0 %v2307
    %v2309 = vpop.xlane.xlu0 %2308
    %v2310 = vsel %vm699, %v2294, 0.0
    %2311 = vadd.xlane.f32.xlu0 %v2310
    %v2312 = vpop.xlane.xlu0 %2311
    %v2313 = vsel %vm699, %v2296, 0.0
    %2314 = vadd.xlane.f32.xlu0 %v2313
    %v2315 = vpop.xlane.xlu0 %2314
    %v2316 = vsel %vm699, %v2298, 0.0
    %2317 = vadd.xlane.f32.xlu0 %v2316
    %v2318 = vpop.xlane.xlu0 %2317
    %v2319 = vsel %vm699, %v2300, 0.0
    %2320 = vadd.xlane.f32.xlu0 %v2319
    %v2321 = vpop.xlane.xlu0 %2320
    %v2322 = vsel %vm699, %v2302, 0.0
    %2323 = vadd.xlane.f32.xlu0 %v2322
    %v2324 = vpop.xlane.xlu0 %2323
    %v2325 = vsel %vm699, %v2304, 0.0
    %2326 = vadd.xlane.f32.xlu0 %v2325
    %v2327 = vpop.xlane.xlu0 %2326
    %v2328 = vsel %vm699, %v2306, 0.0
    %2329 = vadd.xlane.f32.xlu0 %v2328
    %v2330 = vpop.xlane.xlu0 %2329
    %v2331 = vrcp.pop %v2309
    %v2332 = vmul.f32 %v2292, %v2331
    %v2333 = vrcp.pop %v2312
    %v2334 = vmul.f32 %v2294, %v2333
    %v2335 = vrcp.pop %v2315
    %v2336 = vmul.f32 %v2296, %v2335
    %v2337 = vrcp.pop %v2318
    %v2338 = vmul.f32 %v2298, %v2337
    %v2339 = vrcp.pop %v2321
    %v2340 = vmul.f32 %v2300, %v2339
    %v2341 = vrcp.pop %v2324
    %v2342 = vmul.f32 %v2302, %v2341
    %v2343 = vrcp.pop %v2327
    %v2344 = vmul.f32 %v2304, %v2343
    %v2345 = vrcp.pop %v2330
    %v2346 = vmul.f32 %v2306, %v2345
    %2347 = vrot.lane.b32.xlu0 %v1873, 64
    %v2348 = vpop.permute.xlu0 %2347
    %2349 = vrot.lane.b32.xlu0 %v1878, 64
    %v2350 = vpop.permute.xlu0 %2349
    %v2354 = vsel %vm699, %v2332, 0
    %v2357 = vsel %vm699, %v2334, 0
    %2359 = vmatprep.subr.mxu0 0.0
    %2360 = vmatpush1.msra.mxu0 %v2348
    %2361 = vmatprep.subr.mxu0 0.0
    %2362 = vmatpush1.msra.mxu0 %v2350
    %2363 = vmatprep.subr.mxu0 0.0
    %2364 = vmatpush1.msra.mxu0 0.0
    %2365 = vmatprep.subr.mxu0 0.0
    %2366 = vmatpush1.msra.mxu0 0.0
    %2367 = vmatprep.subr.mxu0 0.0
    %2368 = vmatpush1.msra.mxu0 0.0
    %2369 = vmatprep.subr.mxu0 0.0
    %2370 = vmatpush1.msra.mxu0 0.0
    %2371 = vmatprep.subr.mxu0 0.0
    %2372 = vmatpush1.msra.mxu0 0.0
    %2373 = vmatprep.subr.mxu0 0.0
    %2374 = vmatpush1.msra.mxu0 0.0
    %2375 = vmatprep.subr.mxu0 0.0
    %2376 = vmatpush1.msra.mxu0 0.0
    %2377 = vmatprep.subr.mxu0 0.0
    %2378 = vmatpush1.msra.mxu0 0.0
    %2379 = vmatprep.subr.mxu0 0.0
    %2380 = vmatpush1.msra.mxu0 0.0
    %2381 = vmatprep.subr.mxu0 0.0
    %2382 = vmatpush1.msra.mxu0 0.0
    %2383 = vmatprep.subr.mxu0 0.0
    %2384 = vmatpush1.msra.mxu0 0.0
    %2385 = vmatprep.subr.mxu0 0.0
    %2386 = vmatpush1.msra.mxu0 0.0
    %2387 = vmatprep.subr.mxu0 0.0
    %2388 = vmatpush1.msra.mxu0 0.0
    %2389 = vmatprep.subr.mxu0 0.0
    %2390 = vmatpush1.msra.mxu0 0.0
    %2391 = vmatprep.subr.mxu0 0.0
    %2392 = vmatpush1.msra.mxu0 0.0
    %2393 = vmatprep.subr.mxu0 0.0
    %2394 = vmatpush1.msra.mxu0 0.0
    %2395 = vmatprep.subr.mxu0 0.0
    %2396 = vmatpush1.msra.mxu0 0.0
    %2397 = vmatprep.subr.mxu0 0.0
    %2398 = vmatpush1.msra.mxu0 0.0
    %2399 = vmatprep.subr.mxu0 0.0
    %2400 = vmatpush1.msra.mxu0 0.0
    %2401 = vmatprep.subr.mxu0 0.0
    %2402 = vmatpush1.msra.mxu0 0.0
    %2403 = vmatprep.subr.mxu0 0.0
    %2404 = vmatpush1.msra.mxu0 0.0
    %2405 = vmatprep.subr.mxu0 0.0
    %2406 = vmatpush1.msra.mxu0 0.0
    %2407 = vmatprep.subr.mxu0 0.0
    %2408 = vmatpush1.msra.mxu0 0.0
    %2409 = vmatprep.subr.mxu0 0.0
    %2410 = vmatpush1.msra.mxu0 0.0
    %2411 = vmatprep.subr.mxu0 0.0
    %2412 = vmatpush1.msra.mxu0 0.0
    %2413 = vmatprep.subr.mxu0 0.0
    %2414 = vmatpush1.msra.mxu0 0.0
    %2415 = vmatprep.subr.mxu0 0.0
    %2416 = vmatpush1.msra.mxu0 0.0
    %2417 = vmatprep.subr.mxu0 0.0
    %2418 = vmatpush1.msra.mxu0 0.0
    %2419 = vmatprep.subr.mxu0 0.0
    %2420 = vmatpush1.msra.mxu0 0.0
    %2421 = vmatprep.subr.mxu0 0.0
    %2422 = vmatpush1.msra.mxu0 0.0
    %2423 = vmatprep.mubr.f32.mxu0 0.0
    %2424 = vmatmul.mubr.f32.gmra.mrb[0].mxu0 %v2354
    %v2425 = vpop.f32.mrb[0].mxu0
    %v2426 = vadd.f32 0.0, %v2425
    %v2427 = vpop.f32.mrb[0].mxu0
    %2428 = vmatprep.mubr.f32.mxu0 0.0
    %2429 = vmatmul.mubr.f32.gmra.mrb[0].mxu0 %v2357
    %v2430 = vpop.f32.mrb[0].mxu0
    %v2431 = vadd.f32 0.0, %v2430
    %v2432 = vpop.f32.mrb[0].mxu0
    %2433 = vdwg.mxu0
    %2434 = vrot.lane.b32.xlu0 %v1884, 64
    %v2435 = vpop.permute.xlu0 %2434
    %2436 = vrot.lane.b32.xlu0 %v1886, 64
    %v2437 = vpop.permute.xlu0 %2436
    %v2441 = vsel %vm699, %v2336, 0
    %v2444 = vsel %vm699, %v2338, 0
    %2446 = vmatprep.subr.mxu0 0.0
    %2447 = vmatpush1.msra.mxu0 %v2435
    %2448 = vmatprep.subr.mxu0 0.0
    %2449 = vmatpush1.msra.mxu0 %v2437
    %2450 = vmatprep.subr.mxu0 0.0
    %2451 = vmatpush1.msra.mxu0 0.0
    %2452 = vmatprep.subr.mxu0 0.0
    %2453 = vmatpush1.msra.mxu0 0.0
    %2454 = vmatprep.subr.mxu0 0.0
    %2455 = vmatpush1.msra.mxu0 0.0
    %2456 = vmatprep.subr.mxu0 0.0
    %2457 = vmatpush1.msra.mxu0 0.0
    %2458 = vmatprep.subr.mxu0 0.0
    %2459 = vmatpush1.msra.mxu0 0.0
    %2460 = vmatprep.subr.mxu0 0.0
    %2461 = vmatpush1.msra.mxu0 0.0
    %2462 = vmatprep.subr.mxu0 0.0
    %2463 = vmatpush1.msra.mxu0 0.0
    %2464 = vmatprep.subr.mxu0 0.0
    %2465 = vmatpush1.msra.mxu0 0.0
    %2466 = vmatprep.subr.mxu0 0.0
    %2467 = vmatpush1.msra.mxu0 0.0
    %2468 = vmatprep.subr.mxu0 0.0
    %2469 = vmatpush1.msra.mxu0 0.0
    %2470 = vmatprep.subr.mxu0 0.0
    %2471 = vmatpush1.msra.mxu0 0.0
    %2472 = vmatprep.subr.mxu0 0.0
    %2473 = vmatpush1.msra.mxu0 0.0
    %2474 = vmatprep.subr.mxu0 0.0
    %2475 = vmatpush1.msra.mxu0 0.0
    %2476 = vmatprep.subr.mxu0 0.0
    %2477 = vmatpush1.msra.mxu0 0.0
    %2478 = vmatprep.subr.mxu0 0.0
    %2479 = vmatpush1.msra.mxu0 0.0
    %2480 = vmatprep.subr.mxu0 0.0
    %2481 = vmatpush1.msra.mxu0 0.0
    %2482 = vmatprep.subr.mxu0 0.0
    %2483 = vmatpush1.msra.mxu0 0.0
    %2484 = vmatprep.subr.mxu0 0.0
    %2485 = vmatpush1.msra.mxu0 0.0
    %2486 = vmatprep.subr.mxu0 0.0
    %2487 = vmatpush1.msra.mxu0 0.0
    %2488 = vmatprep.subr.mxu0 0.0
    %2489 = vmatpush1.msra.mxu0 0.0
    %2490 = vmatprep.subr.mxu0 0.0
    %2491 = vmatpush1.msra.mxu0 0.0
    %2492 = vmatprep.subr.mxu0 0.0
    %2493 = vmatpush1.msra.mxu0 0.0
    %2494 = vmatprep.subr.mxu0 0.0
    %2495 = vmatpush1.msra.mxu0 0.0
    %2496 = vmatprep.subr.mxu0 0.0
    %2497 = vmatpush1.msra.mxu0 0.0
    %2498 = vmatprep.subr.mxu0 0.0
    %2499 = vmatpush1.msra.mxu0 0.0
    %2500 = vmatprep.subr.mxu0 0.0
    %2501 = vmatpush1.msra.mxu0 0.0
    %2502 = vmatprep.subr.mxu0 0.0
    %2503 = vmatpush1.msra.mxu0 0.0
    %2504 = vmatprep.subr.mxu0 0.0
    %2505 = vmatpush1.msra.mxu0 0.0
    %2506 = vmatprep.subr.mxu0 0.0
    %2507 = vmatpush1.msra.mxu0 0.0
    %2508 = vmatprep.subr.mxu0 0.0
    %2509 = vmatpush1.msra.mxu0 0.0
    %2510 = vmatprep.mubr.f32.mxu0 0.0
    %2511 = vmatmul.mubr.f32.gmra.mrb[0].mxu0 %v2441
    %v2512 = vpop.f32.mrb[0].mxu0
    %v2513 = vadd.f32 0.0, %v2512
    %v2514 = vpop.f32.mrb[0].mxu0
    %2515 = vmatprep.mubr.f32.mxu0 0.0
    %2516 = vmatmul.mubr.f32.gmra.mrb[0].mxu0 %v2444
    %v2517 = vpop.f32.mrb[0].mxu0
    %v2518 = vadd.f32 0.0, %v2517
    %v2519 = vpop.f32.mrb[0].mxu0
    %2520 = vdwg.mxu0
    %2521 = vrot.lane.b32.xlu0 %v1888, 64
    %v2522 = vpop.permute.xlu0 %2521
    %2523 = vrot.lane.b32.xlu0 %v1890, 64
    %v2524 = vpop.permute.xlu0 %2523
    %v2528 = vsel %vm699, %v2340, 0
    %v2531 = vsel %vm699, %v2342, 0
    %2533 = vmatprep.subr.mxu0 0.0
    %2534 = vmatpush1.msra.mxu0 %v2522
    %2535 = vmatprep.subr.mxu0 0.0
    %2536 = vmatpush1.msra.mxu0 %v2524
    %2537 = vmatprep.subr.mxu0 0.0
    %2538 = vmatpush1.msra.mxu0 0.0
    %2539 = vmatprep.subr.mxu0 0.0
    %2540 = vmatpush1.msra.mxu0 0.0
    %2541 = vmatprep.subr.mxu0 0.0
    %2542 = vmatpush1.msra.mxu0 0.0
    %2543 = vmatprep.subr.mxu0 0.0
    %2544 = vmatpush1.msra.mxu0 0.0
    %2545 = vmatprep.subr.mxu0 0.0
    %2546 = vmatpush1.msra.mxu0 0.0
    %2547 = vmatprep.subr.mxu0 0.0
    %2548 = vmatpush1.msra.mxu0 0.0
    %2549 = vmatprep.subr.mxu0 0.0
    %2550 = vmatpush1.msra.mxu0 0.0
    %2551 = vmatprep.subr.mxu0 0.0
    %2552 = vmatpush1.msra.mxu0 0.0
    %2553 = vmatprep.subr.mxu0 0.0
    %2554 = vmatpush1.msra.mxu0 0.0
    %2555 = vmatprep.subr.mxu0 0.0
    %2556 = vmatpush1.msra.mxu0 0.0
    %2557 = vmatprep.subr.mxu0 0.0
    %2558 = vmatpush1.msra.mxu0 0.0
    %2559 = vmatprep.subr.mxu0 0.0
    %2560 = vmatpush1.msra.mxu0 0.0
    %2561 = vmatprep.subr.mxu0 0.0
    %2562 = vmatpush1.msra.mxu0 0.0
    %2563 = vmatprep.subr.mxu0 0.0
    %2564 = vmatpush1.msra.mxu0 0.0
    %2565 = vmatprep.subr.mxu0 0.0
    %2566 = vmatpush1.msra.mxu0 0.0
    %2567 = vmatprep.subr.mxu0 0.0
    %2568 = vmatpush1.msra.mxu0 0.0
    %2569 = vmatprep.subr.mxu0 0.0
    %2570 = vmatpush1.msra.mxu0 0.0
    %2571 = vmatprep.subr.mxu0 0.0
    %2572 = vmatpush1.msra.mxu0 0.0
    %2573 = vmatprep.subr.mxu0 0.0
    %2574 = vmatpush1.msra.mxu0 0.0
    %2575 = vmatprep.subr.mxu0 0.0
    %2576 = vmatpush1.msra.mxu0 0.0
    %2577 = vmatprep.subr.mxu0 0.0
    %2578 = vmatpush1.msra.mxu0 0.0
    %2579 = vmatprep.subr.mxu0 0.0
    %2580 = vmatpush1.msra.mxu0 0.0
    %2581 = vmatprep.subr.mxu0 0.0
    %2582 = vmatpush1.msra.mxu0 0.0
    %2583 = vmatprep.subr.mxu0 0.0
    %2584 = vmatpush1.msra.mxu0 0.0
    %2585 = vmatprep.subr.mxu0 0.0
    %2586 = vmatpush1.msra.mxu0 0.0
    %2587 = vmatprep.subr.mxu0 0.0
    %2588 = vmatpush1.msra.mxu0 0.0
    %2589 = vmatprep.subr.mxu0 0.0
    %2590 = vmatpush1.msra.mxu0 0.0
    %2591 = vmatprep.subr.mxu0 0.0
    %2592 = vmatpush1.msra.mxu0 0.0
    %2593 = vmatprep.subr.mxu0 0.0
    %2594 = vmatpush1.msra.mxu0 0.0
    %2595 = vmatprep.subr.mxu0 0.0
    %2596 = vmatpush1.msra.mxu0 0.0
    %2597 = vmatprep.mubr.f32.mxu0 0.0
    %2598 = vmatmul.mubr.f32.gmra.mrb[0].mxu0 %v2528
    %v2599 = vpop.f32.mrb[0].mxu0
    %v2600 = vadd.f32 0.0, %v2599
    %v2601 = vpop.f32.mrb[0].mxu0
    %2602 = vmatprep.mubr.f32.mxu0 0.0
    %2603 = vmatmul.mubr.f32.gmra.mrb[0].mxu0 %v2531
    %v2604 = vpop.f32.mrb[0].mxu0
    %v2605 = vadd.f32 0.0, %v2604
    %v2606 = vpop.f32.mrb[0].mxu0
    %2607 = vdwg.mxu0
    %2608 = vrot.lane.b32.xlu0 %v1892, 64
    %v2609 = vpop.permute.xlu0 %2608
    %2610 = vrot.lane.b32.xlu0 %v1894, 64
    %v2611 = vpop.permute.xlu0 %2610
    %v2615 = vsel %vm699, %v2344, 0
    %v2618 = vsel %vm699, %v2346, 0
    %2620 = vmatprep.subr.mxu0 0.0
    %2621 = vmatpush1.msra.mxu0 %v2609
    %2622 = vmatprep.subr.mxu0 0.0
    %2623 = vmatpush1.msra.mxu0 %v2611
    %2624 = vmatprep.subr.mxu0 0.0
    %2625 = vmatpush1.msra.mxu0 0.0
    %2626 = vmatprep.subr.mxu0 0.0
    %2627 = vmatpush1.msra.mxu0 0.0
    %2628 = vmatprep.subr.mxu0 0.0
    %2629 = vmatpush1.msra.mxu0 0.0
    %2630 = vmatprep.subr.mxu0 0.0
    %2631 = vmatpush1.msra.mxu0 0.0
    %2632 = vmatprep.subr.mxu0 0.0
    %2633 = vmatpush1.msra.mxu0 0.0
    %2634 = vmatprep.subr.mxu0 0.0
    %2635 = vmatpush1.msra.mxu0 0.0
    %2636 = vmatprep.subr.mxu0 0.0
    %2637 = vmatpush1.msra.mxu0 0.0
    %2638 = vmatprep.subr.mxu0 0.0
    %2639 = vmatpush1.msra.mxu0 0.0
    %2640 = vmatprep.subr.mxu0 0.0
    %2641 = vmatpush1.msra.mxu0 0.0
    %2642 = vmatprep.subr.mxu0 0.0
    %2643 = vmatpush1.msra.mxu0 0.0
    %2644 = vmatprep.subr.mxu0 0.0
    %2645 = vmatpush1.msra.mxu0 0.0
    %2646 = vmatprep.subr.mxu0 0.0
    %2647 = vmatpush1.msra.mxu0 0.0
    %2648 = vmatprep.subr.mxu0 0.0
    %2649 = vmatpush1.msra.mxu0 0.0
    %2650 = vmatprep.subr.mxu0 0.0
    %2651 = vmatpush1.msra.mxu0 0.0
    %2652 = vmatprep.subr.mxu0 0.0
    %2653 = vmatpush1.msra.mxu0 0.0
    %2654 = vmatprep.subr.mxu0 0.0
    %2655 = vmatpush1.msra.mxu0 0.0
    %2656 = vmatprep.subr.mxu0 0.0
    %2657 = vmatpush1.msra.mxu0 0.0
    %2658 = vmatprep.subr.mxu0 0.0
    %2659 = vmatpush1.msra.mxu0 0.0
    %2660 = vmatprep.subr.mxu0 0.0
    %2661 = vmatpush1.msra.mxu0 0.0
    %2662 = vmatprep.subr.mxu0 0.0
    %2663 = vmatpush1.msra.mxu0 0.0
    %2664 = vmatprep.subr.mxu0 0.0
    %2665 = vmatpush1.msra.mxu0 0.0
    %2666 = vmatprep.subr.mxu0 0.0
    %2667 = vmatpush1.msra.mxu0 0.0
    %2668 = vmatprep.subr.mxu0 0.0
    %2669 = vmatpush1.msra.mxu0 0.0
    %2670 = vmatprep.subr.mxu0 0.0
    %2671 = vmatpush1.msra.mxu0 0.0
    %2672 = vmatprep.subr.mxu0 0.0
    %2673 = vmatpush1.msra.mxu0 0.0
    %2674 = vmatprep.subr.mxu0 0.0
    %2675 = vmatpush1.msra.mxu0 0.0
    %2676 = vmatprep.subr.mxu0 0.0
    %2677 = vmatpush1.msra.mxu0 0.0
    %2678 = vmatprep.subr.mxu0 0.0
    %2679 = vmatpush1.msra.mxu0 0.0
    %2680 = vmatprep.subr.mxu0 0.0
    %2681 = vmatpush1.msra.mxu0 0.0
    %2682 = vmatprep.subr.mxu0 0.0
    %2683 = vmatpush1.msra.mxu0 0.0
    %2684 = vmatprep.mubr.f32.mxu0 0.0
    %2685 = vmatmul.mubr.f32.gmra.mrb[0].mxu0 %v2615
    %v2686 = vpop.f32.mrb[0].mxu0
    %v2687 = vadd.f32 0.0, %v2686
    %v2688 = vpop.f32.mrb[0].mxu0
    %2689 = vmatprep.mubr.f32.mxu0 0.0
    %2690 = vmatmul.mubr.f32.gmra.mrb[0].mxu0 %v2618
    %v2691 = vpop.f32.mrb[0].mxu0
    %v2692 = vadd.f32 0.0, %v2691
    %v2693 = vpop.f32.mrb[0].mxu0
    %2694 = vdwg.mxu0
    %s2695 = scalar_lea.vmem %s8, 32
    %v2696 = vld [vmem:[%s2695] sm:$0xff]
    %v2697 = vld [vmem:[%s2695 + $0x8] sm:$0xff]
    %v2698 = vld [vmem:[%s2695 + $0x10] sm:$0xff]
    %v2699 = vld [vmem:[%s2695 + $0x18] sm:$0xff]
    %v2701 = vsel %vm338, %v2426, 0
    %v2704 = vsel %vm338, %v2431, 0
    %2706 = vmatprep.subr.mxu0 0.0
    %2707 = vmatpush1.msra.mxu0 %v2696
    %2708 = vmatprep.subr.mxu0 0.0
    %2709 = vmatpush1.msra.mxu0 0.0
    %2710 = vmatprep.subr.mxu0 0.0
    %2711 = vmatpush1.msra.mxu0 0.0
    %2712 = vmatprep.subr.mxu0 0.0
    %2713 = vmatpush1.msra.mxu0 0.0
    %2714 = vmatprep.subr.mxu0 0.0
    %2715 = vmatpush1.msra.mxu0 0.0
    %2716 = vmatprep.subr.mxu0 0.0
    %2717 = vmatpush1.msra.mxu0 0.0
    %2718 = vmatprep.subr.mxu0 0.0
    %2719 = vmatpush1.msra.mxu0 0.0
    %2720 = vmatprep.subr.mxu0 0.0
    %2721 = vmatpush1.msra.mxu0 0.0
    %2722 = vmatprep.subr.mxu0 0.0
    %2723 = vmatpush1.msra.mxu0 0.0
    %2724 = vmatprep.subr.mxu0 0.0
    %2725 = vmatpush1.msra.mxu0 0.0
    %2726 = vmatprep.subr.mxu0 0.0
    %2727 = vmatpush1.msra.mxu0 0.0
    %2728 = vmatprep.subr.mxu0 0.0
    %2729 = vmatpush1.msra.mxu0 0.0
    %2730 = vmatprep.subr.mxu0 0.0
    %2731 = vmatpush1.msra.mxu0 0.0
    %2732 = vmatprep.subr.mxu0 0.0
    %2733 = vmatpush1.msra.mxu0 0.0
    %2734 = vmatprep.subr.mxu0 0.0
    %2735 = vmatpush1.msra.mxu0 0.0
    %2736 = vmatprep.subr.mxu0 0.0
    %2737 = vmatpush1.msra.mxu0 0.0
    %2738 = vmatprep.subr.mxu0 0.0
    %2739 = vmatpush1.msra.mxu0 0.0
    %2740 = vmatprep.subr.mxu0 0.0
    %2741 = vmatpush1.msra.mxu0 0.0
    %2742 = vmatprep.subr.mxu0 0.0
    %2743 = vmatpush1.msra.mxu0 0.0
    %2744 = vmatprep.subr.mxu0 0.0
    %2745 = vmatpush1.msra.mxu0 0.0
    %2746 = vmatprep.subr.mxu0 0.0
    %2747 = vmatpush1.msra.mxu0 0.0
    %2748 = vmatprep.subr.mxu0 0.0
    %2749 = vmatpush1.msra.mxu0 0.0
    %2750 = vmatprep.subr.mxu0 0.0
    %2751 = vmatpush1.msra.mxu0 0.0
    %2752 = vmatprep.subr.mxu0 0.0
    %2753 = vmatpush1.msra.mxu0 0.0
    %2754 = vmatprep.subr.mxu0 0.0
    %2755 = vmatpush1.msra.mxu0 0.0
    %2756 = vmatprep.subr.mxu0 0.0
    %2757 = vmatpush1.msra.mxu0 0.0
    %2758 = vmatprep.subr.mxu0 0.0
    %2759 = vmatpush1.msra.mxu0 0.0
    %2760 = vmatprep.subr.mxu0 0.0
    %2761 = vmatpush1.msra.mxu0 0.0
    %2762 = vmatprep.subr.mxu0 0.0
    %2763 = vmatpush1.msra.mxu0 0.0
    %2764 = vmatprep.subr.mxu0 0.0
    %2765 = vmatpush1.msra.mxu0 0.0
    %2766 = vmatprep.subr.mxu0 0.0
    %2767 = vmatpush1.msra.mxu0 0.0
    %2768 = vmatprep.subr.mxu0 0.0
    %2769 = vmatpush1.msra.mxu0 0.0
    %2770 = vmatprep.mubr.f32.mxu0 0.0
    %2771 = vmatmul.mubr.f32.gmra.mrb[0].mxu0 %v2701
    %v2772 = vpop.f32.mrb[0].mxu0
    %v2773 = vadd.f32 0.0, %v2772
    %v2774 = vpop.f32.mrb[0].mxu0
    %2775 = vmatprep.mubr.f32.mxu0 0.0
    %2776 = vmatmul.mubr.f32.gmra.mrb[0].mxu0 %v2704
    %v2777 = vpop.f32.mrb[0].mxu0
    %v2778 = vadd.f32 0.0, %v2777
    %v2779 = vpop.f32.mrb[0].mxu0
    %2780 = vdwg.mxu0
    %v2782 = vsel %vm338, %v2513, 0
    %v2785 = vsel %vm338, %v2518, 0
    %2787 = vmatprep.subr.mxu0 0.0
    %2788 = vmatpush1.msra.mxu0 %v2697
    %2789 = vmatprep.subr.mxu0 0.0
    %2790 = vmatpush1.msra.mxu0 0.0
    %2791 = vmatprep.subr.mxu0 0.0
    %2792 = vmatpush1.msra.mxu0 0.0
    %2793 = vmatprep.subr.mxu0 0.0
    %2794 = vmatpush1.msra.mxu0 0.0
    %2795 = vmatprep.subr.mxu0 0.0
    %2796 = vmatpush1.msra.mxu0 0.0
    %2797 = vmatprep.subr.mxu0 0.0
    %2798 = vmatpush1.msra.mxu0 0.0
    %2799 = vmatprep.subr.mxu0 0.0
    %2800 = vmatpush1.msra.mxu0 0.0
    %2801 = vmatprep.subr.mxu0 0.0
    %2802 = vmatpush1.msra.mxu0 0.0
    %2803 = vmatprep.subr.mxu0 0.0
    %2804 = vmatpush1.msra.mxu0 0.0
    %2805 = vmatprep.subr.mxu0 0.0
    %2806 = vmatpush1.msra.mxu0 0.0
    %2807 = vmatprep.subr.mxu0 0.0
    %2808 = vmatpush1.msra.mxu0 0.0
    %2809 = vmatprep.subr.mxu0 0.0
    %2810 = vmatpush1.msra.mxu0 0.0
    %2811 = vmatprep.subr.mxu0 0.0
    %2812 = vmatpush1.msra.mxu0 0.0
    %2813 = vmatprep.subr.mxu0 0.0
    %2814 = vmatpush1.msra.mxu0 0.0
    %2815 = vmatprep.subr.mxu0 0.0
    %2816 = vmatpush1.msra.mxu0 0.0
    %2817 = vmatprep.subr.mxu0 0.0
    %2818 = vmatpush1.msra.mxu0 0.0
    %2819 = vmatprep.subr.mxu0 0.0
    %2820 = vmatpush1.msra.mxu0 0.0
    %2821 = vmatprep.subr.mxu0 0.0
    %2822 = vmatpush1.msra.mxu0 0.0
    %2823 = vmatprep.subr.mxu0 0.0
    %2824 = vmatpush1.msra.mxu0 0.0
    %2825 = vmatprep.subr.mxu0 0.0
    %2826 = vmatpush1.msra.mxu0 0.0
    %2827 = vmatprep.subr.mxu0 0.0
    %2828 = vmatpush1.msra.mxu0 0.0
    %2829 = vmatprep.subr.mxu0 0.0
    %2830 = vmatpush1.msra.mxu0 0.0
    %2831 = vmatprep.subr.mxu0 0.0
    %2832 = vmatpush1.msra.mxu0 0.0
    %2833 = vmatprep.subr.mxu0 0.0
    %2834 = vmatpush1.msra.mxu0 0.0
    %2835 = vmatprep.subr.mxu0 0.0
    %2836 = vmatpush1.msra.mxu0 0.0
    %2837 = vmatprep.subr.mxu0 0.0
    %2838 = vmatpush1.msra.mxu0 0.0
    %2839 = vmatprep.subr.mxu0 0.0
    %2840 = vmatpush1.msra.mxu0 0.0
    %2841 = vmatprep.subr.mxu0 0.0
    %2842 = vmatpush1.msra.mxu0 0.0
    %2843 = vmatprep.subr.mxu0 0.0
    %2844 = vmatpush1.msra.mxu0 0.0
    %2845 = vmatprep.subr.mxu0 0.0
    %2846 = vmatpush1.msra.mxu0 0.0
    %2847 = vmatprep.subr.mxu0 0.0
    %2848 = vmatpush1.msra.mxu0 0.0
    %2849 = vmatprep.subr.mxu0 0.0
    %2850 = vmatpush1.msra.mxu0 0.0
    %2851 = vmatprep.mubr.f32.mxu0 0.0
    %2852 = vmatmul.mubr.f32.gmra.mrb[0].mxu0 %v2782
    %v2853 = vpop.f32.mrb[0].mxu0
    %v2854 = vadd.f32 0.0, %v2853
    %v2855 = vpop.f32.mrb[0].mxu0
    %2856 = vmatprep.mubr.f32.mxu0 0.0
    %2857 = vmatmul.mubr.f32.gmra.mrb[0].mxu0 %v2785
    %v2858 = vpop.f32.mrb[0].mxu0
    %v2859 = vadd.f32 0.0, %v2858
    %v2860 = vpop.f32.mrb[0].mxu0
    %2861 = vdwg.mxu0
    %v2863 = vsel %vm338, %v2600, 0
    %v2866 = vsel %vm338, %v2605, 0
    %2868 = vmatprep.subr.mxu0 0.0
    %2869 = vmatpush1.msra.mxu0 %v2698
    %2870 = vmatprep.subr.mxu0 0.0
    %2871 = vmatpush1.msra.mxu0 0.0
    %2872 = vmatprep.subr.mxu0 0.0
    %2873 = vmatpush1.msra.mxu0 0.0
    %2874 = vmatprep.subr.mxu0 0.0
    %2875 = vmatpush1.msra.mxu0 0.0
    %2876 = vmatprep.subr.mxu0 0.0
    %2877 = vmatpush1.msra.mxu0 0.0
    %2878 = vmatprep.subr.mxu0 0.0
    %2879 = vmatpush1.msra.mxu0 0.0
    %2880 = vmatprep.subr.mxu0 0.0
    %2881 = vmatpush1.msra.mxu0 0.0
    %2882 = vmatprep.subr.mxu0 0.0
    %2883 = vmatpush1.msra.mxu0 0.0
    %2884 = vmatprep.subr.mxu0 0.0
    %2885 = vmatpush1.msra.mxu0 0.0
    %2886 = vmatprep.subr.mxu0 0.0
    %2887 = vmatpush1.msra.mxu0 0.0
    %2888 = vmatprep.subr.mxu0 0.0
    %2889 = vmatpush1.msra.mxu0 0.0
    %2890 = vmatprep.subr.mxu0 0.0
    %2891 = vmatpush1.msra.mxu0 0.0
    %2892 = vmatprep.subr.mxu0 0.0
    %2893 = vmatpush1.msra.mxu0 0.0
    %2894 = vmatprep.subr.mxu0 0.0
    %2895 = vmatpush1.msra.mxu0 0.0
    %2896 = vmatprep.subr.mxu0 0.0
    %2897 = vmatpush1.msra.mxu0 0.0
    %2898 = vmatprep.subr.mxu0 0.0
    %2899 = vmatpush1.msra.mxu0 0.0
    %2900 = vmatprep.subr.mxu0 0.0
    %2901 = vmatpush1.msra.mxu0 0.0
    %2902 = vmatprep.subr.mxu0 0.0
    %2903 = vmatpush1.msra.mxu0 0.0
    %2904 = vmatprep.subr.mxu0 0.0
    %2905 = vmatpush1.msra.mxu0 0.0
    %2906 = vmatprep.subr.mxu0 0.0
    %2907 = vmatpush1.msra.mxu0 0.0
    %2908 = vmatprep.subr.mxu0 0.0
    %2909 = vmatpush1.msra.mxu0 0.0
    %2910 = vmatprep.subr.mxu0 0.0
    %2911 = vmatpush1.msra.mxu0 0.0
    %2912 = vmatprep.subr.mxu0 0.0
    %2913 = vmatpush1.msra.mxu0 0.0
    %2914 = vmatprep.subr.mxu0 0.0
    %2915 = vmatpush1.msra.mxu0 0.0
    %2916 = vmatprep.subr.mxu0 0.0
    %2917 = vmatpush1.msra.mxu0 0.0
    %2918 = vmatprep.subr.mxu0 0.0
    %2919 = vmatpush1.msra.mxu0 0.0
    %2920 = vmatprep.subr.mxu0 0.0
    %2921 = vmatpush1.msra.mxu0 0.0
    %2922 = vmatprep.subr.mxu0 0.0
    %2923 = vmatpush1.msra.mxu0 0.0
    %2924 = vmatprep.subr.mxu0 0.0
    %2925 = vmatpush1.msra.mxu0 0.0
    %2926 = vmatprep.subr.mxu0 0.0
    %2927 = vmatpush1.msra.mxu0 0.0
    %2928 = vmatprep.subr.mxu0 0.0
    %2929 = vmatpush1.msra.mxu0 0.0
    %2930 = vmatprep.subr.mxu0 0.0
    %2931 = vmatpush1.msra.mxu0 0.0
    %2932 = vmatprep.mubr.f32.mxu0 0.0
    %2933 = vmatmul.mubr.f32.gmra.mrb[0].mxu0 %v2863
    %v2934 = vpop.f32.mrb[0].mxu0
    %v2935 = vadd.f32 0.0, %v2934
    %v2936 = vpop.f32.mrb[0].mxu0
    %2937 = vmatprep.mubr.f32.mxu0 0.0
    %2938 = vmatmul.mubr.f32.gmra.mrb[0].mxu0 %v2866
    %v2939 = vpop.f32.mrb[0].mxu0
    %v2940 = vadd.f32 0.0, %v2939
    %v2941 = vpop.f32.mrb[0].mxu0
    %2942 = vdwg.mxu0
    %v2944 = vsel %vm338, %v2687, 0
    %v2947 = vsel %vm338, %v2692, 0
    %2949 = vmatprep.subr.mxu0 0.0
    %2950 = vmatpush1.msra.mxu0 %v2699
    %2951 = vmatprep.subr.mxu0 0.0
    %2952 = vmatpush1.msra.mxu0 0.0
    %2953 = vmatprep.subr.mxu0 0.0
    %2954 = vmatpush1.msra.mxu0 0.0
    %2955 = vmatprep.subr.mxu0 0.0
    %2956 = vmatpush1.msra.mxu0 0.0
    %2957 = vmatprep.subr.mxu0 0.0
    %2958 = vmatpush1.msra.mxu0 0.0
    %2959 = vmatprep.subr.mxu0 0.0
    %2960 = vmatpush1.msra.mxu0 0.0
    %2961 = vmatprep.subr.mxu0 0.0
    %2962 = vmatpush1.msra.mxu0 0.0
    %2963 = vmatprep.subr.mxu0 0.0
    %2964 = vmatpush1.msra.mxu0 0.0
    %2965 = vmatprep.subr.mxu0 0.0
    %2966 = vmatpush1.msra.mxu0 0.0
    %2967 = vmatprep.subr.mxu0 0.0
    %2968 = vmatpush1.msra.mxu0 0.0
    %2969 = vmatprep.subr.mxu0 0.0
    %2970 = vmatpush1.msra.mxu0 0.0
    %2971 = vmatprep.subr.mxu0 0.0
    %2972 = vmatpush1.msra.mxu0 0.0
    %2973 = vmatprep.subr.mxu0 0.0
    %2974 = vmatpush1.msra.mxu0 0.0
    %2975 = vmatprep.subr.mxu0 0.0
    %2976 = vmatpush1.msra.mxu0 0.0
    %2977 = vmatprep.subr.mxu0 0.0
    %2978 = vmatpush1.msra.mxu0 0.0
    %2979 = vmatprep.subr.mxu0 0.0
    %2980 = vmatpush1.msra.mxu0 0.0
    %2981 = vmatprep.subr.mxu0 0.0
    %2982 = vmatpush1.msra.mxu0 0.0
    %2983 = vmatprep.subr.mxu0 0.0
    %2984 = vmatpush1.msra.mxu0 0.0
    %2985 = vmatprep.subr.mxu0 0.0
    %2986 = vmatpush1.msra.mxu0 0.0
    %2987 = vmatprep.subr.mxu0 0.0
    %2988 = vmatpush1.msra.mxu0 0.0
    %2989 = vmatprep.subr.mxu0 0.0
    %2990 = vmatpush1.msra.mxu0 0.0
    %2991 = vmatprep.subr.mxu0 0.0
    %2992 = vmatpush1.msra.mxu0 0.0
    %2993 = vmatprep.subr.mxu0 0.0
    %2994 = vmatpush1.msra.mxu0 0.0
    %2995 = vmatprep.subr.mxu0 0.0
    %2996 = vmatpush1.msra.mxu0 0.0
    %2997 = vmatprep.subr.mxu0 0.0
    %2998 = vmatpush1.msra.mxu0 0.0
    %2999 = vmatprep.subr.mxu0 0.0
    %3000 = vmatpush1.msra.mxu0 0.0
    %3001 = vmatprep.subr.mxu0 0.0
    %3002 = vmatpush1.msra.mxu0 0.0
    %3003 = vmatprep.subr.mxu0 0.0
    %3004 = vmatpush1.msra.mxu0 0.0
    %3005 = vmatprep.subr.mxu0 0.0
    %3006 = vmatpush1.msra.mxu0 0.0
    %3007 = vmatprep.subr.mxu0 0.0
    %3008 = vmatpush1.msra.mxu0 0.0
    %3009 = vmatprep.subr.mxu0 0.0
    %3010 = vmatpush1.msra.mxu0 0.0
    %3011 = vmatprep.subr.mxu0 0.0
    %3012 = vmatpush1.msra.mxu0 0.0
    %3013 = vmatprep.mubr.f32.mxu0 0.0
    %3014 = vmatmul.mubr.f32.gmra.mrb[0].mxu0 %v2944
    %v3015 = vpop.f32.mrb[0].mxu0
    %v3016 = vadd.f32 0.0, %v3015
    %v3017 = vpop.f32.mrb[0].mxu0
    %3018 = vmatprep.mubr.f32.mxu0 0.0
    %3019 = vmatmul.mubr.f32.gmra.mrb[0].mxu0 %v2947
    %v3020 = vpop.f32.mrb[0].mxu0
    %v3021 = vadd.f32 0.0, %v3020
    %v3022 = vpop.f32.mrb[0].mxu0
    %3023 = vdwg.mxu0
    %v3024 = vsel %vm182, %v2773, 0.0
    %v3025 = vsel %vm182, %v2854, 0.0
    %v3026 = vadd.f32 %v3024, %v3025
    %v3027 = vsel %vm182, %v2935, 0.0
    %v3028 = vadd.f32 %v3026, %v3027
    %v3029 = vsel %vm182, %v3016, 0.0
    %v3030 = vadd.f32 %v3028, %v3029
    %v3031 = vsel %vm182, %v2778, 0.0
    %v3032 = vsel %vm182, %v2859, 0.0
    %v3033 = vadd.f32 %v3031, %v3032
    %v3034 = vsel %vm182, %v2940, 0.0
    %v3035 = vadd.f32 %v3033, %v3034
    %v3036 = vsel %vm182, %v3021, 0.0
    %v3037 = vadd.f32 %v3035, %v3036
    %s3038 = scalar_lea.vmem %s9, 1
    %v3039 = vld [vmem:[%s3038] sm:$0x1]
    %v3041 = vlaneseq
    %v3042 = vshrl.u32 %v3041, 7
    %v3043 = vsub.s32 0, %v3042
    %v3044 = vrot.slane %v3039, %v3043
    %v3046 = vadd.f32 %v3030, %v3044
    %v3047 = vadd.f32 %v3037, %v3044
    %v3048 = vadd.f32 %v3046, %v1785
    %v3049 = vadd.f32 %v3047, %v1786
    %s3050 = scalar_lea.vmem %s10, 1
    %v3051 = vld [vmem:[%s3050] sm:$0x1]
    %s3052 = scalar_lea.vmem %s11, 1
    %v3053 = vld [vmem:[%s3052] sm:$0x1]
    %v3054 = vsel %vm182, %v3048, 0.0
    %3055 = vadd.xlane.f32.xlu0 %v3054
    %v3056 = vpop.xlane.xlu0 %3055
    %v3057 = vsel %vm182, %v3049, 0.0
    %3058 = vadd.xlane.f32.xlu0 %v3057
    %v3059 = vpop.xlane.xlu0 %3058
    %v3060 = vmul.f32 %v3056, %v189
    %v3061 = vmul.f32 %v3059, %v189
    %v3062 = vsub.f32 %v3048, %v3060
    %v3063 = vsub.f32 %v3049, %v3061
    %v3064 = vmul.f32 %v3062, %v3062
    %v3065 = vmul.f32 %v3063, %v3063
    %v3066 = vsel %vm182, %v3064, 0.0
    %3067 = vadd.xlane.f32.xlu0 %v3066
    %v3068 = vpop.xlane.xlu0 %3067
    %v3069 = vsel %vm182, %v3065, 0.0
    %3070 = vadd.xlane.f32.xlu0 %v3069
    %v3071 = vpop.xlane.xlu0 %3070
    %v3072 = vmul.f32 %v3068, %v189
    %v3073 = vmul.f32 %v3071, %v189
    %v3074 = vadd.f32 %v3072, 1e-12
    %v3075 = vadd.f32 %v3073, 1e-12
    %v3076 = vrsqrt.pop %v3074
    %v3077 = vrsqrt.pop %v3075
    %v3078 = vmul.f32 %v3062, %v3076
    %v3079 = vmul.f32 %v3063, %v3077
    %v3081 = vlaneseq
    %v3082 = vshrl.u32 %v3081, 7
    %v3083 = vsub.s32 0, %v3082
    %v3084 = vrot.slane %v3051, %v3083
    %v3086 = vmul.f32 %v3078, %v3084
    %v3087 = vmul.f32 %v3079, %v3084
    %v3089 = vlaneseq
    %v3090 = vshrl.u32 %v3089, 7
    %v3091 = vsub.s32 0, %v3090
    %v3092 = vrot.slane %v3053, %v3091
    %v3094 = vadd.f32 %v3086, %v3092
    %v3095 = vadd.f32 %v3087, %v3092
    %s3096 = scalar_lea.vmem %s12, 32
    %v3097 = vld [vmem:[%s3096] sm:$0xff]
    %v3098 = vld [vmem:[%s3096 + $0x8] sm:$0xff]
    %v3099 = vld [vmem:[%s3096 + $0x10] sm:$0xff]
    %v3100 = vld [vmem:[%s3096 + $0x18] sm:$0xff]
    %s3101 = scalar_lea.vmem %s13, 1
    %v3102 = vld [vmem:[%s3101] sm:$0x1]
    %v3104 = vlaneseq
    %v3105 = vshrl.u32 %v3104, 7
    %v3106 = vsub.s32 0, %v3105
    %v3107 = vrot.slane %v3102, %v3106
    %v3110 = vsel %vm182, %v3094, 0
    %v3113 = vsel %vm182, %v3095, 0
    %3115 = vmatprep.subr.mxu0 0.0
    %3116 = vmatpush1.msra.mxu0 %v3097
    %3117 = vmatprep.subr.mxu0 0.0
    %3118 = vmatpush1.msra.mxu0 %v3098
    %3119 = vmatprep.subr.mxu0 0.0
    %3120 = vmatpush1.msra.mxu0 %v3099
    %3121 = vmatprep.subr.mxu0 0.0
    %3122 = vmatpush1.msra.mxu0 %v3100
    %3123 = vmatprep.subr.mxu0 0.0
    %3124 = vmatpush1.msra.mxu0 0.0
    %3125 = vmatprep.subr.mxu0 0.0
    %3126 = vmatpush1.msra.mxu0 0.0
    %3127 = vmatprep.subr.mxu0 0.0
    %3128 = vmatpush1.msra.mxu0 0.0
    %3129 = vmatprep.subr.mxu0 0.0
    %3130 = vmatpush1.msra.mxu0 0.0
    %3131 = vmatprep.subr.mxu0 0.0
    %3132 = vmatpush1.msra.mxu0 0.0
    %3133 = vmatprep.subr.mxu0 0.0
    %3134 = vmatpush1.msra.mxu0 0.0
    %3135 = vmatprep.subr.mxu0 0.0
    %3136 = vmatpush1.msra.mxu0 0.0
    %3137 = vmatprep.subr.mxu0 0.0
    %3138 = vmatpush1.msra.mxu0 0.0
    %3139 = vmatprep.subr.mxu0 0.0
    %3140 = vmatpush1.msra.mxu0 0.0
    %3141 = vmatprep.subr.mxu0 0.0
    %3142 = vmatpush1.msra.mxu0 0.0
    %3143 = vmatprep.subr.mxu0 0.0
    %3144 = vmatpush1.msra.mxu0 0.0
    %3145 = vmatprep.subr.mxu0 0.0
    %3146 = vmatpush1.msra.mxu0 0.0
    %3147 = vmatprep.subr.mxu0 0.0
    %3148 = vmatpush1.msra.mxu0 0.0
    %3149 = vmatprep.subr.mxu0 0.0
    %3150 = vmatpush1.msra.mxu0 0.0
    %3151 = vmatprep.subr.mxu0 0.0
    %3152 = vmatpush1.msra.mxu0 0.0
    %3153 = vmatprep.subr.mxu0 0.0
    %3154 = vmatpush1.msra.mxu0 0.0
    %3155 = vmatprep.subr.mxu0 0.0
    %3156 = vmatpush1.msra.mxu0 0.0
    %3157 = vmatprep.subr.mxu0 0.0
    %3158 = vmatpush1.msra.mxu0 0.0
    %3159 = vmatprep.subr.mxu0 0.0
    %3160 = vmatpush1.msra.mxu0 0.0
    %3161 = vmatprep.subr.mxu0 0.0
    %3162 = vmatpush1.msra.mxu0 0.0
    %3163 = vmatprep.subr.mxu0 0.0
    %3164 = vmatpush1.msra.mxu0 0.0
    %3165 = vmatprep.subr.mxu0 0.0
    %3166 = vmatpush1.msra.mxu0 0.0
    %3167 = vmatprep.subr.mxu0 0.0
    %3168 = vmatpush1.msra.mxu0 0.0
    %3169 = vmatprep.subr.mxu0 0.0
    %3170 = vmatpush1.msra.mxu0 0.0
    %3171 = vmatprep.subr.mxu0 0.0
    %3172 = vmatpush1.msra.mxu0 0.0
    %3173 = vmatprep.subr.mxu0 0.0
    %3174 = vmatpush1.msra.mxu0 0.0
    %3175 = vmatprep.subr.mxu0 0.0
    %3176 = vmatpush1.msra.mxu0 0.0
    %3177 = vmatprep.subr.mxu0 0.0
    %3178 = vmatpush1.msra.mxu0 0.0
    %3179 = vmatprep.mubr.f32.mxu0 0.0
    %3180 = vmatmul.mubr.f32.gmra.mrb[0].mxu0 %v3110
    %v3181 = vpop.f32.mrb[0].mxu0
    %v3182 = vadd.f32 %v3107, %v3181
    %v3183 = vpop.f32.mrb[0].mxu0
    %3184 = vmatprep.mubr.f32.mxu0 0.0
    %3185 = vmatmul.mubr.f32.gmra.mrb[0].mxu0 %v3113
    %v3186 = vpop.f32.mrb[0].mxu0
    %v3187 = vadd.f32 %v3107, %v3186
    %v3188 = vpop.f32.mrb[0].mxu0
    %3189 = vdwg.mxu0
    %v3190 = vmul.f32 %v3182, 0.5
    %v3191 = vmul.f32 %v3187, 0.5
    %v3192 = vmul.f32 %v3182, 0.044715
    %v3193 = vmul.f32 %v3187, 0.044715
    %v3194 = vmul.f32 %v3192, %v3182
    %v3195 = vmul.f32 %v3193, %v3187
    %v3196 = vmul.f32 %v3194, %v3182
    %v3197 = vmul.f32 %v3195, %v3187
    %v3198 = vadd.f32 %v3182, %v3196
    %v3199 = vadd.f32 %v3187, %v3197
    %v3200 = vmul.f32 %v3198, 0.7978846
    %v3201 = vmul.f32 %v3199, 0.7978846
    %v3202 = vtanh.pop %v3200
    %v3203 = vtanh.pop %v3201
    %v3204 = vadd.f32 %v3202, 1.0
    %v3205 = vadd.f32 %v3203, 1.0
    %v3206 = vmul.f32 %v3190, %v3204
    %v3207 = vmul.f32 %v3191, %v3205
    %s3208 = scalar_lea.vmem %s14, 128
    %v3209 = vld [vmem:[%s3208] sm:$0xff]
    %v3210 = vld [vmem:[%s3208 + $0x8] sm:$0xff]
    %v3211 = vld [vmem:[%s3208 + $0x10] sm:$0xff]
    %v3212 = vld [vmem:[%s3208 + $0x18] sm:$0xff]
    %v3213 = vld [vmem:[%s3208 + $0x20] sm:$0xff]
    %v3214 = vld [vmem:[%s3208 + $0x28] sm:$0xff]
    %v3215 = vld [vmem:[%s3208 + $0x30] sm:$0xff]
    %v3216 = vld [vmem:[%s3208 + $0x38] sm:$0xff]
    %v3217 = vld [vmem:[%s3208 + $0x40] sm:$0xff]
    %v3218 = vld [vmem:[%s3208 + $0x48] sm:$0xff]
    %v3219 = vld [vmem:[%s3208 + $0x50] sm:$0xff]
    %v3220 = vld [vmem:[%s3208 + $0x58] sm:$0xff]
    %v3221 = vld [vmem:[%s3208 + $0x60] sm:$0xff]
    %v3222 = vld [vmem:[%s3208 + $0x68] sm:$0xff]
    %v3223 = vld [vmem:[%s3208 + $0x70] sm:$0xff]
    %v3224 = vld [vmem:[%s3208 + $0x78] sm:$0xff]
    %s3225 = scalar_lea.vmem %s15, 1
    %v3226 = vld [vmem:[%s3225] sm:$0x1]
    %v3228 = vlaneseq
    %v3229 = vshrl.u32 %v3228, 7
    %v3230 = vsub.s32 0, %v3229
    %v3231 = vrot.slane %v3226, %v3230
    %3233 = vmatprep.subr.mxu0 0.0
    %3234 = vmatpush1.msra.mxu0 %v3209
    %3235 = vmatprep.subr.mxu0 0.0
    %3236 = vmatpush1.msra.mxu0 %v3210
    %3237 = vmatprep.subr.mxu0 0.0
    %3238 = vmatpush1.msra.mxu0 %v3211
    %3239 = vmatprep.subr.mxu0 0.0
    %3240 = vmatpush1.msra.mxu0 %v3212
    %3241 = vmatprep.subr.mxu0 0.0
    %3242 = vmatpush1.msra.mxu0 %v3213
    %3243 = vmatprep.subr.mxu0 0.0
    %3244 = vmatpush1.msra.mxu0 %v3214
    %3245 = vmatprep.subr.mxu0 0.0
    %3246 = vmatpush1.msra.mxu0 %v3215
    %3247 = vmatprep.subr.mxu0 0.0
    %3248 = vmatpush1.msra.mxu0 %v3216
    %3249 = vmatprep.subr.mxu0 0.0
    %3250 = vmatpush1.msra.mxu0 %v3217
    %3251 = vmatprep.subr.mxu0 0.0
    %3252 = vmatpush1.msra.mxu0 %v3218
    %3253 = vmatprep.subr.mxu0 0.0
    %3254 = vmatpush1.msra.mxu0 %v3219
    %3255 = vmatprep.subr.mxu0 0.0
    %3256 = vmatpush1.msra.mxu0 %v3220
    %3257 = vmatprep.subr.mxu0 0.0
    %3258 = vmatpush1.msra.mxu0 %v3221
    %3259 = vmatprep.subr.mxu0 0.0
    %3260 = vmatpush1.msra.mxu0 %v3222
    %3261 = vmatprep.subr.mxu0 0.0
    %3262 = vmatpush1.msra.mxu0 %v3223
    %3263 = vmatprep.subr.mxu0 0.0
    %3264 = vmatpush1.msra.mxu0 %v3224
    %3265 = vmatprep.subr.mxu0 0.0
    %3266 = vmatpush1.msra.mxu0 0.0
    %3267 = vmatprep.subr.mxu0 0.0
    %3268 = vmatpush1.msra.mxu0 0.0
    %3269 = vmatprep.subr.mxu0 0.0
    %3270 = vmatpush1.msra.mxu0 0.0
    %3271 = vmatprep.subr.mxu0 0.0
    %3272 = vmatpush1.msra.mxu0 0.0
    %3273 = vmatprep.subr.mxu0 0.0
    %3274 = vmatpush1.msra.mxu0 0.0
    %3275 = vmatprep.subr.mxu0 0.0
    %3276 = vmatpush1.msra.mxu0 0.0
    %3277 = vmatprep.subr.mxu0 0.0
    %3278 = vmatpush1.msra.mxu0 0.0
    %3279 = vmatprep.subr.mxu0 0.0
    %3280 = vmatpush1.msra.mxu0 0.0
    %3281 = vmatprep.subr.mxu0 0.0
    %3282 = vmatpush1.msra.mxu0 0.0
    %3283 = vmatprep.subr.mxu0 0.0
    %3284 = vmatpush1.msra.mxu0 0.0
    %3285 = vmatprep.subr.mxu0 0.0
    %3286 = vmatpush1.msra.mxu0 0.0
    %3287 = vmatprep.subr.mxu0 0.0
    %3288 = vmatpush1.msra.mxu0 0.0
    %3289 = vmatprep.subr.mxu0 0.0
    %3290 = vmatpush1.msra.mxu0 0.0
    %3291 = vmatprep.subr.mxu0 0.0
    %3292 = vmatpush1.msra.mxu0 0.0
    %3293 = vmatprep.subr.mxu0 0.0
    %3294 = vmatpush1.msra.mxu0 0.0
    %3295 = vmatprep.subr.mxu0 0.0
    %3296 = vmatpush1.msra.mxu0 0.0
    %3297 = vmatprep.mubr.f32.mxu0 0.0
    %3298 = vmatmul.mubr.f32.gmra.mrb[0].mxu0 %v3206
    %v3299 = vpop.f32.mrb[0].mxu0
    %v3300 = vadd.f32 %v3231, %v3299
    %v3301 = vpop.f32.mrb[0].mxu0
    %3302 = vmatprep.mubr.f32.mxu0 0.0
    %3303 = vmatmul.mubr.f32.gmra.mrb[0].mxu0 %v3207
    %v3304 = vpop.f32.mrb[0].mxu0
    %v3305 = vadd.f32 %v3231, %v3304
    %v3306 = vpop.f32.mrb[0].mxu0
    %3307 = vdwg.mxu0
    %v3308 = vadd.f32 %v3300, %v3094
    %v3309 = vadd.f32 %v3305, %v3095
    %s3310 = scalar_lea.vmem %s16, 1
    %v3311 = vld [vmem:[%s3310] sm:$0x1]
    %s3312 = scalar_lea.vmem %s17, 1
    %v3313 = vld [vmem:[%s3312] sm:$0x1]
    %v3314 = vsel %vm182, %v3308, 0.0
    %3315 = vadd.xlane.f32.xlu0 %v3314
    %v3316 = vpop.xlane.xlu0 %3315
    %v3317 = vsel %vm182, %v3309, 0.0
    %3318 = vadd.xlane.f32.xlu0 %v3317
    %v3319 = vpop.xlane.xlu0 %3318
    %v3320 = vmul.f32 %v3316, %v189
    %v3321 = vmul.f32 %v3319, %v189
    %v3322 = vsub.f32 %v3308, %v3320
    %v3323 = vsub.f32 %v3309, %v3321
    %v3324 = vmul.f32 %v3322, %v3322
    %v3325 = vmul.f32 %v3323, %v3323
    %v3326 = vsel %vm182, %v3324, 0.0
    %3327 = vadd.xlane.f32.xlu0 %v3326
    %v3328 = vpop.xlane.xlu0 %3327
    %v3329 = vsel %vm182, %v3325, 0.0
    %3330 = vadd.xlane.f32.xlu0 %v3329
    %v3331 = vpop.xlane.xlu0 %3330
    %v3332 = vmul.f32 %v3328, %v189
    %v3333 = vmul.f32 %v3331, %v189
    %v3334 = vadd.f32 %v3332, 1e-12
    %v3335 = vadd.f32 %v3333, 1e-12
    %v3336 = vrsqrt.pop %v3334
    %v3337 = vrsqrt.pop %v3335
    %v3338 = vmul.f32 %v3322, %v3336
    %v3339 = vmul.f32 %v3323, %v3337
    %v3341 = vlaneseq
    %v3342 = vshrl.u32 %v3341, 7
    %v3343 = vsub.s32 0, %v3342
    %v3344 = vrot.slane %v3311, %v3343
    %v3346 = vmul.f32 %v3338, %v3344
    %v3347 = vmul.f32 %v3339, %v3344
    %v3349 = vlaneseq
    %v3350 = vshrl.u32 %v3349, 7
    %v3351 = vsub.s32 0, %v3350
    %v3352 = vrot.slane %v3313, %v3351
    %v3354 = vadd.f32 %v3346, %v3352
    %v3355 = vadd.f32 %v3347, %v3352
    %v3356 = vld [vmem:[%s18] sm:$0xff]
    %v3357 = vld [vmem:[%s18 + $0x8] sm:$0xff]
    %v3358 = vld [vmem:[%s18 + $0x10] sm:$0xff]
    %v3359 = vld [vmem:[%s18 + $0x18] sm:$0xff]
    %v3360 = vld [vmem:[%s19] sm:$0x1]
    %v3362 = vlaneseq
    %v3363 = vshrl.u32 %v3362, 7
    %v3364 = vsub.s32 0, %v3363
    %v3365 = vrot.slane %v3360, %v3364
    %v3369 = vrot.slane %v3355, 7
    %vm3370 = vcmask 1041409
    %v3371 = vsel %vm3370, %v3369, %v3354
    %v3372 = vsel %vm182, %v3371, 0
    %3374 = vmatprep.subr.mxu0 0.0
    %3375 = vmatpush1.msra.mxu0 %v3356
    %3376 = vmatprep.subr.mxu0 0.0
    %3377 = vmatpush1.msra.mxu0 %v3357
    %3378 = vmatprep.subr.mxu0 0.0
    %3379 = vmatpush1.msra.mxu0 %v3358
    %3380 = vmatprep.subr.mxu0 0.0
    %3381 = vmatpush1.msra.mxu0 %v3359
    %3382 = vmatprep.subr.mxu0 0.0
    %3383 = vmatpush1.msra.mxu0 0.0
    %3384 = vmatprep.subr.mxu0 0.0
    %3385 = vmatpush1.msra.mxu0 0.0
    %3386 = vmatprep.subr.mxu0 0.0
    %3387 = vmatpush1.msra.mxu0 0.0
    %3388 = vmatprep.subr.mxu0 0.0
    %3389 = vmatpush1.msra.mxu0 0.0
    %3390 = vmatprep.subr.mxu0 0.0
    %3391 = vmatpush1.msra.mxu0 0.0
    %3392 = vmatprep.subr.mxu0 0.0
    %3393 = vmatpush1.msra.mxu0 0.0
    %3394 = vmatprep.subr.mxu0 0.0
    %3395 = vmatpush1.msra.mxu0 0.0
    %3396 = vmatprep.subr.mxu0 0.0
    %3397 = vmatpush1.msra.mxu0 0.0
    %3398 = vmatprep.subr.mxu0 0.0
    %3399 = vmatpush1.msra.mxu0 0.0
    %3400 = vmatprep.subr.mxu0 0.0
    %3401 = vmatpush1.msra.mxu0 0.0
    %3402 = vmatprep.subr.mxu0 0.0
    %3403 = vmatpush1.msra.mxu0 0.0
    %3404 = vmatprep.subr.mxu0 0.0
    %3405 = vmatpush1.msra.mxu0 0.0
    %3406 = vmatprep.subr.mxu0 0.0
    %3407 = vmatpush1.msra.mxu0 0.0
    %3408 = vmatprep.subr.mxu0 0.0
    %3409 = vmatpush1.msra.mxu0 0.0
    %3410 = vmatprep.subr.mxu0 0.0
    %3411 = vmatpush1.msra.mxu0 0.0
    %3412 = vmatprep.subr.mxu0 0.0
    %3413 = vmatpush1.msra.mxu0 0.0
    %3414 = vmatprep.subr.mxu0 0.0
    %3415 = vmatpush1.msra.mxu0 0.0
    %3416 = vmatprep.subr.mxu0 0.0
    %3417 = vmatpush1.msra.mxu0 0.0
    %3418 = vmatprep.subr.mxu0 0.0
    %3419 = vmatpush1.msra.mxu0 0.0
    %3420 = vmatprep.subr.mxu0 0.0
    %3421 = vmatpush1.msra.mxu0 0.0
    %3422 = vmatprep.subr.mxu0 0.0
    %3423 = vmatpush1.msra.mxu0 0.0
    %3424 = vmatprep.subr.mxu0 0.0
    %3425 = vmatpush1.msra.mxu0 0.0
    %3426 = vmatprep.subr.mxu0 0.0
    %3427 = vmatpush1.msra.mxu0 0.0
    %3428 = vmatprep.subr.mxu0 0.0
    %3429 = vmatpush1.msra.mxu0 0.0
    %3430 = vmatprep.subr.mxu0 0.0
    %3431 = vmatpush1.msra.mxu0 0.0
    %3432 = vmatprep.subr.mxu0 0.0
    %3433 = vmatpush1.msra.mxu0 0.0
    %3434 = vmatprep.subr.mxu0 0.0
    %3435 = vmatpush1.msra.mxu0 0.0
    %3436 = vmatprep.subr.mxu0 0.0
    %3437 = vmatpush1.msra.mxu0 0.0
    %3438 = vmatprep.mubr.f32.mxu0 0.0
    %3439 = vmatmul.mubr.f32.gmra.mrb[0].mxu0 %v3372
    %v3440 = vpop.f32.mrb[0].mxu0
    %v3441 = vadd.f32 %v3365, %v3440
    %v3442 = vpop.f32.mrb[0].mxu0
    %3443 = vdwg.mxu0
    %v3444 = vtanh.pop %v3441
    %v3445 = vld [vmem:[%s20] sm:$0xff]
    %v3446 = vld [vmem:[%s20 + $0x8] sm:$0xff]
    %v3447 = vld [vmem:[%s20 + $0x10] sm:$0xff]
    %v3448 = vld [vmem:[%s20 + $0x18] sm:$0xff]
    %v3449 = vld [vmem:[%s21] sm:$0x1]
    %v3451 = vlaneseq
    %v3452 = vshrl.u32 %v3451, 7
    %v3453 = vsub.s32 0, %v3452
    %v3454 = vrot.slane %v3449, %v3453
    %v3457 = vsel %vm182, %v3444, 0
    %3459 = vmatprep.subr.mxu0 0.0
    %3460 = vmatpush1.msra.mxu0 %v3445
    %3461 = vmatprep.subr.mxu0 0.0
    %3462 = vmatpush1.msra.mxu0 %v3446
    %3463 = vmatprep.subr.mxu0 0.0
    %3464 = vmatpush1.msra.mxu0 %v3447
    %3465 = vmatprep.subr.mxu0 0.0
    %3466 = vmatpush1.msra.mxu0 %v3448
    %3467 = vmatprep.subr.mxu0 0.0
    %3468 = vmatpush1.msra.mxu0 0.0
    %3469 = vmatprep.subr.mxu0 0.0
    %3470 = vmatpush1.msra.mxu0 0.0
    %3471 = vmatprep.subr.mxu0 0.0
    %3472 = vmatpush1.msra.mxu0 0.0
    %3473 = vmatprep.subr.mxu0 0.0
    %3474 = vmatpush1.msra.mxu0 0.0
    %3475 = vmatprep.subr.mxu0 0.0
    %3476 = vmatpush1.msra.mxu0 0.0
    %3477 = vmatprep.subr.mxu0 0.0
    %3478 = vmatpush1.msra.mxu0 0.0
    %3479 = vmatprep.subr.mxu0 0.0
    %3480 = vmatpush1.msra.mxu0 0.0
    %3481 = vmatprep.subr.mxu0 0.0
    %3482 = vmatpush1.msra.mxu0 0.0
    %3483 = vmatprep.subr.mxu0 0.0
    %3484 = vmatpush1.msra.mxu0 0.0
    %3485 = vmatprep.subr.mxu0 0.0
    %3486 = vmatpush1.msra.mxu0 0.0
    %3487 = vmatprep.subr.mxu0 0.0
    %3488 = vmatpush1.msra.mxu0 0.0
    %3489 = vmatprep.subr.mxu0 0.0
    %3490 = vmatpush1.msra.mxu0 0.0
    %3491 = vmatprep.subr.mxu0 0.0
    %3492 = vmatpush1.msra.mxu0 0.0
    %3493 = vmatprep.subr.mxu0 0.0
    %3494 = vmatpush1.msra.mxu0 0.0
    %3495 = vmatprep.subr.mxu0 0.0
    %3496 = vmatpush1.msra.mxu0 0.0
    %3497 = vmatprep.subr.mxu0 0.0
    %3498 = vmatpush1.msra.mxu0 0.0
    %3499 = vmatprep.subr.mxu0 0.0
    %3500 = vmatpush1.msra.mxu0 0.0
    %3501 = vmatprep.subr.mxu0 0.0
    %3502 = vmatpush1.msra.mxu0 0.0
    %3503 = vmatprep.subr.mxu0 0.0
    %3504 = vmatpush1.msra.mxu0 0.0
    %3505 = vmatprep.subr.mxu0 0.0
    %3506 = vmatpush1.msra.mxu0 0.0
    %3507 = vmatprep.subr.mxu0 0.0
    %3508 = vmatpush1.msra.mxu0 0.0
    %3509 = vmatprep.subr.mxu0 0.0
    %3510 = vmatpush1.msra.mxu0 0.0
    %3511 = vmatprep.subr.mxu0 0.0
    %3512 = vmatpush1.msra.mxu0 0.0
    %3513 = vmatprep.subr.mxu0 0.0
    %3514 = vmatpush1.msra.mxu0 0.0
    %3515 = vmatprep.subr.mxu0 0.0
    %3516 = vmatpush1.msra.mxu0 0.0
    %3517 = vmatprep.subr.mxu0 0.0
    %3518 = vmatpush1.msra.mxu0 0.0
    %3519 = vmatprep.subr.mxu0 0.0
    %3520 = vmatpush1.msra.mxu0 0.0
    %3521 = vmatprep.subr.mxu0 0.0
    %3522 = vmatpush1.msra.mxu0 0.0
    %3523 = vmatprep.mubr.f32.mxu0 0.0
    %3524 = vmatmul.mubr.f32.gmra.mrb[0].mxu0 %v3457
    %v3525 = vpop.f32.mrb[0].mxu0
    %v3526 = vadd.f32 %v3454, %v3525
    %v3527 = vpop.f32.mrb[0].mxu0
    %3528 = vdwg.mxu0
    %vm3529 = vcmask 254976
    %3530 = vst.msk [vmem:[#allocation2] sm:$0x3] %vm3529, %v3526
    // Predicated region
    $region90: #{bert_encoder_forward.1} parent=1 // pred_check
      _
    $region91: #{bert_encoder_forward.1} parent=1 // pred_check_branch
      %3532 = sbr.rel (0) target = $region93
    $region92: #{bert_encoder_forward.1} parent=1 // pred_region
      %s3534 = ssub.s32 32, 32
      %3535 = vsyncadd [#allocation3], %s3534
      %s3537 = sshll.u32 [#allocation2], 4
      %s3538 = int_to_ptr.vmem [resolvable:$true] %s3537
      %3540 = dma.vmem_to_hbm [thread:$0]  %s3538, 32, %s22, [#allocation3]
    $region93: #{bert_encoder_forward.1} parent=1 // pred_fallthru
      _
    // Predicated region
    $region94: #{bert_encoder_forward.1} parent=1 // pred_check
      _
    $region95: #{bert_encoder_forward.1} parent=1 // pred_check_branch
      %3542 = sbr.rel (0) target = $region97
    $region96: #{bert_encoder_forward.1} parent=1 // pred_region
      %3543 = dma.done [#allocation3], 32
    $region97: #{bert_encoder_forward.1} parent=1 // pred_fallthru
      _
    %3544 = vsyncpa [#allocation3], 1

</llo_original>
